<compile_context>
chip_gen: v5e
topology: v5e:2x2
jax: 0.10.0
libtpu: 0.0.40
codegen_flags: <defaults>
</compile_context>

<pallas_src>
import jax
import jax.numpy as jnp
from jax import lax
from jax.experimental import pallas as pl
from jax.experimental.pallas import tpu as pltpu


# ----------------------------------------------------------------------------
# Fused Pallas kernel
#
# Weight layout (gate order [i, f, o, g]; fwd direction = columns [0, 4H),
# bwd direction = columns [4H, 8H); b_ih + b_hh pre-folded):
#   layer 0: w_ih0 (E, 8H),  b0 (1, 8H),  w_hh0 (H, 8H)
#   layer 1: w_ih1 (2H, 8H)  [rows 0:H multiply layer-0 fwd hidden,
#                             rows H:2H multiply layer-0 bwd hidden],
#            b1 (1, 8H),     w_hh1 (H, 8H)
#   out    : (H, C), (1, C)
# ----------------------------------------------------------------------------
def _lstm_classifier_kernel(x_ref,                         # (T*B, E) time-major, flattened
                            w0_ih_ref, b0_ref, w0_hh_ref,  # layer 0
                            w1_ih_ref, b1_ref, w1_hh_ref,  # layer 1
                            wout_ref, bout_ref,            # final Linear
                            out_ref,                       # (4B, C) tag_space
                            xp0_ref, xp1_ref,              # (T*2B, 4H) scratch
                            hf0_ref, hb0_ref):             # (T*B, H) scratch
    H = hf0_ref.shape[-1]
    B = out_ref.shape[0] // 4
    T = hf0_ref.shape[0] // B
    H4 = 4 * H

    # Hoisted direction-select mask: rows [0, B) = forward, [B, 2B) = backward.
    dir_mask = lax.broadcasted_iota(jnp.int32, (2 * B, H4), 0) < B

    def restack(proj, xp_ref):
        # proj: (T*B, 8H) input projections in natural time order,
        #   cols [0,4H) fwd-direction gates, cols [4H,8H) bwd-direction gates.
        # xp_ref layout at loop index s: rows [s*2B, s*2B+B)    = fwd, time s
        #                                rows [s*2B+B, (s+1)*2B) = bwd, time T-1-s
        for t in range(T):
            xp_ref[pl.ds(2 * B * t, B), :] = proj[t * B:(t + 1) * B, :H4]
            xp_ref[pl.ds(2 * B * (T - 1 - t) + B, B), :] = proj[t * B:(t + 1) * B, H4:]

    def run_layer(xp_ref, w_hh_ref, store_seq):
        w_hh = w_hh_ref[...]                           # (H, 8H) loaded once per layer
        h = jnp.zeros((2 * B, H), jnp.float32)         # rows [:B]=fwd, [B:]=bwd
        c = jnp.zeros((2 * B, H), jnp.float32)
        for s in range(T):                             # static unroll (small fixed T)
            # ONE fused MXU matmul per serial step for both directions:
            # (2B, H) @ (H, 8H); 8H = 256 fills the v6e/v7x MXU N dimension.
            g_hh = jnp.dot(h, w_hh, preferred_element_type=jnp.float32)   # (2B, 8H)
            gates = xp_ref[pl.ds(2 * B * s, 2 * B), :] + jnp.where(
                dir_mask, g_hh[:, :H4], g_hh[:, H4:])                     # (2B, 4H)
            # Gate order [i, f, o, g]: sigmoid on the tile, tanh only on g cols.
            sig = jax.nn.sigmoid(gates)
            i_g = sig[:, 0 * H:1 * H]
            f_g = sig[:, 1 * H:2 * H]
            o_g = sig[:, 2 * H:3 * H]
            g_g = jnp.tanh(gates[:, 3 * H:])
            c = f_g * c + i_g * g_g
            h = o_g * jnp.tanh(c)
            if store_seq:                              # layer-0 hidden seq stays in VMEM
                hf0_ref[pl.ds(s * B, B), :] = h[:B]
                hb0_ref[pl.ds((T - 1 - s) * B, B), :] = h[B:]
        return h   # (2B, H): rows [:B] fwd final (t=T-1), rows [B:] bwd final (t=0)

    # ---- layer 0: hoisted input projection (one big MXU matmul, bias folded) ----
    proj0 = jnp.dot(x_ref[...], w0_ih_ref[...],
                    preferred_element_type=jnp.float32) + b0_ref[...]     # (T*B, 8H)
    restack(proj0, xp0_ref)
    h0_fin = run_layer(xp0_ref, w0_hh_ref, store_seq=True)

    # ---- layer 1: whole-sequence input projection from layer-0 hidden seqs.
    #      W1_ih split along its reduction dim -> no per-step [fwd,bwd] concat.
    proj1 = (jnp.dot(hf0_ref[...], w1_ih_ref[pl.ds(0, H), :],
                     preferred_element_type=jnp.float32)
             + jnp.dot(hb0_ref[...], w1_ih_ref[pl.ds(H, H), :],
                       preferred_element_type=jnp.float32)
             + b1_ref[...])                                               # (T*B, 8H)
    restack(proj1, xp1_ref)
    h1_fin = run_layer(xp1_ref, w1_hh_ref, store_seq=False)

    # ---- tag_space = h_n.view(-1, H) @ W_out + b_out, h_n order [l0f,l0b,l1f,l1b]
    h_n = jnp.concatenate([h0_fin, h1_fin], axis=0)                       # (4B, H)
    out_ref[...] = (jnp.dot(h_n, wout_ref[...], preferred_element_type=jnp.float32)
                    + bout_ref[...])


def lstm_classifier_forward(params, ids):
    """ids: (B, T) int32 token ids (stands in for sent_to_ids output)."""
    emb = jnp.take(params["embedding"], ids, axis=0)      # (B, T, E) gather (tiny, XLA)
    B, T, E = emb.shape
    x = jnp.transpose(emb, (1, 0, 2)).reshape(T * B, E)   # time-major, flattened
    H = params["w_hh0"].shape[0]
    C = params["out_w"].shape[1]

    def full_block(shape):
        return pl.BlockSpec(tuple(shape), lambda *_: (0,) * len(shape))

    args = (x,
            params["w_ih0"], params["b0"], params["w_hh0"],
            params["w_ih1"], params["b1"], params["w_hh1"],
            params["out_w"], params["out_b"])

    return pl.pallas_call(
        _lstm_classifier_kernel,
        out_shape=jax.ShapeDtypeStruct((4 * B, C), jnp.float32),
        grid=(1,),
        in_specs=[full_block(a.shape) for a in args],
        out_specs=full_block((4 * B, C)),
        scratch_shapes=[
            pltpu.VMEM((T * 2 * B, 4 * H), jnp.float32),  # layer-0 stacked input proj
            pltpu.VMEM((T * 2 * B, 4 * H), jnp.float32),  # layer-1 stacked input proj
            pltpu.VMEM((T * B, H), jnp.float32),          # layer-0 fwd hidden seq
            pltpu.VMEM((T * B, H), jnp.float32),          # layer-0 bwd hidden seq
        ],
        compiler_params=pltpu.CompilerParams(
            dimension_semantics=("arbitrary",)),
    )(*args)


# ----------------------------------------------------------------------------
# Parameter init (deterministic, PyTorch-like uniform(-1/sqrt(H), 1/sqrt(H)))
# Gate columns ordered [i, f, o, g] (permutation of PyTorch's [i, f, g, o];
# equivalent under random init — permute columns if loading real torch weights).
# ----------------------------------------------------------------------------
def init_params(key, v_size, e_size, h_size, c_size):
    k = 1.0 / float(h_size) ** 0.5
    keys = iter(jax.random.split(key, 32))

    def u(shape):
        return jax.random.uniform(next(keys), shape, jnp.float32, -k, k)

    emb = jax.random.normal(next(keys), (v_size, e_size), jnp.float32) * 0.1
    emb = emb.at[0].set(0.0)                              # padding_idx=0

    def layer(d_in):
        # fwd direction -> gate cols [0, 4H), bwd direction -> [4H, 8H)
        w_ih = jnp.concatenate([u((d_in, 4 * h_size)), u((d_in, 4 * h_size))], axis=1)
        w_hh = jnp.concatenate([u((h_size, 4 * h_size)), u((h_size, 4 * h_size))], axis=1)
        bias = (jnp.concatenate([u((1, 4 * h_size)), u((1, 4 * h_size))], axis=1)
                + jnp.concatenate([u((1, 4 * h_size)), u((1, 4 * h_size))], axis=1))
        return w_ih, bias, w_hh

    w_ih0, b0, w_hh0 = layer(e_size)          # layer 0 input: embedding (E)
    w_ih1, b1, w_hh1 = layer(2 * h_size)      # layer 1 input: [fwd, bwd] hidden (2H)
    out_w = u((h_size, c_size))
    out_b = u((1, c_size))
    return {"embedding": emb,
            "w_ih0": w_ih0, "b0": b0, "w_hh0": w_hh0,
            "w_ih1": w_ih1, "b1": b1, "w_hh1": w_hh1,
            "out_w": out_w, "out_b": out_b}


# ----------------------------------------------------------------------------
# Pure-JAX reference (lax.scan) for correctness checking (same weight layout)
# ----------------------------------------------------------------------------
def _ref_dir(x_seq, w_ih, w_hh, b, H, reverse):
    T, B, D = x_seq.shape
    xs = x_seq[::-1] if reverse else x_seq

    def step(carry, x_t):
        h, c = carry
        g = x_t @ w_ih + h @ w_hh + b                      # gate order [i, f, o, g]
        i = jax.nn.sigmoid(g[:, :H])
        f = jax.nn.sigmoid(g[:, H:2 * H])
        o = jax.nn.sigmoid(g[:, 2 * H:3 * H])
        gg = jnp.tanh(g[:, 3 * H:])
        c = f * c + i * gg
        h = o * jnp.tanh(c)
        return (h, c), h

    (h_fin, _), hs = lax.scan(step, (jnp.zeros((B, H)), jnp.zeros((B, H))), xs)
    hs = hs[::-1] if reverse else hs
    return hs, h_fin


def reference_forward(params, ids):
    emb = jnp.take(params["embedding"], ids, axis=0)
    x = jnp.transpose(emb, (1, 0, 2))                      # (T, B, E)
    H = params["w_hh0"].shape[0]
    H4 = 4 * H

    def bi_layer(x_in, w_ih, w_hh, b):
        hf_seq, hf_fin = _ref_dir(x_in, w_ih[:, :H4], w_hh[:, :H4], b[0, :H4], H, False)
        hb_seq, hb_fin = _ref_dir(x_in, w_ih[:, H4:], w_hh[:, H4:], b[0, H4:], H, True)
        return jnp.concatenate([hf_seq, hb_seq], axis=-1), hf_fin, hb_fin

    x1, h0f, h0b = bi_layer(x, params["w_ih0"], params["w_hh0"], params["b0"])
    _, h1f, h1b = bi_layer(x1, params["w_ih1"], params["w_hh1"], params["b1"])
    h_n = jnp.concatenate([h0f, h0b, h1f, h1b], axis=0)    # (4B, H) = [l0f,l0b,l1f,l1b]
    return h_n @ params["out_w"] + params["out_b"]


if __name__ == "__main__":
    # Small shapes consistent with the module structure: B a multiple of 8
    # (full sublanes), 4H = 128 lanes (one f32 vreg row), 8H = 256 (full MXU N).
    v_size, e_size, h_size, c_size = 100, 64, 32, 4
    b_size, max_len = 8, 8

    key = jax.random.PRNGKey(0)
    k_par, k_ids = jax.random.split(key)
    params = init_params(k_par, v_size, e_size, h_size, c_size)

    ids = jax.random.randint(k_ids, (b_size, max_len), 1, v_size, dtype=jnp.int32)
    ids = ids.at[:, :2].set(0)          # leading padding (padding_idx=0), as sent_to_ids does

    tag_space = lstm_classifier_forward(params, ids)
    tag_space = jax.block_until_ready(tag_space)

    ref = reference_forward(params, ids)
    assert tag_space.shape == (4 * b_size, c_size)
    err = float(jnp.max(jnp.abs(tag_space - ref)))
    assert err < 1e-3, f"max abs err {err}"

    print("KERNEL_OK")
</pallas_src>

<mosaic_0001>
module attributes {stable_mosaic.version = 11 : i64} {
  func.func @_lstm_classifier_kernel(%arg0: i32, %arg1: memref<64x64xf32, #tpu.memory_space<vmem>>, %arg2: memref<64x256xf32, #tpu.memory_space<vmem>>, %arg3: memref<1x256xf32, #tpu.memory_space<vmem>>, %arg4: memref<32x256xf32, #tpu.memory_space<vmem>>, %arg5: memref<64x256xf32, #tpu.memory_space<vmem>>, %arg6: memref<1x256xf32, #tpu.memory_space<vmem>>, %arg7: memref<32x256xf32, #tpu.memory_space<vmem>>, %arg8: memref<32x4xf32, #tpu.memory_space<vmem>>, %arg9: memref<1x4xf32, #tpu.memory_space<vmem>>, %arg10: memref<32x4xf32, #tpu.memory_space<vmem>>, %arg11: memref<128x128xf32, #tpu.memory_space<vmem>>, %arg12: memref<128x128xf32, #tpu.memory_space<vmem>>, %arg13: memref<64x32xf32, #tpu.memory_space<vmem>>, %arg14: memref<64x32xf32, #tpu.memory_space<vmem>>) attributes {dimension_semantics = [#tpu.dimension_semantics<arbitrary>], iteration_bounds = array<i64: 1>, scalar_prefetch = 0 : i64, scratch_operands = 4 : i64, tpu.core_type = #tpu.core_type<tc>, window_params = [{pipeline_mode = #tpu.pipeline_mode<synchronous>, transform_indices = @transform_0, window_bounds = array<i64: 64, 64>}, {pipeline_mode = #tpu.pipeline_mode<synchronous>, transform_indices = @transform_1, window_bounds = array<i64: 64, 256>}, {pipeline_mode = #tpu.pipeline_mode<synchronous>, transform_indices = @transform_2, window_bounds = array<i64: 1, 256>}, {pipeline_mode = #tpu.pipeline_mode<synchronous>, transform_indices = @transform_3, window_bounds = array<i64: 32, 256>}, {pipeline_mode = #tpu.pipeline_mode<synchronous>, transform_indices = @transform_4, window_bounds = array<i64: 64, 256>}, {pipeline_mode = #tpu.pipeline_mode<synchronous>, transform_indices = @transform_5, window_bounds = array<i64: 1, 256>}, {pipeline_mode = #tpu.pipeline_mode<synchronous>, transform_indices = @transform_6, window_bounds = array<i64: 32, 256>}, {pipeline_mode = #tpu.pipeline_mode<synchronous>, transform_indices = @transform_7, window_bounds = array<i64: 32, 4>}, {pipeline_mode = #tpu.pipeline_mode<synchronous>, transform_indices = @transform_8, window_bounds = array<i64: 1, 4>}, {pipeline_mode = #tpu.pipeline_mode<synchronous>, transform_indices = @transform_9, window_bounds = array<i64: 32, 4>}]} {
    %0 = tpu.iota {dimensions = array<i32: 0>} : vector<16x128xi32>
    %c8_i32 = arith.constant 8 : i32
    %1 = vector.broadcast %c8_i32 : i32 to vector<16x128xi32>
    %2 = arith.cmpi slt, %0, %1 : vector<16x128xi32>
    %c0 = arith.constant 0 : index
    %c0_0 = arith.constant 0 : index
    %3 = vector.load %arg1[%c0, %c0_0] : memref<64x64xf32, #tpu.memory_space<vmem>>, vector<64x64xf32>
    %c0_1 = arith.constant 0 : index
    %c0_2 = arith.constant 0 : index
    %4 = vector.load %arg2[%c0_1, %c0_2] : memref<64x256xf32, #tpu.memory_space<vmem>>, vector<64x256xf32>
    %cst = arith.constant dense<0.000000e+00> : vector<64x256xf32>
    %5 = tpu.matmul %3, %4, %cst {dimension_numbers = #tpu.dot_dimension_numbers<[1], [0], [0], [1], [0, 0, 1, 1], [], []>} : vector<64x64xf32>, vector<64x256xf32>, vector<64x256xf32> -> vector<64x256xf32>
    %c0_3 = arith.constant 0 : index
    %c0_4 = arith.constant 0 : index
    %6 = vector.load %arg3[%c0_3, %c0_4] : memref<1x256xf32, #tpu.memory_space<vmem>>, vector<1x256xf32>
    %7 = vector.broadcast %6 : vector<1x256xf32> to vector<64x256xf32>
    %8 = arith.addf %5, %7 : vector<64x256xf32>
    %9 = vector.extract_strided_slice %8 {offsets = [0, 0], sizes = [8, 128], strides = [1, 1]} : vector<64x256xf32> to vector<8x128xf32>
    %c0_5 = arith.constant 0 : index
    %c0_6 = arith.constant 0 : index
    %10 = vector.load %arg11[%c0_5, %c0_6] : memref<128x128xf32, #tpu.memory_space<vmem>>, vector<8x128xf32>
    tpu.vector_store %arg11[%c0_5, %c0_6], %9 {strides = array<i32>} : memref<128x128xf32, #tpu.memory_space<vmem>>, vector<8x128xf32>,
    %11 = vector.extract_strided_slice %8 {offsets = [0, 128], sizes = [8, 128], strides = [1, 1]} : vector<64x256xf32> to vector<8x128xf32>
    %c120 = arith.constant 120 : index
    %c0_7 = arith.constant 0 : index
    %12 = vector.load %arg11[%c120, %c0_7] : memref<128x128xf32, #tpu.memory_space<vmem>>, vector<8x128xf32>
    tpu.vector_store %arg11[%c120, %c0_7], %11 {strides = array<i32>} : memref<128x128xf32, #tpu.memory_space<vmem>>, vector<8x128xf32>,
    %13 = vector.extract_strided_slice %8 {offsets = [8, 0], sizes = [8, 128], strides = [1, 1]} : vector<64x256xf32> to vector<8x128xf32>
    %c16 = arith.constant 16 : index
    %c0_8 = arith.constant 0 : index
    %14 = vector.load %arg11[%c16, %c0_8] : memref<128x128xf32, #tpu.memory_space<vmem>>, vector<8x128xf32>
    tpu.vector_store %arg11[%c16, %c0_8], %13 {strides = array<i32>} : memref<128x128xf32, #tpu.memory_space<vmem>>, vector<8x128xf32>,
    %15 = vector.extract_strided_slice %8 {offsets = [8, 128], sizes = [8, 128], strides = [1, 1]} : vector<64x256xf32> to vector<8x128xf32>
    %c104 = arith.constant 104 : index
    %c0_9 = arith.constant 0 : index
    %16 = vector.load %arg11[%c104, %c0_9] : memref<128x128xf32, #tpu.memory_space<vmem>>, vector<8x128xf32>
    tpu.vector_store %arg11[%c104, %c0_9], %15 {strides = array<i32>} : memref<128x128xf32, #tpu.memory_space<vmem>>, vector<8x128xf32>,
    %17 = vector.extract_strided_slice %8 {offsets = [16, 0], sizes = [8, 128], strides = [1, 1]} : vector<64x256xf32> to vector<8x128xf32>
    %c32 = arith.constant 32 : index
    %c0_10 = arith.constant 0 : index
    %18 = vector.load %arg11[%c32, %c0_10] : memref<128x128xf32, #tpu.memory_space<vmem>>, vector<8x128xf32>
    tpu.vector_store %arg11[%c32, %c0_10], %17 {strides = array<i32>} : memref<128x128xf32, #tpu.memory_space<vmem>>, vector<8x128xf32>,
    %19 = vector.extract_strided_slice %8 {offsets = [16, 128], sizes = [8, 128], strides = [1, 1]} : vector<64x256xf32> to vector<8x128xf32>
    %c88 = arith.constant 88 : index
    %c0_11 = arith.constant 0 : index
    %20 = vector.load %arg11[%c88, %c0_11] : memref<128x128xf32, #tpu.memory_space<vmem>>, vector<8x128xf32>
    tpu.vector_store %arg11[%c88, %c0_11], %19 {strides = array<i32>} : memref<128x128xf32, #tpu.memory_space<vmem>>, vector<8x128xf32>,
    %21 = vector.extract_strided_slice %8 {offsets = [24, 0], sizes = [8, 128], strides = [1, 1]} : vector<64x256xf32> to vector<8x128xf32>
    %c48 = arith.constant 48 : index
    %c0_12 = arith.constant 0 : index
    %22 = vector.load %arg11[%c48, %c0_12] : memref<128x128xf32, #tpu.memory_space<vmem>>, vector<8x128xf32>
    tpu.vector_store %arg11[%c48, %c0_12], %21 {strides = array<i32>} : memref<128x128xf32, #tpu.memory_space<vmem>>, vector<8x128xf32>,
    %23 = vector.extract_strided_slice %8 {offsets = [24, 128], sizes = [8, 128], strides = [1, 1]} : vector<64x256xf32> to vector<8x128xf32>
    %c72 = arith.constant 72 : index
    %c0_13 = arith.constant 0 : index
    %24 = vector.load %arg11[%c72, %c0_13] : memref<128x128xf32, #tpu.memory_space<vmem>>, vector<8x128xf32>
    tpu.vector_store %arg11[%c72, %c0_13], %23 {strides = array<i32>} : memref<128x128xf32, #tpu.memory_space<vmem>>, vector<8x128xf32>,
    %25 = vector.extract_strided_slice %8 {offsets = [32, 0], sizes = [8, 128], strides = [1, 1]} : vector<64x256xf32> to vector<8x128xf32>
    %c64 = arith.constant 64 : index
    %c0_14 = arith.constant 0 : index
    %26 = vector.load %arg11[%c64, %c0_14] : memref<128x128xf32, #tpu.memory_space<vmem>>, vector<8x128xf32>
    tpu.vector_store %arg11[%c64, %c0_14], %25 {strides = array<i32>} : memref<128x128xf32, #tpu.memory_space<vmem>>, vector<8x128xf32>,
    %27 = vector.extract_strided_slice %8 {offsets = [32, 128], sizes = [8, 128], strides = [1, 1]} : vector<64x256xf32> to vector<8x128xf32>
    %c56 = arith.constant 56 : index
    %c0_15 = arith.constant 0 : index
    %28 = vector.load %arg11[%c56, %c0_15] : memref<128x128xf32, #tpu.memory_space<vmem>>, vector<8x128xf32>
    tpu.vector_store %arg11[%c56, %c0_15], %27 {strides = array<i32>} : memref<128x128xf32, #tpu.memory_space<vmem>>, vector<8x128xf32>,
    %29 = vector.extract_strided_slice %8 {offsets = [40, 0], sizes = [8, 128], strides = [1, 1]} : vector<64x256xf32> to vector<8x128xf32>
    %c80 = arith.constant 80 : index
    %c0_16 = arith.constant 0 : index
    %30 = vector.load %arg11[%c80, %c0_16] : memref<128x128xf32, #tpu.memory_space<vmem>>, vector<8x128xf32>
    tpu.vector_store %arg11[%c80, %c0_16], %29 {strides = array<i32>} : memref<128x128xf32, #tpu.memory_space<vmem>>, vector<8x128xf32>,
    %31 = vector.extract_strided_slice %8 {offsets = [40, 128], sizes = [8, 128], strides = [1, 1]} : vector<64x256xf32> to vector<8x128xf32>
    %c40 = arith.constant 40 : index
    %c0_17 = arith.constant 0 : index
    %32 = vector.load %arg11[%c40, %c0_17] : memref<128x128xf32, #tpu.memory_space<vmem>>, vector<8x128xf32>
    tpu.vector_store %arg11[%c40, %c0_17], %31 {strides = array<i32>} : memref<128x128xf32, #tpu.memory_space<vmem>>, vector<8x128xf32>,
    %33 = vector.extract_strided_slice %8 {offsets = [48, 0], sizes = [8, 128], strides = [1, 1]} : vector<64x256xf32> to vector<8x128xf32>
    %c96 = arith.constant 96 : index
    %c0_18 = arith.constant 0 : index
    %34 = vector.load %arg11[%c96, %c0_18] : memref<128x128xf32, #tpu.memory_space<vmem>>, vector<8x128xf32>
    tpu.vector_store %arg11[%c96, %c0_18], %33 {strides = array<i32>} : memref<128x128xf32, #tpu.memory_space<vmem>>, vector<8x128xf32>,
    %35 = vector.extract_strided_slice %8 {offsets = [48, 128], sizes = [8, 128], strides = [1, 1]} : vector<64x256xf32> to vector<8x128xf32>
    %c24 = arith.constant 24 : index
    %c0_19 = arith.constant 0 : index
    %36 = vector.load %arg11[%c24, %c0_19] : memref<128x128xf32, #tpu.memory_space<vmem>>, vector<8x128xf32>
    tpu.vector_store %arg11[%c24, %c0_19], %35 {strides = array<i32>} : memref<128x128xf32, #tpu.memory_space<vmem>>, vector<8x128xf32>,
    %37 = vector.extract_strided_slice %8 {offsets = [56, 0], sizes = [8, 128], strides = [1, 1]} : vector<64x256xf32> to vector<8x128xf32>
    %c112 = arith.constant 112 : index
    %c0_20 = arith.constant 0 : index
    %38 = vector.load %arg11[%c112, %c0_20] : memref<128x128xf32, #tpu.memory_space<vmem>>, vector<8x128xf32>
    tpu.vector_store %arg11[%c112, %c0_20], %37 {strides = array<i32>} : memref<128x128xf32, #tpu.memory_space<vmem>>, vector<8x128xf32>,
    %39 = vector.extract_strided_slice %8 {offsets = [56, 128], sizes = [8, 128], strides = [1, 1]} : vector<64x256xf32> to vector<8x128xf32>
    %c8 = arith.constant 8 : index
    %c0_21 = arith.constant 0 : index
    %40 = vector.load %arg11[%c8, %c0_21] : memref<128x128xf32, #tpu.memory_space<vmem>>, vector<8x128xf32>
    tpu.vector_store %arg11[%c8, %c0_21], %39 {strides = array<i32>} : memref<128x128xf32, #tpu.memory_space<vmem>>, vector<8x128xf32>,
    %c0_22 = arith.constant 0 : index
    %c0_23 = arith.constant 0 : index
    %41 = vector.load %arg4[%c0_22, %c0_23] : memref<32x256xf32, #tpu.memory_space<vmem>>, vector<32x256xf32>
    %cst_24 = arith.constant 0.000000e+00 : f32
    %42 = vector.broadcast %cst_24 : f32 to vector<16x32xf32>
    %cst_25 = arith.constant 0.000000e+00 : f32
    %43 = vector.broadcast %cst_25 : f32 to vector<16x32xf32>
    %cst_26 = arith.constant dense<0.000000e+00> : vector<16x256xf32>
    %44 = tpu.matmul %42, %41, %cst_26 {dimension_numbers = #tpu.dot_dimension_numbers<[1], [0], [0], [1], [0, 0, 1, 1], [], []>} : vector<16x32xf32>, vector<32x256xf32>, vector<16x256xf32> -> vector<16x256xf32>
    %c0_27 = arith.constant 0 : index
    %c0_28 = arith.constant 0 : index
    %45 = vector.load %arg11[%c0_27, %c0_28] : memref<128x128xf32, #tpu.memory_space<vmem>>, vector<16x128xf32>
    %46 = vector.extract_strided_slice %44 {offsets = [0, 0], sizes = [16, 128], strides = [1, 1]} : vector<16x256xf32> to vector<16x128xf32>
    %47 = vector.extract_strided_slice %44 {offsets = [0, 128], sizes = [16, 128], strides = [1, 1]} : vector<16x256xf32> to vector<16x128xf32>
    %48 = arith.select %2, %46, %47 : vector<16x128xi1>, vector<16x128xf32>
    %49 = arith.addf %45, %48 : vector<16x128xf32>
    %50 = arith.negf %49 : vector<16x128xf32>
    %51 = math.exp %50 : vector<16x128xf32>
    %cst_29 = arith.constant 1.000000e+00 : f32
    %52 = vector.broadcast %cst_29 : f32 to vector<16x128xf32>
    %53 = arith.addf %52, %51 : vector<16x128xf32>
    %54 = arith.divf %52, %53 : vector<16x128xf32>
    %55 = vector.extract_strided_slice %54 {offsets = [0, 0], sizes = [16, 32], strides = [1, 1]} : vector<16x128xf32> to vector<16x32xf32>
    %56 = vector.extract_strided_slice %54 {offsets = [0, 32], sizes = [16, 32], strides = [1, 1]} : vector<16x128xf32> to vector<16x32xf32>
    %57 = vector.extract_strided_slice %54 {offsets = [0, 64], sizes = [16, 32], strides = [1, 1]} : vector<16x128xf32> to vector<16x32xf32>
    %58 = vector.extract_strided_slice %49 {offsets = [0, 96], sizes = [16, 32], strides = [1, 1]} : vector<16x128xf32> to vector<16x32xf32>
    %59 = math.tanh %58 : vector<16x32xf32>
    %60 = arith.mulf %56, %43 : vector<16x32xf32>
    %61 = arith.mulf %55, %59 : vector<16x32xf32>
    %62 = arith.addf %60, %61 : vector<16x32xf32>
    %63 = math.tanh %62 : vector<16x32xf32>
    %64 = arith.mulf %57, %63 : vector<16x32xf32>
    %65 = vector.extract_strided_slice %64 {offsets = [0, 0], sizes = [8, 32], strides = [1, 1]} : vector<16x32xf32> to vector<8x32xf32>
    %c0_30 = arith.constant 0 : index
    %c0_31 = arith.constant 0 : index
    %66 = vector.load %arg13[%c0_30, %c0_31] : memref<64x32xf32, #tpu.memory_space<vmem>>, vector<8x32xf32>
    tpu.vector_store %arg13[%c0_30, %c0_31], %65 {strides = array<i32>} : memref<64x32xf32, #tpu.memory_space<vmem>>, vector<8x32xf32>,
    %67 = vector.extract_strided_slice %64 {offsets = [8, 0], sizes = [8, 32], strides = [1, 1]} : vector<16x32xf32> to vector<8x32xf32>
    %c56_32 = arith.constant 56 : index
    %c0_33 = arith.constant 0 : index
    %68 = vector.load %arg14[%c56_32, %c0_33] : memref<64x32xf32, #tpu.memory_space<vmem>>, vector<8x32xf32>
    tpu.vector_store %arg14[%c56_32, %c0_33], %67 {strides = array<i32>} : memref<64x32xf32, #tpu.memory_space<vmem>>, vector<8x32xf32>,
    %cst_34 = arith.constant dense<0.000000e+00> : vector<16x256xf32>
    %69 = tpu.matmul %64, %41, %cst_34 {dimension_numbers = #tpu.dot_dimension_numbers<[1], [0], [0], [1], [0, 0, 1, 1], [], []>} : vector<16x32xf32>, vector<32x256xf32>, vector<16x256xf32> -> vector<16x256xf32>
    %c16_35 = arith.constant 16 : index
    %c0_36 = arith.constant 0 : index
    %70 = vector.load %arg11[%c16_35, %c0_36] : memref<128x128xf32, #tpu.memory_space<vmem>>, vector<16x128xf32>
    %71 = vector.extract_strided_slice %69 {offsets = [0, 0], sizes = [16, 128], strides = [1, 1]} : vector<16x256xf32> to vector<16x128xf32>
    %72 = vector.extract_strided_slice %69 {offsets = [0, 128], sizes = [16, 128], strides = [1, 1]} : vector<16x256xf32> to vector<16x128xf32>
    %73 = arith.select %2, %71, %72 : vector<16x128xi1>, vector<16x128xf32>
    %74 = arith.addf %70, %73 : vector<16x128xf32>
    %75 = arith.negf %74 : vector<16x128xf32>
    %76 = math.exp %75 : vector<16x128xf32>
    %cst_37 = arith.constant 1.000000e+00 : f32
    %77 = vector.broadcast %cst_37 : f32 to vector<16x128xf32>
    %78 = arith.addf %77, %76 : vector<16x128xf32>
    %79 = arith.divf %77, %78 : vector<16x128xf32>
    %80 = vector.extract_strided_slice %79 {offsets = [0, 0], sizes = [16, 32], strides = [1, 1]} : vector<16x128xf32> to vector<16x32xf32>
    %81 = vector.extract_strided_slice %79 {offsets = [0, 32], sizes = [16, 32], strides = [1, 1]} : vector<16x128xf32> to vector<16x32xf32>
    %82 = vector.extract_strided_slice %79 {offsets = [0, 64], sizes = [16, 32], strides = [1, 1]} : vector<16x128xf32> to vector<16x32xf32>
    %83 = vector.extract_strided_slice %74 {offsets = [0, 96], sizes = [16, 32], strides = [1, 1]} : vector<16x128xf32> to vector<16x32xf32>
    %84 = math.tanh %83 : vector<16x32xf32>
    %85 = arith.mulf %81, %62 : vector<16x32xf32>
    %86 = arith.mulf %80, %84 : vector<16x32xf32>
    %87 = arith.addf %85, %86 : vector<16x32xf32>
    %88 = math.tanh %87 : vector<16x32xf32>
    %89 = arith.mulf %82, %88 : vector<16x32xf32>
    %90 = vector.extract_strided_slice %89 {offsets = [0, 0], sizes = [8, 32], strides = [1, 1]} : vector<16x32xf32> to vector<8x32xf32>
    %c8_38 = arith.constant 8 : index
    %c0_39 = arith.constant 0 : index
    %91 = vector.load %arg13[%c8_38, %c0_39] : memref<64x32xf32, #tpu.memory_space<vmem>>, vector<8x32xf32>
    tpu.vector_store %arg13[%c8_38, %c0_39], %90 {strides = array<i32>} : memref<64x32xf32, #tpu.memory_space<vmem>>, vector<8x32xf32>,
    %92 = vector.extract_strided_slice %89 {offsets = [8, 0], sizes = [8, 32], strides = [1, 1]} : vector<16x32xf32> to vector<8x32xf32>
    %c48_40 = arith.constant 48 : index
    %c0_41 = arith.constant 0 : index
    %93 = vector.load %arg14[%c48_40, %c0_41] : memref<64x32xf32, #tpu.memory_space<vmem>>, vector<8x32xf32>
    tpu.vector_store %arg14[%c48_40, %c0_41], %92 {strides = array<i32>} : memref<64x32xf32, #tpu.memory_space<vmem>>, vector<8x32xf32>,
    %cst_42 = arith.constant dense<0.000000e+00> : vector<16x256xf32>
    %94 = tpu.matmul %89, %41, %cst_42 {dimension_numbers = #tpu.dot_dimension_numbers<[1], [0], [0], [1], [0, 0, 1, 1], [], []>} : vector<16x32xf32>, vector<32x256xf32>, vector<16x256xf32> -> vector<16x256xf32>
    %c32_43 = arith.constant 32 : index
    %c0_44 = arith.constant 0 : index
    %95 = vector.load %arg11[%c32_43, %c0_44] : memref<128x128xf32, #tpu.memory_space<vmem>>, vector<16x128xf32>
    %96 = vector.extract_strided_slice %94 {offsets = [0, 0], sizes = [16, 128], strides = [1, 1]} : vector<16x256xf32> to vector<16x128xf32>
    %97 = vector.extract_strided_slice %94 {offsets = [0, 128], sizes = [16, 128], strides = [1, 1]} : vector<16x256xf32> to vector<16x128xf32>
    %98 = arith.select %2, %96, %97 : vector<16x128xi1>, vector<16x128xf32>
    %99 = arith.addf %95, %98 : vector<16x128xf32>
    %100 = arith.negf %99 : vector<16x128xf32>
    %101 = math.exp %100 : vector<16x128xf32>
    %cst_45 = arith.constant 1.000000e+00 : f32
    %102 = vector.broadcast %cst_45 : f32 to vector<16x128xf32>
    %103 = arith.addf %102, %101 : vector<16x128xf32>
    %104 = arith.divf %102, %103 : vector<16x128xf32>
    %105 = vector.extract_strided_slice %104 {offsets = [0, 0], sizes = [16, 32], strides = [1, 1]} : vector<16x128xf32> to vector<16x32xf32>
    %106 = vector.extract_strided_slice %104 {offsets = [0, 32], sizes = [16, 32], strides = [1, 1]} : vector<16x128xf32> to vector<16x32xf32>
    %107 = vector.extract_strided_slice %104 {offsets = [0, 64], sizes = [16, 32], strides = [1, 1]} : vector<16x128xf32> to vector<16x32xf32>
    %108 = vector.extract_strided_slice %99 {offsets = [0, 96], sizes = [16, 32], strides = [1, 1]} : vector<16x128xf32> to vector<16x32xf32>
    %109 = math.tanh %108 : vector<16x32xf32>
    %110 = arith.mulf %106, %87 : vector<16x32xf32>
    %111 = arith.mulf %105, %109 : vector<16x32xf32>
    %112 = arith.addf %110, %111 : vector<16x32xf32>
    %113 = math.tanh %112 : vector<16x32xf32>
    %114 = arith.mulf %107, %113 : vector<16x32xf32>
    %115 = vector.extract_strided_slice %114 {offsets = [0, 0], sizes = [8, 32], strides = [1, 1]} : vector<16x32xf32> to vector<8x32xf32>
    %c16_46 = arith.constant 16 : index
    %c0_47 = arith.constant 0 : index
    %116 = vector.load %arg13[%c16_46, %c0_47] : memref<64x32xf32, #tpu.memory_space<vmem>>, vector<8x32xf32>
    tpu.vector_store %arg13[%c16_46, %c0_47], %115 {strides = array<i32>} : memref<64x32xf32, #tpu.memory_space<vmem>>, vector<8x32xf32>,
    %117 = vector.extract_strided_slice %114 {offsets = [8, 0], sizes = [8, 32], strides = [1, 1]} : vector<16x32xf32> to vector<8x32xf32>
    %c40_48 = arith.constant 40 : index
    %c0_49 = arith.constant 0 : index
    %118 = vector.load %arg14[%c40_48, %c0_49] : memref<64x32xf32, #tpu.memory_space<vmem>>, vector<8x32xf32>
    tpu.vector_store %arg14[%c40_48, %c0_49], %117 {strides = array<i32>} : memref<64x32xf32, #tpu.memory_space<vmem>>, vector<8x32xf32>,
    %cst_50 = arith.constant dense<0.000000e+00> : vector<16x256xf32>
    %119 = tpu.matmul %114, %41, %cst_50 {dimension_numbers = #tpu.dot_dimension_numbers<[1], [0], [0], [1], [0, 0, 1, 1], [], []>} : vector<16x32xf32>, vector<32x256xf32>, vector<16x256xf32> -> vector<16x256xf32>
    %c48_51 = arith.constant 48 : index
    %c0_52 = arith.constant 0 : index
    %120 = vector.load %arg11[%c48_51, %c0_52] : memref<128x128xf32, #tpu.memory_space<vmem>>, vector<16x128xf32>
    %121 = vector.extract_strided_slice %119 {offsets = [0, 0], sizes = [16, 128], strides = [1, 1]} : vector<16x256xf32> to vector<16x128xf32>
    %122 = vector.extract_strided_slice %119 {offsets = [0, 128], sizes = [16, 128], strides = [1, 1]} : vector<16x256xf32> to vector<16x128xf32>
    %123 = arith.select %2, %121, %122 : vector<16x128xi1>, vector<16x128xf32>
    %124 = arith.addf %120, %123 : vector<16x128xf32>
    %125 = arith.negf %124 : vector<16x128xf32>
    %126 = math.exp %125 : vector<16x128xf32>
    %cst_53 = arith.constant 1.000000e+00 : f32
    %127 = vector.broadcast %cst_53 : f32 to vector<16x128xf32>
    %128 = arith.addf %127, %126 : vector<16x128xf32>
    %129 = arith.divf %127, %128 : vector<16x128xf32>
    %130 = vector.extract_strided_slice %129 {offsets = [0, 0], sizes = [16, 32], strides = [1, 1]} : vector<16x128xf32> to vector<16x32xf32>
    %131 = vector.extract_strided_slice %129 {offsets = [0, 32], sizes = [16, 32], strides = [1, 1]} : vector<16x128xf32> to vector<16x32xf32>
    %132 = vector.extract_strided_slice %129 {offsets = [0, 64], sizes = [16, 32], strides = [1, 1]} : vector<16x128xf32> to vector<16x32xf32>
    %133 = vector.extract_strided_slice %124 {offsets = [0, 96], sizes = [16, 32], strides = [1, 1]} : vector<16x128xf32> to vector<16x32xf32>
    %134 = math.tanh %133 : vector<16x32xf32>
    %135 = arith.mulf %131, %112 : vector<16x32xf32>
    %136 = arith.mulf %130, %134 : vector<16x32xf32>
    %137 = arith.addf %135, %136 : vector<16x32xf32>
    %138 = math.tanh %137 : vector<16x32xf32>
    %139 = arith.mulf %132, %138 : vector<16x32xf32>
    %140 = vector.extract_strided_slice %139 {offsets = [0, 0], sizes = [8, 32], strides = [1, 1]} : vector<16x32xf32> to vector<8x32xf32>
    %c24_54 = arith.constant 24 : index
    %c0_55 = arith.constant 0 : index
    %141 = vector.load %arg13[%c24_54, %c0_55] : memref<64x32xf32, #tpu.memory_space<vmem>>, vector<8x32xf32>
    tpu.vector_store %arg13[%c24_54, %c0_55], %140 {strides = array<i32>} : memref<64x32xf32, #tpu.memory_space<vmem>>, vector<8x32xf32>,
    %142 = vector.extract_strided_slice %139 {offsets = [8, 0], sizes = [8, 32], strides = [1, 1]} : vector<16x32xf32> to vector<8x32xf32>
    %c32_56 = arith.constant 32 : index
    %c0_57 = arith.constant 0 : index
    %143 = vector.load %arg14[%c32_56, %c0_57] : memref<64x32xf32, #tpu.memory_space<vmem>>, vector<8x32xf32>
    tpu.vector_store %arg14[%c32_56, %c0_57], %142 {strides = array<i32>} : memref<64x32xf32, #tpu.memory_space<vmem>>, vector<8x32xf32>,
    %cst_58 = arith.constant dense<0.000000e+00> : vector<16x256xf32>
    %144 = tpu.matmul %139, %41, %cst_58 {dimension_numbers = #tpu.dot_dimension_numbers<[1], [0], [0], [1], [0, 0, 1, 1], [], []>} : vector<16x32xf32>, vector<32x256xf32>, vector<16x256xf32> -> vector<16x256xf32>
    %c64_59 = arith.constant 64 : index
    %c0_60 = arith.constant 0 : index
    %145 = vector.load %arg11[%c64_59, %c0_60] : memref<128x128xf32, #tpu.memory_space<vmem>>, vector<16x128xf32>
    %146 = vector.extract_strided_slice %144 {offsets = [0, 0], sizes = [16, 128], strides = [1, 1]} : vector<16x256xf32> to vector<16x128xf32>
    %147 = vector.extract_strided_slice %144 {offsets = [0, 128], sizes = [16, 128], strides = [1, 1]} : vector<16x256xf32> to vector<16x128xf32>
    %148 = arith.select %2, %146, %147 : vector<16x128xi1>, vector<16x128xf32>
    %149 = arith.addf %145, %148 : vector<16x128xf32>
    %150 = arith.negf %149 : vector<16x128xf32>
    %151 = math.exp %150 : vector<16x128xf32>
    %cst_61 = arith.constant 1.000000e+00 : f32
    %152 = vector.broadcast %cst_61 : f32 to vector<16x128xf32>
    %153 = arith.addf %152, %151 : vector<16x128xf32>
    %154 = arith.divf %152, %153 : vector<16x128xf32>
    %155 = vector.extract_strided_slice %154 {offsets = [0, 0], sizes = [16, 32], strides = [1, 1]} : vector<16x128xf32> to vector<16x32xf32>
    %156 = vector.extract_strided_slice %154 {offsets = [0, 32], sizes = [16, 32], strides = [1, 1]} : vector<16x128xf32> to vector<16x32xf32>
    %157 = vector.extract_strided_slice %154 {offsets = [0, 64], sizes = [16, 32], strides = [1, 1]} : vector<16x128xf32> to vector<16x32xf32>
    %158 = vector.extract_strided_slice %149 {offsets = [0, 96], sizes = [16, 32], strides = [1, 1]} : vector<16x128xf32> to vector<16x32xf32>
    %159 = math.tanh %158 : vector<16x32xf32>
    %160 = arith.mulf %156, %137 : vector<16x32xf32>
    %161 = arith.mulf %155, %159 : vector<16x32xf32>
    %162 = arith.addf %160, %161 : vector<16x32xf32>
    %163 = math.tanh %162 : vector<16x32xf32>
    %164 = arith.mulf %157, %163 : vector<16x32xf32>
    %165 = vector.extract_strided_slice %164 {offsets = [0, 0], sizes = [8, 32], strides = [1, 1]} : vector<16x32xf32> to vector<8x32xf32>
    %c32_62 = arith.constant 32 : index
    %c0_63 = arith.constant 0 : index
    %166 = vector.load %arg13[%c32_62, %c0_63] : memref<64x32xf32, #tpu.memory_space<vmem>>, vector<8x32xf32>
    tpu.vector_store %arg13[%c32_62, %c0_63], %165 {strides = array<i32>} : memref<64x32xf32, #tpu.memory_space<vmem>>, vector<8x32xf32>,
    %167 = vector.extract_strided_slice %164 {offsets = [8, 0], sizes = [8, 32], strides = [1, 1]} : vector<16x32xf32> to vector<8x32xf32>
    %c24_64 = arith.constant 24 : index
    %c0_65 = arith.constant 0 : index
    %168 = vector.load %arg14[%c24_64, %c0_65] : memref<64x32xf32, #tpu.memory_space<vmem>>, vector<8x32xf32>
    tpu.vector_store %arg14[%c24_64, %c0_65], %167 {strides = array<i32>} : memref<64x32xf32, #tpu.memory_space<vmem>>, vector<8x32xf32>,
    %cst_66 = arith.constant dense<0.000000e+00> : vector<16x256xf32>
    %169 = tpu.matmul %164, %41, %cst_66 {dimension_numbers = #tpu.dot_dimension_numbers<[1], [0], [0], [1], [0, 0, 1, 1], [], []>} : vector<16x32xf32>, vector<32x256xf32>, vector<16x256xf32> -> vector<16x256xf32>
    %c80_67 = arith.constant 80 : index
    %c0_68 = arith.constant 0 : index
    %170 = vector.load %arg11[%c80_67, %c0_68] : memref<128x128xf32, #tpu.memory_space<vmem>>, vector<16x128xf32>
    %171 = vector.extract_strided_slice %169 {offsets = [0, 0], sizes = [16, 128], strides = [1, 1]} : vector<16x256xf32> to vector<16x128xf32>
    %172 = vector.extract_strided_slice %169 {offsets = [0, 128], sizes = [16, 128], strides = [1, 1]} : vector<16x256xf32> to vector<16x128xf32>
    %173 = arith.select %2, %171, %172 : vector<16x128xi1>, vector<16x128xf32>
    %174 = arith.addf %170, %173 : vector<16x128xf32>
    %175 = arith.negf %174 : vector<16x128xf32>
    %176 = math.exp %175 : vector<16x128xf32>
    %cst_69 = arith.constant 1.000000e+00 : f32
    %177 = vector.broadcast %cst_69 : f32 to vector<16x128xf32>
    %178 = arith.addf %177, %176 : vector<16x128xf32>
    %179 = arith.divf %177, %178 : vector<16x128xf32>
    %180 = vector.extract_strided_slice %179 {offsets = [0, 0], sizes = [16, 32], strides = [1, 1]} : vector<16x128xf32> to vector<16x32xf32>
    %181 = vector.extract_strided_slice %179 {offsets = [0, 32], sizes = [16, 32], strides = [1, 1]} : vector<16x128xf32> to vector<16x32xf32>
    %182 = vector.extract_strided_slice %179 {offsets = [0, 64], sizes = [16, 32], strides = [1, 1]} : vector<16x128xf32> to vector<16x32xf32>
    %183 = vector.extract_strided_slice %174 {offsets = [0, 96], sizes = [16, 32], strides = [1, 1]} : vector<16x128xf32> to vector<16x32xf32>
    %184 = math.tanh %183 : vector<16x32xf32>
    %185 = arith.mulf %181, %162 : vector<16x32xf32>
    %186 = arith.mulf %180, %184 : vector<16x32xf32>
    %187 = arith.addf %185, %186 : vector<16x32xf32>
    %188 = math.tanh %187 : vector<16x32xf32>
    %189 = arith.mulf %182, %188 : vector<16x32xf32>
    %190 = vector.extract_strided_slice %189 {offsets = [0, 0], sizes = [8, 32], strides = [1, 1]} : vector<16x32xf32> to vector<8x32xf32>
    %c40_70 = arith.constant 40 : index
    %c0_71 = arith.constant 0 : index
    %191 = vector.load %arg13[%c40_70, %c0_71] : memref<64x32xf32, #tpu.memory_space<vmem>>, vector<8x32xf32>
    tpu.vector_store %arg13[%c40_70, %c0_71], %190 {strides = array<i32>} : memref<64x32xf32, #tpu.memory_space<vmem>>, vector<8x32xf32>,
    %192 = vector.extract_strided_slice %189 {offsets = [8, 0], sizes = [8, 32], strides = [1, 1]} : vector<16x32xf32> to vector<8x32xf32>
    %c16_72 = arith.constant 16 : index
    %c0_73 = arith.constant 0 : index
    %193 = vector.load %arg14[%c16_72, %c0_73] : memref<64x32xf32, #tpu.memory_space<vmem>>, vector<8x32xf32>
    tpu.vector_store %arg14[%c16_72, %c0_73], %192 {strides = array<i32>} : memref<64x32xf32, #tpu.memory_space<vmem>>, vector<8x32xf32>,
    %cst_74 = arith.constant dense<0.000000e+00> : vector<16x256xf32>
    %194 = tpu.matmul %189, %41, %cst_74 {dimension_numbers = #tpu.dot_dimension_numbers<[1], [0], [0], [1], [0, 0, 1, 1], [], []>} : vector<16x32xf32>, vector<32x256xf32>, vector<16x256xf32> -> vector<16x256xf32>
    %c96_75 = arith.constant 96 : index
    %c0_76 = arith.constant 0 : index
    %195 = vector.load %arg11[%c96_75, %c0_76] : memref<128x128xf32, #tpu.memory_space<vmem>>, vector<16x128xf32>
    %196 = vector.extract_strided_slice %194 {offsets = [0, 0], sizes = [16, 128], strides = [1, 1]} : vector<16x256xf32> to vector<16x128xf32>
    %197 = vector.extract_strided_slice %194 {offsets = [0, 128], sizes = [16, 128], strides = [1, 1]} : vector<16x256xf32> to vector<16x128xf32>
    %198 = arith.select %2, %196, %197 : vector<16x128xi1>, vector<16x128xf32>
    %199 = arith.addf %195, %198 : vector<16x128xf32>
    %200 = arith.negf %199 : vector<16x128xf32>
    %201 = math.exp %200 : vector<16x128xf32>
    %cst_77 = arith.constant 1.000000e+00 : f32
    %202 = vector.broadcast %cst_77 : f32 to vector<16x128xf32>
    %203 = arith.addf %202, %201 : vector<16x128xf32>
    %204 = arith.divf %202, %203 : vector<16x128xf32>
    %205 = vector.extract_strided_slice %204 {offsets = [0, 0], sizes = [16, 32], strides = [1, 1]} : vector<16x128xf32> to vector<16x32xf32>
    %206 = vector.extract_strided_slice %204 {offsets = [0, 32], sizes = [16, 32], strides = [1, 1]} : vector<16x128xf32> to vector<16x32xf32>
    %207 = vector.extract_strided_slice %204 {offsets = [0, 64], sizes = [16, 32], strides = [1, 1]} : vector<16x128xf32> to vector<16x32xf32>
    %208 = vector.extract_strided_slice %199 {offsets = [0, 96], sizes = [16, 32], strides = [1, 1]} : vector<16x128xf32> to vector<16x32xf32>
    %209 = math.tanh %208 : vector<16x32xf32>
    %210 = arith.mulf %206, %187 : vector<16x32xf32>
    %211 = arith.mulf %205, %209 : vector<16x32xf32>
    %212 = arith.addf %210, %211 : vector<16x32xf32>
    %213 = math.tanh %212 : vector<16x32xf32>
    %214 = arith.mulf %207, %213 : vector<16x32xf32>
    %215 = vector.extract_strided_slice %214 {offsets = [0, 0], sizes = [8, 32], strides = [1, 1]} : vector<16x32xf32> to vector<8x32xf32>
    %c48_78 = arith.constant 48 : index
    %c0_79 = arith.constant 0 : index
    %216 = vector.load %arg13[%c48_78, %c0_79] : memref<64x32xf32, #tpu.memory_space<vmem>>, vector<8x32xf32>
    tpu.vector_store %arg13[%c48_78, %c0_79], %215 {strides = array<i32>} : memref<64x32xf32, #tpu.memory_space<vmem>>, vector<8x32xf32>,
    %217 = vector.extract_strided_slice %214 {offsets = [8, 0], sizes = [8, 32], strides = [1, 1]} : vector<16x32xf32> to vector<8x32xf32>
    %c8_80 = arith.constant 8 : index
    %c0_81 = arith.constant 0 : index
    %218 = vector.load %arg14[%c8_80, %c0_81] : memref<64x32xf32, #tpu.memory_space<vmem>>, vector<8x32xf32>
    tpu.vector_store %arg14[%c8_80, %c0_81], %217 {strides = array<i32>} : memref<64x32xf32, #tpu.memory_space<vmem>>, vector<8x32xf32>,
    %cst_82 = arith.constant dense<0.000000e+00> : vector<16x256xf32>
    %219 = tpu.matmul %214, %41, %cst_82 {dimension_numbers = #tpu.dot_dimension_numbers<[1], [0], [0], [1], [0, 0, 1, 1], [], []>} : vector<16x32xf32>, vector<32x256xf32>, vector<16x256xf32> -> vector<16x256xf32>
    %c112_83 = arith.constant 112 : index
    %c0_84 = arith.constant 0 : index
    %220 = vector.load %arg11[%c112_83, %c0_84] : memref<128x128xf32, #tpu.memory_space<vmem>>, vector<16x128xf32>
    %221 = vector.extract_strided_slice %219 {offsets = [0, 0], sizes = [16, 128], strides = [1, 1]} : vector<16x256xf32> to vector<16x128xf32>
    %222 = vector.extract_strided_slice %219 {offsets = [0, 128], sizes = [16, 128], strides = [1, 1]} : vector<16x256xf32> to vector<16x128xf32>
    %223 = arith.select %2, %221, %222 : vector<16x128xi1>, vector<16x128xf32>
    %224 = arith.addf %220, %223 : vector<16x128xf32>
    %225 = arith.negf %224 : vector<16x128xf32>
    %226 = math.exp %225 : vector<16x128xf32>
    %cst_85 = arith.constant 1.000000e+00 : f32
    %227 = vector.broadcast %cst_85 : f32 to vector<16x128xf32>
    %228 = arith.addf %227, %226 : vector<16x128xf32>
    %229 = arith.divf %227, %228 : vector<16x128xf32>
    %230 = vector.extract_strided_slice %229 {offsets = [0, 0], sizes = [16, 32], strides = [1, 1]} : vector<16x128xf32> to vector<16x32xf32>
    %231 = vector.extract_strided_slice %229 {offsets = [0, 32], sizes = [16, 32], strides = [1, 1]} : vector<16x128xf32> to vector<16x32xf32>
    %232 = vector.extract_strided_slice %229 {offsets = [0, 64], sizes = [16, 32], strides = [1, 1]} : vector<16x128xf32> to vector<16x32xf32>
    %233 = vector.extract_strided_slice %224 {offsets = [0, 96], sizes = [16, 32], strides = [1, 1]} : vector<16x128xf32> to vector<16x32xf32>
    %234 = math.tanh %233 : vector<16x32xf32>
    %235 = arith.mulf %231, %212 : vector<16x32xf32>
    %236 = arith.mulf %230, %234 : vector<16x32xf32>
    %237 = arith.addf %235, %236 : vector<16x32xf32>
    %238 = math.tanh %237 : vector<16x32xf32>
    %239 = arith.mulf %232, %238 : vector<16x32xf32>
    %240 = vector.extract_strided_slice %239 {offsets = [0, 0], sizes = [8, 32], strides = [1, 1]} : vector<16x32xf32> to vector<8x32xf32>
    %c56_86 = arith.constant 56 : index
    %c0_87 = arith.constant 0 : index
    %241 = vector.load %arg13[%c56_86, %c0_87] : memref<64x32xf32, #tpu.memory_space<vmem>>, vector<8x32xf32>
    tpu.vector_store %arg13[%c56_86, %c0_87], %240 {strides = array<i32>} : memref<64x32xf32, #tpu.memory_space<vmem>>, vector<8x32xf32>,
    %242 = vector.extract_strided_slice %239 {offsets = [8, 0], sizes = [8, 32], strides = [1, 1]} : vector<16x32xf32> to vector<8x32xf32>
    %c0_88 = arith.constant 0 : index
    %c0_89 = arith.constant 0 : index
    %243 = vector.load %arg14[%c0_88, %c0_89] : memref<64x32xf32, #tpu.memory_space<vmem>>, vector<8x32xf32>
    tpu.vector_store %arg14[%c0_88, %c0_89], %242 {strides = array<i32>} : memref<64x32xf32, #tpu.memory_space<vmem>>, vector<8x32xf32>,
    %c0_90 = arith.constant 0 : index
    %c0_91 = arith.constant 0 : index
    %244 = vector.load %arg13[%c0_90, %c0_91] : memref<64x32xf32, #tpu.memory_space<vmem>>, vector<64x32xf32>
    %c0_92 = arith.constant 0 : index
    %c0_93 = arith.constant 0 : index
    %245 = vector.load %arg5[%c0_92, %c0_93] : memref<64x256xf32, #tpu.memory_space<vmem>>, vector<32x256xf32>
    %cst_94 = arith.constant dense<0.000000e+00> : vector<64x256xf32>
    %246 = tpu.matmul %244, %245, %cst_94 {dimension_numbers = #tpu.dot_dimension_numbers<[1], [0], [0], [1], [0, 0, 1, 1], [], []>} : vector<64x32xf32>, vector<32x256xf32>, vector<64x256xf32> -> vector<64x256xf32>
    %c0_95 = arith.constant 0 : index
    %c0_96 = arith.constant 0 : index
    %247 = vector.load %arg14[%c0_95, %c0_96] : memref<64x32xf32, #tpu.memory_space<vmem>>, vector<64x32xf32>
    %c32_97 = arith.constant 32 : index
    %c0_98 = arith.constant 0 : index
    %248 = vector.load %arg5[%c32_97, %c0_98] : memref<64x256xf32, #tpu.memory_space<vmem>>, vector<32x256xf32>
    %cst_99 = arith.constant dense<0.000000e+00> : vector<64x256xf32>
    %249 = tpu.matmul %247, %248, %cst_99 {dimension_numbers = #tpu.dot_dimension_numbers<[1], [0], [0], [1], [0, 0, 1, 1], [], []>} : vector<64x32xf32>, vector<32x256xf32>, vector<64x256xf32> -> vector<64x256xf32>
    %250 = arith.addf %246, %249 : vector<64x256xf32>
    %c0_100 = arith.constant 0 : index
    %c0_101 = arith.constant 0 : index
    %251 = vector.load %arg6[%c0_100, %c0_101] : memref<1x256xf32, #tpu.memory_space<vmem>>, vector<1x256xf32>
    %252 = vector.broadcast %251 : vector<1x256xf32> to vector<64x256xf32>
    %253 = arith.addf %250, %252 : vector<64x256xf32>
    %254 = vector.extract_strided_slice %253 {offsets = [0, 0], sizes = [8, 128], strides = [1, 1]} : vector<64x256xf32> to vector<8x128xf32>
    %c0_102 = arith.constant 0 : index
    %c0_103 = arith.constant 0 : index
    %255 = vector.load %arg12[%c0_102, %c0_103] : memref<128x128xf32, #tpu.memory_space<vmem>>, vector<8x128xf32>
    tpu.vector_store %arg12[%c0_102, %c0_103], %254 {strides = array<i32>} : memref<128x128xf32, #tpu.memory_space<vmem>>, vector<8x128xf32>,
    %256 = vector.extract_strided_slice %253 {offsets = [0, 128], sizes = [8, 128], strides = [1, 1]} : vector<64x256xf32> to vector<8x128xf32>
    %c120_104 = arith.constant 120 : index
    %c0_105 = arith.constant 0 : index
    %257 = vector.load %arg12[%c120_104, %c0_105] : memref<128x128xf32, #tpu.memory_space<vmem>>, vector<8x128xf32>
    tpu.vector_store %arg12[%c120_104, %c0_105], %256 {strides = array<i32>} : memref<128x128xf32, #tpu.memory_space<vmem>>, vector<8x128xf32>,
    %258 = vector.extract_strided_slice %253 {offsets = [8, 0], sizes = [8, 128], strides = [1, 1]} : vector<64x256xf32> to vector<8x128xf32>
    %c16_106 = arith.constant 16 : index
    %c0_107 = arith.constant 0 : index
    %259 = vector.load %arg12[%c16_106, %c0_107] : memref<128x128xf32, #tpu.memory_space<vmem>>, vector<8x128xf32>
    tpu.vector_store %arg12[%c16_106, %c0_107], %258 {strides = array<i32>} : memref<128x128xf32, #tpu.memory_space<vmem>>, vector<8x128xf32>,
    %260 = vector.extract_strided_slice %253 {offsets = [8, 128], sizes = [8, 128], strides = [1, 1]} : vector<64x256xf32> to vector<8x128xf32>
    %c104_108 = arith.constant 104 : index
    %c0_109 = arith.constant 0 : index
    %261 = vector.load %arg12[%c104_108, %c0_109] : memref<128x128xf32, #tpu.memory_space<vmem>>, vector<8x128xf32>
    tpu.vector_store %arg12[%c104_108, %c0_109], %260 {strides = array<i32>} : memref<128x128xf32, #tpu.memory_space<vmem>>, vector<8x128xf32>,
    %262 = vector.extract_strided_slice %253 {offsets = [16, 0], sizes = [8, 128], strides = [1, 1]} : vector<64x256xf32> to vector<8x128xf32>
    %c32_110 = arith.constant 32 : index
    %c0_111 = arith.constant 0 : index
    %263 = vector.load %arg12[%c32_110, %c0_111] : memref<128x128xf32, #tpu.memory_space<vmem>>, vector<8x128xf32>
    tpu.vector_store %arg12[%c32_110, %c0_111], %262 {strides = array<i32>} : memref<128x128xf32, #tpu.memory_space<vmem>>, vector<8x128xf32>,
    %264 = vector.extract_strided_slice %253 {offsets = [16, 128], sizes = [8, 128], strides = [1, 1]} : vector<64x256xf32> to vector<8x128xf32>
    %c88_112 = arith.constant 88 : index
    %c0_113 = arith.constant 0 : index
    %265 = vector.load %arg12[%c88_112, %c0_113] : memref<128x128xf32, #tpu.memory_space<vmem>>, vector<8x128xf32>
    tpu.vector_store %arg12[%c88_112, %c0_113], %264 {strides = array<i32>} : memref<128x128xf32, #tpu.memory_space<vmem>>, vector<8x128xf32>,
    %266 = vector.extract_strided_slice %253 {offsets = [24, 0], sizes = [8, 128], strides = [1, 1]} : vector<64x256xf32> to vector<8x128xf32>
    %c48_114 = arith.constant 48 : index
    %c0_115 = arith.constant 0 : index
    %267 = vector.load %arg12[%c48_114, %c0_115] : memref<128x128xf32, #tpu.memory_space<vmem>>, vector<8x128xf32>
    tpu.vector_store %arg12[%c48_114, %c0_115], %266 {strides = array<i32>} : memref<128x128xf32, #tpu.memory_space<vmem>>, vector<8x128xf32>,
    %268 = vector.extract_strided_slice %253 {offsets = [24, 128], sizes = [8, 128], strides = [1, 1]} : vector<64x256xf32> to vector<8x128xf32>
    %c72_116 = arith.constant 72 : index
    %c0_117 = arith.constant 0 : index
    %269 = vector.load %arg12[%c72_116, %c0_117] : memref<128x128xf32, #tpu.memory_space<vmem>>, vector<8x128xf32>
    tpu.vector_store %arg12[%c72_116, %c0_117], %268 {strides = array<i32>} : memref<128x128xf32, #tpu.memory_space<vmem>>, vector<8x128xf32>,
    %270 = vector.extract_strided_slice %253 {offsets = [32, 0], sizes = [8, 128], strides = [1, 1]} : vector<64x256xf32> to vector<8x128xf32>
    %c64_118 = arith.constant 64 : index
    %c0_119 = arith.constant 0 : index
    %271 = vector.load %arg12[%c64_118, %c0_119] : memref<128x128xf32, #tpu.memory_space<vmem>>, vector<8x128xf32>
    tpu.vector_store %arg12[%c64_118, %c0_119], %270 {strides = array<i32>} : memref<128x128xf32, #tpu.memory_space<vmem>>, vector<8x128xf32>,
    %272 = vector.extract_strided_slice %253 {offsets = [32, 128], sizes = [8, 128], strides = [1, 1]} : vector<64x256xf32> to vector<8x128xf32>
    %c56_120 = arith.constant 56 : index
    %c0_121 = arith.constant 0 : index
    %273 = vector.load %arg12[%c56_120, %c0_121] : memref<128x128xf32, #tpu.memory_space<vmem>>, vector<8x128xf32>
    tpu.vector_store %arg12[%c56_120, %c0_121], %272 {strides = array<i32>} : memref<128x128xf32, #tpu.memory_space<vmem>>, vector<8x128xf32>,
    %274 = vector.extract_strided_slice %253 {offsets = [40, 0], sizes = [8, 128], strides = [1, 1]} : vector<64x256xf32> to vector<8x128xf32>
    %c80_122 = arith.constant 80 : index
    %c0_123 = arith.constant 0 : index
    %275 = vector.load %arg12[%c80_122, %c0_123] : memref<128x128xf32, #tpu.memory_space<vmem>>, vector<8x128xf32>
    tpu.vector_store %arg12[%c80_122, %c0_123], %274 {strides = array<i32>} : memref<128x128xf32, #tpu.memory_space<vmem>>, vector<8x128xf32>,
    %276 = vector.extract_strided_slice %253 {offsets = [40, 128], sizes = [8, 128], strides = [1, 1]} : vector<64x256xf32> to vector<8x128xf32>
    %c40_124 = arith.constant 40 : index
    %c0_125 = arith.constant 0 : index
    %277 = vector.load %arg12[%c40_124, %c0_125] : memref<128x128xf32, #tpu.memory_space<vmem>>, vector<8x128xf32>
    tpu.vector_store %arg12[%c40_124, %c0_125], %276 {strides = array<i32>} : memref<128x128xf32, #tpu.memory_space<vmem>>, vector<8x128xf32>,
    %278 = vector.extract_strided_slice %253 {offsets = [48, 0], sizes = [8, 128], strides = [1, 1]} : vector<64x256xf32> to vector<8x128xf32>
    %c96_126 = arith.constant 96 : index
    %c0_127 = arith.constant 0 : index
    %279 = vector.load %arg12[%c96_126, %c0_127] : memref<128x128xf32, #tpu.memory_space<vmem>>, vector<8x128xf32>
    tpu.vector_store %arg12[%c96_126, %c0_127], %278 {strides = array<i32>} : memref<128x128xf32, #tpu.memory_space<vmem>>, vector<8x128xf32>,
    %280 = vector.extract_strided_slice %253 {offsets = [48, 128], sizes = [8, 128], strides = [1, 1]} : vector<64x256xf32> to vector<8x128xf32>
    %c24_128 = arith.constant 24 : index
    %c0_129 = arith.constant 0 : index
    %281 = vector.load %arg12[%c24_128, %c0_129] : memref<128x128xf32, #tpu.memory_space<vmem>>, vector<8x128xf32>
    tpu.vector_store %arg12[%c24_128, %c0_129], %280 {strides = array<i32>} : memref<128x128xf32, #tpu.memory_space<vmem>>, vector<8x128xf32>,
    %282 = vector.extract_strided_slice %253 {offsets = [56, 0], sizes = [8, 128], strides = [1, 1]} : vector<64x256xf32> to vector<8x128xf32>
    %c112_130 = arith.constant 112 : index
    %c0_131 = arith.constant 0 : index
    %283 = vector.load %arg12[%c112_130, %c0_131] : memref<128x128xf32, #tpu.memory_space<vmem>>, vector<8x128xf32>
    tpu.vector_store %arg12[%c112_130, %c0_131], %282 {strides = array<i32>} : memref<128x128xf32, #tpu.memory_space<vmem>>, vector<8x128xf32>,
    %284 = vector.extract_strided_slice %253 {offsets = [56, 128], sizes = [8, 128], strides = [1, 1]} : vector<64x256xf32> to vector<8x128xf32>
    %c8_132 = arith.constant 8 : index
    %c0_133 = arith.constant 0 : index
    %285 = vector.load %arg12[%c8_132, %c0_133] : memref<128x128xf32, #tpu.memory_space<vmem>>, vector<8x128xf32>
    tpu.vector_store %arg12[%c8_132, %c0_133], %284 {strides = array<i32>} : memref<128x128xf32, #tpu.memory_space<vmem>>, vector<8x128xf32>,
    %c0_134 = arith.constant 0 : index
    %c0_135 = arith.constant 0 : index
    %286 = vector.load %arg7[%c0_134, %c0_135] : memref<32x256xf32, #tpu.memory_space<vmem>>, vector<32x256xf32>
    %cst_136 = arith.constant 0.000000e+00 : f32
    %287 = vector.broadcast %cst_136 : f32 to vector<16x32xf32>
    %cst_137 = arith.constant 0.000000e+00 : f32
    %288 = vector.broadcast %cst_137 : f32 to vector<16x32xf32>
    %cst_138 = arith.constant dense<0.000000e+00> : vector<16x256xf32>
    %289 = tpu.matmul %287, %286, %cst_138 {dimension_numbers = #tpu.dot_dimension_numbers<[1], [0], [0], [1], [0, 0, 1, 1], [], []>} : vector<16x32xf32>, vector<32x256xf32>, vector<16x256xf32> -> vector<16x256xf32>
    %c0_139 = arith.constant 0 : index
    %c0_140 = arith.constant 0 : index
    %290 = vector.load %arg12[%c0_139, %c0_140] : memref<128x128xf32, #tpu.memory_space<vmem>>, vector<16x128xf32>
    %291 = vector.extract_strided_slice %289 {offsets = [0, 0], sizes = [16, 128], strides = [1, 1]} : vector<16x256xf32> to vector<16x128xf32>
    %292 = vector.extract_strided_slice %289 {offsets = [0, 128], sizes = [16, 128], strides = [1, 1]} : vector<16x256xf32> to vector<16x128xf32>
    %293 = arith.select %2, %291, %292 : vector<16x128xi1>, vector<16x128xf32>
    %294 = arith.addf %290, %293 : vector<16x128xf32>
    %295 = arith.negf %294 : vector<16x128xf32>
    %296 = math.exp %295 : vector<16x128xf32>
    %cst_141 = arith.constant 1.000000e+00 : f32
    %297 = vector.broadcast %cst_141 : f32 to vector<16x128xf32>
    %298 = arith.addf %297, %296 : vector<16x128xf32>
    %299 = arith.divf %297, %298 : vector<16x128xf32>
    %300 = vector.extract_strided_slice %299 {offsets = [0, 0], sizes = [16, 32], strides = [1, 1]} : vector<16x128xf32> to vector<16x32xf32>
    %301 = vector.extract_strided_slice %299 {offsets = [0, 32], sizes = [16, 32], strides = [1, 1]} : vector<16x128xf32> to vector<16x32xf32>
    %302 = vector.extract_strided_slice %299 {offsets = [0, 64], sizes = [16, 32], strides = [1, 1]} : vector<16x128xf32> to vector<16x32xf32>
    %303 = vector.extract_strided_slice %294 {offsets = [0, 96], sizes = [16, 32], strides = [1, 1]} : vector<16x128xf32> to vector<16x32xf32>
    %304 = math.tanh %303 : vector<16x32xf32>
    %305 = arith.mulf %301, %288 : vector<16x32xf32>
    %306 = arith.mulf %300, %304 : vector<16x32xf32>
    %307 = arith.addf %305, %306 : vector<16x32xf32>
    %308 = math.tanh %307 : vector<16x32xf32>
    %309 = arith.mulf %302, %308 : vector<16x32xf32>
    %cst_142 = arith.constant dense<0.000000e+00> : vector<16x256xf32>
    %310 = tpu.matmul %309, %286, %cst_142 {dimension_numbers = #tpu.dot_dimension_numbers<[1], [0], [0], [1], [0, 0, 1, 1], [], []>} : vector<16x32xf32>, vector<32x256xf32>, vector<16x256xf32> -> vector<16x256xf32>
    %c16_143 = arith.constant 16 : index
    %c0_144 = arith.constant 0 : index
    %311 = vector.load %arg12[%c16_143, %c0_144] : memref<128x128xf32, #tpu.memory_space<vmem>>, vector<16x128xf32>
    %312 = vector.extract_strided_slice %310 {offsets = [0, 0], sizes = [16, 128], strides = [1, 1]} : vector<16x256xf32> to vector<16x128xf32>
    %313 = vector.extract_strided_slice %310 {offsets = [0, 128], sizes = [16, 128], strides = [1, 1]} : vector<16x256xf32> to vector<16x128xf32>
    %314 = arith.select %2, %312, %313 : vector<16x128xi1>, vector<16x128xf32>
    %315 = arith.addf %311, %314 : vector<16x128xf32>
    %316 = arith.negf %315 : vector<16x128xf32>
    %317 = math.exp %316 : vector<16x128xf32>
    %cst_145 = arith.constant 1.000000e+00 : f32
    %318 = vector.broadcast %cst_145 : f32 to vector<16x128xf32>
    %319 = arith.addf %318, %317 : vector<16x128xf32>
    %320 = arith.divf %318, %319 : vector<16x128xf32>
    %321 = vector.extract_strided_slice %320 {offsets = [0, 0], sizes = [16, 32], strides = [1, 1]} : vector<16x128xf32> to vector<16x32xf32>
    %322 = vector.extract_strided_slice %320 {offsets = [0, 32], sizes = [16, 32], strides = [1, 1]} : vector<16x128xf32> to vector<16x32xf32>
    %323 = vector.extract_strided_slice %320 {offsets = [0, 64], sizes = [16, 32], strides = [1, 1]} : vector<16x128xf32> to vector<16x32xf32>
    %324 = vector.extract_strided_slice %315 {offsets = [0, 96], sizes = [16, 32], strides = [1, 1]} : vector<16x128xf32> to vector<16x32xf32>
    %325 = math.tanh %324 : vector<16x32xf32>
    %326 = arith.mulf %322, %307 : vector<16x32xf32>
    %327 = arith.mulf %321, %325 : vector<16x32xf32>
    %328 = arith.addf %326, %327 : vector<16x32xf32>
    %329 = math.tanh %328 : vector<16x32xf32>
    %330 = arith.mulf %323, %329 : vector<16x32xf32>
    %cst_146 = arith.constant dense<0.000000e+00> : vector<16x256xf32>
    %331 = tpu.matmul %330, %286, %cst_146 {dimension_numbers = #tpu.dot_dimension_numbers<[1], [0], [0], [1], [0, 0, 1, 1], [], []>} : vector<16x32xf32>, vector<32x256xf32>, vector<16x256xf32> -> vector<16x256xf32>
    %c32_147 = arith.constant 32 : index
    %c0_148 = arith.constant 0 : index
    %332 = vector.load %arg12[%c32_147, %c0_148] : memref<128x128xf32, #tpu.memory_space<vmem>>, vector<16x128xf32>
    %333 = vector.extract_strided_slice %331 {offsets = [0, 0], sizes = [16, 128], strides = [1, 1]} : vector<16x256xf32> to vector<16x128xf32>
    %334 = vector.extract_strided_slice %331 {offsets = [0, 128], sizes = [16, 128], strides = [1, 1]} : vector<16x256xf32> to vector<16x128xf32>
    %335 = arith.select %2, %333, %334 : vector<16x128xi1>, vector<16x128xf32>
    %336 = arith.addf %332, %335 : vector<16x128xf32>
    %337 = arith.negf %336 : vector<16x128xf32>
    %338 = math.exp %337 : vector<16x128xf32>
    %cst_149 = arith.constant 1.000000e+00 : f32
    %339 = vector.broadcast %cst_149 : f32 to vector<16x128xf32>
    %340 = arith.addf %339, %338 : vector<16x128xf32>
    %341 = arith.divf %339, %340 : vector<16x128xf32>
    %342 = vector.extract_strided_slice %341 {offsets = [0, 0], sizes = [16, 32], strides = [1, 1]} : vector<16x128xf32> to vector<16x32xf32>
    %343 = vector.extract_strided_slice %341 {offsets = [0, 32], sizes = [16, 32], strides = [1, 1]} : vector<16x128xf32> to vector<16x32xf32>
    %344 = vector.extract_strided_slice %341 {offsets = [0, 64], sizes = [16, 32], strides = [1, 1]} : vector<16x128xf32> to vector<16x32xf32>
    %345 = vector.extract_strided_slice %336 {offsets = [0, 96], sizes = [16, 32], strides = [1, 1]} : vector<16x128xf32> to vector<16x32xf32>
    %346 = math.tanh %345 : vector<16x32xf32>
    %347 = arith.mulf %343, %328 : vector<16x32xf32>
    %348 = arith.mulf %342, %346 : vector<16x32xf32>
    %349 = arith.addf %347, %348 : vector<16x32xf32>
    %350 = math.tanh %349 : vector<16x32xf32>
    %351 = arith.mulf %344, %350 : vector<16x32xf32>
    %cst_150 = arith.constant dense<0.000000e+00> : vector<16x256xf32>
    %352 = tpu.matmul %351, %286, %cst_150 {dimension_numbers = #tpu.dot_dimension_numbers<[1], [0], [0], [1], [0, 0, 1, 1], [], []>} : vector<16x32xf32>, vector<32x256xf32>, vector<16x256xf32> -> vector<16x256xf32>
    %c48_151 = arith.constant 48 : index
    %c0_152 = arith.constant 0 : index
    %353 = vector.load %arg12[%c48_151, %c0_152] : memref<128x128xf32, #tpu.memory_space<vmem>>, vector<16x128xf32>
    %354 = vector.extract_strided_slice %352 {offsets = [0, 0], sizes = [16, 128], strides = [1, 1]} : vector<16x256xf32> to vector<16x128xf32>
    %355 = vector.extract_strided_slice %352 {offsets = [0, 128], sizes = [16, 128], strides = [1, 1]} : vector<16x256xf32> to vector<16x128xf32>
    %356 = arith.select %2, %354, %355 : vector<16x128xi1>, vector<16x128xf32>
    %357 = arith.addf %353, %356 : vector<16x128xf32>
    %358 = arith.negf %357 : vector<16x128xf32>
    %359 = math.exp %358 : vector<16x128xf32>
    %cst_153 = arith.constant 1.000000e+00 : f32
    %360 = vector.broadcast %cst_153 : f32 to vector<16x128xf32>
    %361 = arith.addf %360, %359 : vector<16x128xf32>
    %362 = arith.divf %360, %361 : vector<16x128xf32>
    %363 = vector.extract_strided_slice %362 {offsets = [0, 0], sizes = [16, 32], strides = [1, 1]} : vector<16x128xf32> to vector<16x32xf32>
    %364 = vector.extract_strided_slice %362 {offsets = [0, 32], sizes = [16, 32], strides = [1, 1]} : vector<16x128xf32> to vector<16x32xf32>
    %365 = vector.extract_strided_slice %362 {offsets = [0, 64], sizes = [16, 32], strides = [1, 1]} : vector<16x128xf32> to vector<16x32xf32>
    %366 = vector.extract_strided_slice %357 {offsets = [0, 96], sizes = [16, 32], strides = [1, 1]} : vector<16x128xf32> to vector<16x32xf32>
    %367 = math.tanh %366 : vector<16x32xf32>
    %368 = arith.mulf %364, %349 : vector<16x32xf32>
    %369 = arith.mulf %363, %367 : vector<16x32xf32>
    %370 = arith.addf %368, %369 : vector<16x32xf32>
    %371 = math.tanh %370 : vector<16x32xf32>
    %372 = arith.mulf %365, %371 : vector<16x32xf32>
    %cst_154 = arith.constant dense<0.000000e+00> : vector<16x256xf32>
    %373 = tpu.matmul %372, %286, %cst_154 {dimension_numbers = #tpu.dot_dimension_numbers<[1], [0], [0], [1], [0, 0, 1, 1], [], []>} : vector<16x32xf32>, vector<32x256xf32>, vector<16x256xf32> -> vector<16x256xf32>
    %c64_155 = arith.constant 64 : index
    %c0_156 = arith.constant 0 : index
    %374 = vector.load %arg12[%c64_155, %c0_156] : memref<128x128xf32, #tpu.memory_space<vmem>>, vector<16x128xf32>
    %375 = vector.extract_strided_slice %373 {offsets = [0, 0], sizes = [16, 128], strides = [1, 1]} : vector<16x256xf32> to vector<16x128xf32>
    %376 = vector.extract_strided_slice %373 {offsets = [0, 128], sizes = [16, 128], strides = [1, 1]} : vector<16x256xf32> to vector<16x128xf32>
    %377 = arith.select %2, %375, %376 : vector<16x128xi1>, vector<16x128xf32>
    %378 = arith.addf %374, %377 : vector<16x128xf32>
    %379 = arith.negf %378 : vector<16x128xf32>
    %380 = math.exp %379 : vector<16x128xf32>
    %cst_157 = arith.constant 1.000000e+00 : f32
    %381 = vector.broadcast %cst_157 : f32 to vector<16x128xf32>
    %382 = arith.addf %381, %380 : vector<16x128xf32>
    %383 = arith.divf %381, %382 : vector<16x128xf32>
    %384 = vector.extract_strided_slice %383 {offsets = [0, 0], sizes = [16, 32], strides = [1, 1]} : vector<16x128xf32> to vector<16x32xf32>
    %385 = vector.extract_strided_slice %383 {offsets = [0, 32], sizes = [16, 32], strides = [1, 1]} : vector<16x128xf32> to vector<16x32xf32>
    %386 = vector.extract_strided_slice %383 {offsets = [0, 64], sizes = [16, 32], strides = [1, 1]} : vector<16x128xf32> to vector<16x32xf32>
    %387 = vector.extract_strided_slice %378 {offsets = [0, 96], sizes = [16, 32], strides = [1, 1]} : vector<16x128xf32> to vector<16x32xf32>
    %388 = math.tanh %387 : vector<16x32xf32>
    %389 = arith.mulf %385, %370 : vector<16x32xf32>
    %390 = arith.mulf %384, %388 : vector<16x32xf32>
    %391 = arith.addf %389, %390 : vector<16x32xf32>
    %392 = math.tanh %391 : vector<16x32xf32>
    %393 = arith.mulf %386, %392 : vector<16x32xf32>
    %cst_158 = arith.constant dense<0.000000e+00> : vector<16x256xf32>
    %394 = tpu.matmul %393, %286, %cst_158 {dimension_numbers = #tpu.dot_dimension_numbers<[1], [0], [0], [1], [0, 0, 1, 1], [], []>} : vector<16x32xf32>, vector<32x256xf32>, vector<16x256xf32> -> vector<16x256xf32>
    %c80_159 = arith.constant 80 : index
    %c0_160 = arith.constant 0 : index
    %395 = vector.load %arg12[%c80_159, %c0_160] : memref<128x128xf32, #tpu.memory_space<vmem>>, vector<16x128xf32>
    %396 = vector.extract_strided_slice %394 {offsets = [0, 0], sizes = [16, 128], strides = [1, 1]} : vector<16x256xf32> to vector<16x128xf32>
    %397 = vector.extract_strided_slice %394 {offsets = [0, 128], sizes = [16, 128], strides = [1, 1]} : vector<16x256xf32> to vector<16x128xf32>
    %398 = arith.select %2, %396, %397 : vector<16x128xi1>, vector<16x128xf32>
    %399 = arith.addf %395, %398 : vector<16x128xf32>
    %400 = arith.negf %399 : vector<16x128xf32>
    %401 = math.exp %400 : vector<16x128xf32>
    %cst_161 = arith.constant 1.000000e+00 : f32
    %402 = vector.broadcast %cst_161 : f32 to vector<16x128xf32>
    %403 = arith.addf %402, %401 : vector<16x128xf32>
    %404 = arith.divf %402, %403 : vector<16x128xf32>
    %405 = vector.extract_strided_slice %404 {offsets = [0, 0], sizes = [16, 32], strides = [1, 1]} : vector<16x128xf32> to vector<16x32xf32>
    %406 = vector.extract_strided_slice %404 {offsets = [0, 32], sizes = [16, 32], strides = [1, 1]} : vector<16x128xf32> to vector<16x32xf32>
    %407 = vector.extract_strided_slice %404 {offsets = [0, 64], sizes = [16, 32], strides = [1, 1]} : vector<16x128xf32> to vector<16x32xf32>
    %408 = vector.extract_strided_slice %399 {offsets = [0, 96], sizes = [16, 32], strides = [1, 1]} : vector<16x128xf32> to vector<16x32xf32>
    %409 = math.tanh %408 : vector<16x32xf32>
    %410 = arith.mulf %406, %391 : vector<16x32xf32>
    %411 = arith.mulf %405, %409 : vector<16x32xf32>
    %412 = arith.addf %410, %411 : vector<16x32xf32>
    %413 = math.tanh %412 : vector<16x32xf32>
    %414 = arith.mulf %407, %413 : vector<16x32xf32>
    %cst_162 = arith.constant dense<0.000000e+00> : vector<16x256xf32>
    %415 = tpu.matmul %414, %286, %cst_162 {dimension_numbers = #tpu.dot_dimension_numbers<[1], [0], [0], [1], [0, 0, 1, 1], [], []>} : vector<16x32xf32>, vector<32x256xf32>, vector<16x256xf32> -> vector<16x256xf32>
    %c96_163 = arith.constant 96 : index
    %c0_164 = arith.constant 0 : index
    %416 = vector.load %arg12[%c96_163, %c0_164] : memref<128x128xf32, #tpu.memory_space<vmem>>, vector<16x128xf32>
    %417 = vector.extract_strided_slice %415 {offsets = [0, 0], sizes = [16, 128], strides = [1, 1]} : vector<16x256xf32> to vector<16x128xf32>
    %418 = vector.extract_strided_slice %415 {offsets = [0, 128], sizes = [16, 128], strides = [1, 1]} : vector<16x256xf32> to vector<16x128xf32>
    %419 = arith.select %2, %417, %418 : vector<16x128xi1>, vector<16x128xf32>
    %420 = arith.addf %416, %419 : vector<16x128xf32>
    %421 = arith.negf %420 : vector<16x128xf32>
    %422 = math.exp %421 : vector<16x128xf32>
    %cst_165 = arith.constant 1.000000e+00 : f32
    %423 = vector.broadcast %cst_165 : f32 to vector<16x128xf32>
    %424 = arith.addf %423, %422 : vector<16x128xf32>
    %425 = arith.divf %423, %424 : vector<16x128xf32>
    %426 = vector.extract_strided_slice %425 {offsets = [0, 0], sizes = [16, 32], strides = [1, 1]} : vector<16x128xf32> to vector<16x32xf32>
    %427 = vector.extract_strided_slice %425 {offsets = [0, 32], sizes = [16, 32], strides = [1, 1]} : vector<16x128xf32> to vector<16x32xf32>
    %428 = vector.extract_strided_slice %425 {offsets = [0, 64], sizes = [16, 32], strides = [1, 1]} : vector<16x128xf32> to vector<16x32xf32>
    %429 = vector.extract_strided_slice %420 {offsets = [0, 96], sizes = [16, 32], strides = [1, 1]} : vector<16x128xf32> to vector<16x32xf32>
    %430 = math.tanh %429 : vector<16x32xf32>
    %431 = arith.mulf %427, %412 : vector<16x32xf32>
    %432 = arith.mulf %426, %430 : vector<16x32xf32>
    %433 = arith.addf %431, %432 : vector<16x32xf32>
    %434 = math.tanh %433 : vector<16x32xf32>
    %435 = arith.mulf %428, %434 : vector<16x32xf32>
    %cst_166 = arith.constant dense<0.000000e+00> : vector<16x256xf32>
    %436 = tpu.matmul %435, %286, %cst_166 {dimension_numbers = #tpu.dot_dimension_numbers<[1], [0], [0], [1], [0, 0, 1, 1], [], []>} : vector<16x32xf32>, vector<32x256xf32>, vector<16x256xf32> -> vector<16x256xf32>
    %c112_167 = arith.constant 112 : index
    %c0_168 = arith.constant 0 : index
    %437 = vector.load %arg12[%c112_167, %c0_168] : memref<128x128xf32, #tpu.memory_space<vmem>>, vector<16x128xf32>
    %438 = vector.extract_strided_slice %436 {offsets = [0, 0], sizes = [16, 128], strides = [1, 1]} : vector<16x256xf32> to vector<16x128xf32>
    %439 = vector.extract_strided_slice %436 {offsets = [0, 128], sizes = [16, 128], strides = [1, 1]} : vector<16x256xf32> to vector<16x128xf32>
    %440 = arith.select %2, %438, %439 : vector<16x128xi1>, vector<16x128xf32>
    %441 = arith.addf %437, %440 : vector<16x128xf32>
    %442 = arith.negf %441 : vector<16x128xf32>
    %443 = math.exp %442 : vector<16x128xf32>
    %cst_169 = arith.constant 1.000000e+00 : f32
    %444 = vector.broadcast %cst_169 : f32 to vector<16x128xf32>
    %445 = arith.addf %444, %443 : vector<16x128xf32>
    %446 = arith.divf %444, %445 : vector<16x128xf32>
    %447 = vector.extract_strided_slice %446 {offsets = [0, 0], sizes = [16, 32], strides = [1, 1]} : vector<16x128xf32> to vector<16x32xf32>
    %448 = vector.extract_strided_slice %446 {offsets = [0, 32], sizes = [16, 32], strides = [1, 1]} : vector<16x128xf32> to vector<16x32xf32>
    %449 = vector.extract_strided_slice %446 {offsets = [0, 64], sizes = [16, 32], strides = [1, 1]} : vector<16x128xf32> to vector<16x32xf32>
    %450 = vector.extract_strided_slice %441 {offsets = [0, 96], sizes = [16, 32], strides = [1, 1]} : vector<16x128xf32> to vector<16x32xf32>
    %451 = math.tanh %450 : vector<16x32xf32>
    %452 = arith.mulf %448, %433 : vector<16x32xf32>
    %453 = arith.mulf %447, %451 : vector<16x32xf32>
    %454 = arith.addf %452, %453 : vector<16x32xf32>
    %455 = math.tanh %454 : vector<16x32xf32>
    %456 = arith.mulf %449, %455 : vector<16x32xf32>
    %457 = tpu.concatenate %239, %456 in 0 : vector<16x32xf32>, vector<16x32xf32> -> vector<32x32xf32>
    %c0_170 = arith.constant 0 : index
    %c0_171 = arith.constant 0 : index
    %458 = vector.load %arg8[%c0_170, %c0_171] : memref<32x4xf32, #tpu.memory_space<vmem>>, vector<32x4xf32>
    %cst_172 = arith.constant dense<0.000000e+00> : vector<32x4xf32>
    %459 = tpu.matmul %457, %458, %cst_172 {dimension_numbers = #tpu.dot_dimension_numbers<[1], [0], [0], [1], [0, 0, 1, 1], [], []>} : vector<32x32xf32>, vector<32x4xf32>, vector<32x4xf32> -> vector<32x4xf32>
    %c0_173 = arith.constant 0 : index
    %c0_174 = arith.constant 0 : index
    %460 = vector.load %arg9[%c0_173, %c0_174] : memref<1x4xf32, #tpu.memory_space<vmem>>, vector<1x4xf32>
    %461 = vector.broadcast %460 : vector<1x4xf32> to vector<32x4xf32>
    %462 = arith.addf %459, %461 : vector<32x4xf32>
    %c0_175 = arith.constant 0 : index
    %c0_176 = arith.constant 0 : index
    %463 = vector.load %arg10[%c0_175, %c0_176] : memref<32x4xf32, #tpu.memory_space<vmem>>, vector<32x4xf32>
    tpu.vector_store %arg10[%c0_175, %c0_176], %462 {strides = array<i32>} : memref<32x4xf32, #tpu.memory_space<vmem>>, vector<32x4xf32>,
    return
  }
  func.func @transform_0(%arg0: i32) -> (i32, i32) {
    %c0_i32 = arith.constant 0 : i32
    %c0_i32_0 = arith.constant 0 : i32
    %c0_i32_1 = arith.constant 0 : i32
    return %c0_i32, %c0_i32_0 : i32, i32
  }
  func.func @transform_1(%arg0: i32) -> (i32, i32) {
    %c0_i32 = arith.constant 0 : i32
    %c0_i32_0 = arith.constant 0 : i32
    %c0_i32_1 = arith.constant 0 : i32
    return %c0_i32, %c0_i32_0 : i32, i32
  }
  func.func @transform_2(%arg0: i32) -> (i32, i32) {
    %c0_i32 = arith.constant 0 : i32
    %c0_i32_0 = arith.constant 0 : i32
    %c0_i32_1 = arith.constant 0 : i32
    return %c0_i32, %c0_i32_0 : i32, i32
  }
  func.func @transform_3(%arg0: i32) -> (i32, i32) {
    %c0_i32 = arith.constant 0 : i32
    %c0_i32_0 = arith.constant 0 : i32
    %c0_i32_1 = arith.constant 0 : i32
    return %c0_i32, %c0_i32_0 : i32, i32
  }
  func.func @transform_4(%arg0: i32) -> (i32, i32) {
    %c0_i32 = arith.constant 0 : i32
    %c0_i32_0 = arith.constant 0 : i32
    %c0_i32_1 = arith.constant 0 : i32
    return %c0_i32, %c0_i32_0 : i32, i32
  }
  func.func @transform_5(%arg0: i32) -> (i32, i32) {
    %c0_i32 = arith.constant 0 : i32
    %c0_i32_0 = arith.constant 0 : i32
    %c0_i32_1 = arith.constant 0 : i32
    return %c0_i32, %c0_i32_0 : i32, i32
  }
  func.func @transform_6(%arg0: i32) -> (i32, i32) {
    %c0_i32 = arith.constant 0 : i32
    %c0_i32_0 = arith.constant 0 : i32
    %c0_i32_1 = arith.constant 0 : i32
    return %c0_i32, %c0_i32_0 : i32, i32
  }
  func.func @transform_7(%arg0: i32) -> (i32, i32) {
    %c0_i32 = arith.constant 0 : i32
    %c0_i32_0 = arith.constant 0 : i32
    %c0_i32_1 = arith.constant 0 : i32
    return %c0_i32, %c0_i32_0 : i32, i32
  }
  func.func @transform_8(%arg0: i32) -> (i32, i32) {
    %c0_i32 = arith.constant 0 : i32
    %c0_i32_0 = arith.constant 0 : i32
    %c0_i32_1 = arith.constant 0 : i32
    return %c0_i32, %c0_i32_0 : i32, i32
  }
  func.func @transform_9(%arg0: i32) -> (i32, i32) {
    %c0_i32 = arith.constant 0 : i32
    %c0_i32_0 = arith.constant 0 : i32
    %c0_i32_1 = arith.constant 0 : i32
    return %c0_i32, %c0_i32_0 : i32, i32
  }
}

</mosaic_0001>

<llo_original>
// kernel: tpu_custom_call.1
$region0: #{tpu_custom_call.1}
  #allocation0 [shape = 'u32[]', space=smem, size = 0x4, offset = 0x4, fixed_abs, tag = 'smem constant byte address 0x4 - core index']
  #allocation1 [shape = 'u32[72,128]{1,0:T(1,128)}', space=vmem, size = 0x9000, scoped, tag = 'internal scratch']
  #allocation2 [shape = 'f32[128,128]{1,0:T(8,128)}', space=vmem, size = 0x10000, scoped, tag = 'scratch operand']
  #allocation3 [shape = 'f32[128,128]{1,0:T(8,128)}', space=vmem, size = 0x10000, scoped, tag = 'scratch operand']
  #allocation4 [shape = 'f32[64,32]{1,0:T(8,128)}', space=vmem, size = 0x8000, scoped, tag = 'scratch operand']
  #allocation5 [shape = 'f32[64,32]{1,0:T(8,128)}', space=vmem, size = 0x8000, scoped, tag = 'scratch operand']
  %s0 = inlined_call_operand.hbm [shape: f32[64,64], index: 0, kind: input, shape index: {}]
  %s1 = inlined_call_operand.hbm [shape: f32[64,256], index: 1, kind: input, shape index: {}]
  %s2 = inlined_call_operand.vmem [shape: f32[1,256], index: 2, kind: input, shape index: {}]
  %s3 = inlined_call_operand.hbm [shape: f32[32,256], index: 3, kind: input, shape index: {}]
  %s4 = inlined_call_operand.hbm [shape: f32[64,256], index: 4, kind: input, shape index: {}]
  %s5 = inlined_call_operand.vmem [shape: f32[1,256], index: 5, kind: input, shape index: {}]
  %s6 = inlined_call_operand.hbm [shape: f32[32,256], index: 6, kind: input, shape index: {}]
  %s7 = inlined_call_operand.vmem [shape: f32[32,4], index: 7, kind: input, shape index: {}]
  %s8 = inlined_call_operand.vmem [shape: f32[1,4], index: 8, kind: input, shape index: {}]
  %s9 = inlined_call_operand.vmem [shape: f32[32,4], index: 9, kind: output, shape index: {}]
  %s10 = sld [smem:[#allocation0]]
  $region66: #{tpu_custom_call.1} parent=0
    _
  %s12 = ssub.s32 1, %s10
  %s13 = scalar_select 0, %s12, %s10
  $region1: #{tpu_custom_call.1} parent=0
    #allocation6 [shape = 'u8[32768]{0}', space=vmem, size = 0x8000, scoped, tag = 'input window, operand 0, single buffered']
    #allocation7 [shape = 's32[1]{0}', space=sflag, size = 0x4, scoped, tag = 'scoped memory for tpu_custom_call.1']
    #allocation8 [shape = 'u8[65536]{0}', space=vmem, size = 0x10000, scoped, tag = 'input window, operand 1, single buffered']
    #allocation9 [shape = 's32[1]{0}', space=sflag, size = 0x4, scoped, tag = 'scoped memory for tpu_custom_call.1']
    #allocation10 [shape = 'u8[32768]{0}', space=vmem, size = 0x8000, scoped, tag = 'input window, operand 3, single buffered']
    #allocation11 [shape = 'u8[65536]{0}', space=vmem, size = 0x10000, scoped, tag = 'input window, operand 4, single buffered']
    #allocation12 [shape = 's32[1]{0}', space=sflag, size = 0x4, scoped, tag = 'scoped memory for tpu_custom_call.1']
    #allocation13 [shape = 'u8[32768]{0}', space=vmem, size = 0x8000, scoped, tag = 'input window, operand 6, single buffered']
    %14 = vsyncpa [#allocation7], 0
    %15 = vsyncpa [#allocation9], 0
    %16 = vsyncpa [#allocation12], 0
    // Predicated region
    $region2: #{tpu_custom_call.1} parent=1 // pred_check
      _
    $region3: #{tpu_custom_call.1} parent=1 // pred_check_branch
      %18 = sbr.rel (0) target = $region5
    $region4: #{tpu_custom_call.1} parent=1 // pred_region
      %20 = vsyncadd [#allocation7], 0
      %s21 = sshll.u32 %s0, 4
      %s22 = int_to_ptr.hbm [resolvable:$true] %s21
      %s23 = sshll.u32 [#allocation6], 4
      %s24 = int_to_ptr.vmem [resolvable:$true] %s23
      %29 = dma.hbm_to_vmem [thread:$0]  %s22, 1024, %s24, [#allocation7], 128, 128, 8
    $region5: #{tpu_custom_call.1} parent=1 // pred_fallthru
      _
    // Predicated region
    $region6: #{tpu_custom_call.1} parent=1 // pred_check
      _
    $region7: #{tpu_custom_call.1} parent=1 // pred_check_branch
      %31 = sbr.rel (0) target = $region9
    $region8: #{tpu_custom_call.1} parent=1 // pred_region
      %33 = vsyncadd [#allocation9], 0
      %s34 = sshll.u32 %s1, 4
      %s35 = int_to_ptr.hbm [resolvable:$true] %s34
      %s36 = sshll.u32 [#allocation8], 4
      %s37 = int_to_ptr.vmem [resolvable:$true] %s36
      %42 = dma.hbm_to_vmem [thread:$0]  %s35, 2048, %s37, [#allocation9], 256, 256, 16
    $region9: #{tpu_custom_call.1} parent=1 // pred_fallthru
      _
    // Predicated region
    $region10: #{tpu_custom_call.1} parent=1 // pred_check
      _
    $region11: #{tpu_custom_call.1} parent=1 // pred_check_branch
      %44 = sbr.rel (0) target = $region13
    $region12: #{tpu_custom_call.1} parent=1 // pred_region
      _
    $region13: #{tpu_custom_call.1} parent=1 // pred_fallthru
      _
    // Predicated region
    $region14: #{tpu_custom_call.1} parent=1 // pred_check
      _
    $region15: #{tpu_custom_call.1} parent=1 // pred_check_branch
      %46 = sbr.rel (0) target = $region17
    $region16: #{tpu_custom_call.1} parent=1 // pred_region
      %48 = vsyncadd [#allocation9], 0
      %s49 = sshll.u32 %s3, 4
      %s50 = int_to_ptr.hbm [resolvable:$true] %s49
      %s51 = sshll.u32 [#allocation10], 4
      %s52 = int_to_ptr.vmem [resolvable:$true] %s51
      %57 = dma.hbm_to_vmem [thread:$0]  %s50, 1024, %s52, [#allocation9], 256, 256, 16
    $region17: #{tpu_custom_call.1} parent=1 // pred_fallthru
      _
    // Predicated region
    $region18: #{tpu_custom_call.1} parent=1 // pred_check
      _
    $region19: #{tpu_custom_call.1} parent=1 // pred_check_branch
      %59 = sbr.rel (0) target = $region21
    $region20: #{tpu_custom_call.1} parent=1 // pred_region
      %61 = vsyncadd [#allocation12], 0
      %s62 = sshll.u32 %s4, 4
      %s63 = int_to_ptr.hbm [resolvable:$true] %s62
      %s64 = sshll.u32 [#allocation11], 4
      %s65 = int_to_ptr.vmem [resolvable:$true] %s64
      %70 = dma.hbm_to_vmem [thread:$0]  %s63, 2048, %s65, [#allocation12], 256, 256, 16
    $region21: #{tpu_custom_call.1} parent=1 // pred_fallthru
      _
    // Predicated region
    $region22: #{tpu_custom_call.1} parent=1 // pred_check
      _
    $region23: #{tpu_custom_call.1} parent=1 // pred_check_branch
      %72 = sbr.rel (0) target = $region25
    $region24: #{tpu_custom_call.1} parent=1 // pred_region
      _
    $region25: #{tpu_custom_call.1} parent=1 // pred_fallthru
      _
    // Predicated region
    $region26: #{tpu_custom_call.1} parent=1 // pred_check
      _
    $region27: #{tpu_custom_call.1} parent=1 // pred_check_branch
      %74 = sbr.rel (0) target = $region29
    $region28: #{tpu_custom_call.1} parent=1 // pred_region
      %76 = vsyncadd [#allocation12], 0
      %s77 = sshll.u32 %s6, 4
      %s78 = int_to_ptr.hbm [resolvable:$true] %s77
      %s79 = sshll.u32 [#allocation13], 4
      %s80 = int_to_ptr.vmem [resolvable:$true] %s79
      %85 = dma.hbm_to_vmem [thread:$0]  %s78, 1024, %s80, [#allocation12], 256, 256, 16
    $region29: #{tpu_custom_call.1} parent=1 // pred_fallthru
      _
    // Predicated region
    $region30: #{tpu_custom_call.1} parent=1 // pred_check
      _
    $region31: #{tpu_custom_call.1} parent=1 // pred_check_branch
      %87 = sbr.rel (0) target = $region33
    $region32: #{tpu_custom_call.1} parent=1 // pred_region
      _
    $region33: #{tpu_custom_call.1} parent=1 // pred_fallthru
      _
    // Predicated region
    $region34: #{tpu_custom_call.1} parent=1 // pred_check
      _
    $region35: #{tpu_custom_call.1} parent=1 // pred_check_branch
      %89 = sbr.rel (0) target = $region37
    $region36: #{tpu_custom_call.1} parent=1 // pred_region
      _
    $region37: #{tpu_custom_call.1} parent=1 // pred_fallthru
      _
    // Predicated region
    $region38: #{tpu_custom_call.1} parent=1 // pred_check
      _
    $region39: #{tpu_custom_call.1} parent=1 // pred_check_branch
      %91 = sbr.rel (0) target = $region41
    $region40: #{tpu_custom_call.1} parent=1 // pred_region
      %93 = dma.done [#allocation7], 1024
    $region41: #{tpu_custom_call.1} parent=1 // pred_fallthru
      _
    // Predicated region
    $region42: #{tpu_custom_call.1} parent=1 // pred_check
      _
    $region43: #{tpu_custom_call.1} parent=1 // pred_check_branch
      %95 = sbr.rel (0) target = $region45
    $region44: #{tpu_custom_call.1} parent=1 // pred_region
      %97 = dma.done [#allocation9], 2048
    $region45: #{tpu_custom_call.1} parent=1 // pred_fallthru
      _
    // Predicated region
    $region46: #{tpu_custom_call.1} parent=1 // pred_check
      _
    $region47: #{tpu_custom_call.1} parent=1 // pred_check_branch
      %99 = sbr.rel (0) target = $region49
    $region48: #{tpu_custom_call.1} parent=1 // pred_region
      %101 = dma.done [#allocation9], 1024
    $region49: #{tpu_custom_call.1} parent=1 // pred_fallthru
      _
    // Predicated region
    $region50: #{tpu_custom_call.1} parent=1 // pred_check
      _
    $region51: #{tpu_custom_call.1} parent=1 // pred_check_branch
      %103 = sbr.rel (0) target = $region53
    $region52: #{tpu_custom_call.1} parent=1 // pred_region
      %105 = dma.done [#allocation12], 2048
    $region53: #{tpu_custom_call.1} parent=1 // pred_fallthru
      _
    // Predicated region
    $region54: #{tpu_custom_call.1} parent=1 // pred_check
      _
    $region55: #{tpu_custom_call.1} parent=1 // pred_check_branch
      %107 = sbr.rel (0) target = $region57
    $region56: #{tpu_custom_call.1} parent=1 // pred_region
      %109 = dma.done [#allocation12], 1024
    $region57: #{tpu_custom_call.1} parent=1 // pred_fallthru
      _
    %v110 = vlaneseq
    %v111 = vshrl.u32 %v110, 7
    %v112 = vadd.s32 %v111, 8
    %vm113 = vcmp.lt.s32.totalorder %v111, 8
    %vm114 = vcmp.lt.s32.totalorder %v112, 8
    %v115 = vld [vmem:[#allocation6] sm:$0xff]
    %v116 = vld [vmem:[#allocation6 + $0x8] sm:$0xff]
    %v117 = vld [vmem:[#allocation6 + $0x10] sm:$0xff]
    %v118 = vld [vmem:[#allocation6 + $0x18] sm:$0xff]
    %v119 = vld [vmem:[#allocation6 + $0x20] sm:$0xff]
    %v120 = vld [vmem:[#allocation6 + $0x28] sm:$0xff]
    %v121 = vld [vmem:[#allocation6 + $0x30] sm:$0xff]
    %v122 = vld [vmem:[#allocation6 + $0x38] sm:$0xff]
    %v123 = vld [vmem:[#allocation8] sm:$0xff]
    %v124 = vld [vmem:[#allocation8 + $0x8] sm:$0xff]
    %v125 = vld [vmem:[#allocation8 + $0x10] sm:$0xff]
    %v126 = vld [vmem:[#allocation8 + $0x18] sm:$0xff]
    %v127 = vld [vmem:[#allocation8 + $0x20] sm:$0xff]
    %v128 = vld [vmem:[#allocation8 + $0x28] sm:$0xff]
    %v129 = vld [vmem:[#allocation8 + $0x30] sm:$0xff]
    %v130 = vld [vmem:[#allocation8 + $0x38] sm:$0xff]
    %v131 = vld [vmem:[#allocation8 + $0x40] sm:$0xff]
    %v132 = vld [vmem:[#allocation8 + $0x48] sm:$0xff]
    %v133 = vld [vmem:[#allocation8 + $0x50] sm:$0xff]
    %v134 = vld [vmem:[#allocation8 + $0x58] sm:$0xff]
    %v135 = vld [vmem:[#allocation8 + $0x60] sm:$0xff]
    %v136 = vld [vmem:[#allocation8 + $0x68] sm:$0xff]
    %v137 = vld [vmem:[#allocation8 + $0x70] sm:$0xff]
    %v138 = vld [vmem:[#allocation8 + $0x78] sm:$0xff]
    %v139 = vld [vmem:[%s2] sm:$0x3]
    %v141 = vperm.slane %v139, 0
    %v142 = vperm.slane %v139, 1
    %vm145 = vcmask 523264
    %v147 = vsel %vm145, %v115, 0
    %v150 = vsel %vm145, %v116, 0
    %v153 = vsel %vm145, %v117, 0
    %v156 = vsel %vm145, %v118, 0
    %v159 = vsel %vm145, %v119, 0
    %v162 = vsel %vm145, %v120, 0
    %v165 = vsel %vm145, %v121, 0
    %v168 = vsel %vm145, %v122, 0
    %170 = vmatpush.msra.mxu0 0.0
    %171 = vmatpush.msra.mxu0 0.0
    %172 = vmatpush.msra.mxu0 0.0
    %173 = vmatpush.msra.mxu0 0.0
    %174 = vmatpush.msra.mxu0 0.0
    %175 = vmatpush.msra.mxu0 0.0
    %176 = vmatpush.msra.mxu0 0.0
    %177 = vmatpush.msra.mxu0 0.0
    %178 = vmatpush.msra.mxu0 %v137
    %179 = vmatpush.msra.mxu0 %v135
    %180 = vmatpush.msra.mxu0 %v133
    %181 = vmatpush.msra.mxu0 %v131
    %182 = vmatpush.msra.mxu0 %v129
    %183 = vmatpush.msra.mxu0 %v127
    %184 = vmatpush.msra.mxu0 %v125
    %185 = vmatpush.msra.mxu0 %v123
    %186 = vmatmul.f32.gmra.mxu0 %v147
    %v187 = vpop.f32.mrf.mxu0
    %v188 = vadd.f32 %v141, %v187
    %189 = vmatmul.f32.gmra.mxu0 %v150
    %v190 = vpop.f32.mrf.mxu0
    %v191 = vadd.f32 %v141, %v190
    %192 = vmatmul.f32.gmra.mxu0 %v153
    %v193 = vpop.f32.mrf.mxu0
    %v194 = vadd.f32 %v141, %v193
    %195 = vmatmul.f32.gmra.mxu0 %v156
    %v196 = vpop.f32.mrf.mxu0
    %v197 = vadd.f32 %v141, %v196
    %198 = vmatmul.f32.gmra.mxu0 %v159
    %v199 = vpop.f32.mrf.mxu0
    %v200 = vadd.f32 %v141, %v199
    %201 = vmatmul.f32.gmra.mxu0 %v162
    %v202 = vpop.f32.mrf.mxu0
    %v203 = vadd.f32 %v141, %v202
    %204 = vmatmul.f32.gmra.mxu0 %v165
    %v205 = vpop.f32.mrf.mxu0
    %v206 = vadd.f32 %v141, %v205
    %207 = vmatmul.f32.gmra.mxu0 %v168
    %v208 = vpop.f32.mrf.mxu0
    %v209 = vadd.f32 %v141, %v208
    %210 = vdwg.mxu0
    %211 = vmatpush.msra.mxu0 0.0
    %212 = vmatpush.msra.mxu0 0.0
    %213 = vmatpush.msra.mxu0 0.0
    %214 = vmatpush.msra.mxu0 0.0
    %215 = vmatpush.msra.mxu0 0.0
    %216 = vmatpush.msra.mxu0 0.0
    %217 = vmatpush.msra.mxu0 0.0
    %218 = vmatpush.msra.mxu0 0.0
    %219 = vmatpush.msra.mxu0 %v138
    %220 = vmatpush.msra.mxu0 %v136
    %221 = vmatpush.msra.mxu0 %v134
    %222 = vmatpush.msra.mxu0 %v132
    %223 = vmatpush.msra.mxu0 %v130
    %224 = vmatpush.msra.mxu0 %v128
    %225 = vmatpush.msra.mxu0 %v126
    %226 = vmatpush.msra.mxu0 %v124
    %227 = vmatmul.f32.gmra.mxu0 %v147
    %v228 = vpop.f32.mrf.mxu0
    %v229 = vadd.f32 %v142, %v228
    %230 = vmatmul.f32.gmra.mxu0 %v150
    %v231 = vpop.f32.mrf.mxu0
    %v232 = vadd.f32 %v142, %v231
    %233 = vmatmul.f32.gmra.mxu0 %v153
    %v234 = vpop.f32.mrf.mxu0
    %v235 = vadd.f32 %v142, %v234
    %236 = vmatmul.f32.gmra.mxu0 %v156
    %v237 = vpop.f32.mrf.mxu0
    %v238 = vadd.f32 %v142, %v237
    %239 = vmatmul.f32.gmra.mxu0 %v159
    %v240 = vpop.f32.mrf.mxu0
    %v241 = vadd.f32 %v142, %v240
    %242 = vmatmul.f32.gmra.mxu0 %v162
    %v243 = vpop.f32.mrf.mxu0
    %v244 = vadd.f32 %v142, %v243
    %245 = vmatmul.f32.gmra.mxu0 %v165
    %v246 = vpop.f32.mrf.mxu0
    %v247 = vadd.f32 %v142, %v246
    %248 = vmatmul.f32.gmra.mxu0 %v168
    %v249 = vpop.f32.mrf.mxu0
    %v250 = vadd.f32 %v142, %v249
    %251 = vdwg.mxu0
    %252 = vst [vmem:[#allocation2] sm:$0xff] %v188
    %253 = vst [vmem:[#allocation2 + $0x78] sm:$0xff] %v229
    %254 = vst [vmem:[#allocation2 + $0x10] sm:$0xff] %v191
    %255 = vst [vmem:[#allocation2 + $0x68] sm:$0xff] %v232
    %256 = vst [vmem:[#allocation2 + $0x20] sm:$0xff] %v194
    %257 = vst [vmem:[#allocation2 + $0x58] sm:$0xff] %v235
    %258 = vst [vmem:[#allocation2 + $0x30] sm:$0xff] %v197
    %259 = vst [vmem:[#allocation2 + $0x48] sm:$0xff] %v238
    %260 = vst [vmem:[#allocation2 + $0x40] sm:$0xff] %v200
    %261 = vst [vmem:[#allocation2 + $0x38] sm:$0xff] %v241
    %262 = vst [vmem:[#allocation2 + $0x50] sm:$0xff] %v203
    %263 = vst [vmem:[#allocation2 + $0x28] sm:$0xff] %v244
    %264 = vst [vmem:[#allocation2 + $0x60] sm:$0xff] %v206
    %265 = vst [vmem:[#allocation2 + $0x18] sm:$0xff] %v247
    %266 = vst [vmem:[#allocation2 + $0x70] sm:$0xff] %v209
    %267 = vst [vmem:[#allocation2 + $0x8] sm:$0xff] %v250
    %v268 = vld [vmem:[#allocation10] sm:$0xff]
    %v269 = vld [vmem:[#allocation10 + $0x8] sm:$0xff]
    %v270 = vld [vmem:[#allocation10 + $0x10] sm:$0xff]
    %v271 = vld [vmem:[#allocation10 + $0x18] sm:$0xff]
    %v272 = vld [vmem:[#allocation10 + $0x20] sm:$0xff]
    %v273 = vld [vmem:[#allocation10 + $0x28] sm:$0xff]
    %v274 = vld [vmem:[#allocation10 + $0x30] sm:$0xff]
    %v275 = vld [vmem:[#allocation10 + $0x38] sm:$0xff]
    %vm276 = vcmask 261120
    %v278 = vsel %vm276, 0.0, 0
    %280 = vmatpush.msra.mxu0 0.0
    %281 = vmatpush.msra.mxu0 0.0
    %282 = vmatpush.msra.mxu0 0.0
    %283 = vmatpush.msra.mxu0 0.0
    %284 = vmatpush.msra.mxu0 0.0
    %285 = vmatpush.msra.mxu0 0.0
    %286 = vmatpush.msra.mxu0 0.0
    %287 = vmatpush.msra.mxu0 0.0
    %288 = vmatpush.msra.mxu0 0.0
    %289 = vmatpush.msra.mxu0 0.0
    %290 = vmatpush.msra.mxu0 0.0
    %291 = vmatpush.msra.mxu0 0.0
    %292 = vmatpush.msra.mxu0 %v274
    %293 = vmatpush.msra.mxu0 %v272
    %294 = vmatpush.msra.mxu0 %v270
    %295 = vmatpush.msra.mxu0 %v268
    %296 = vmatmul.f32.gmra.mxu0 %v278
    %v297 = vpop.f32.mrf.mxu0
    %v298 = vadd.f32 0.0, %v297
    %299 = vmatmul.f32.gmra.mxu0 %v278
    %v300 = vpop.f32.mrf.mxu0
    %v301 = vadd.f32 0.0, %v300
    %302 = vdwg.mxu0
    %303 = vmatpush.msra.mxu0 0.0
    %304 = vmatpush.msra.mxu0 0.0
    %305 = vmatpush.msra.mxu0 0.0
    %306 = vmatpush.msra.mxu0 0.0
    %307 = vmatpush.msra.mxu0 0.0
    %308 = vmatpush.msra.mxu0 0.0
    %309 = vmatpush.msra.mxu0 0.0
    %310 = vmatpush.msra.mxu0 0.0
    %311 = vmatpush.msra.mxu0 0.0
    %312 = vmatpush.msra.mxu0 0.0
    %313 = vmatpush.msra.mxu0 0.0
    %314 = vmatpush.msra.mxu0 0.0
    %315 = vmatpush.msra.mxu0 %v275
    %316 = vmatpush.msra.mxu0 %v273
    %317 = vmatpush.msra.mxu0 %v271
    %318 = vmatpush.msra.mxu0 %v269
    %319 = vmatmul.f32.gmra.mxu0 %v278
    %v320 = vpop.f32.mrf.mxu0
    %v321 = vadd.f32 0.0, %v320
    %322 = vmatmul.f32.gmra.mxu0 %v278
    %v323 = vpop.f32.mrf.mxu0
    %v324 = vadd.f32 0.0, %v323
    %325 = vdwg.mxu0
    %v326 = vld [vmem:[#allocation2] sm:$0xff]
    %v327 = vld [vmem:[#allocation2 + $0x8] sm:$0xff]
    %v328 = vsel %vm113, %v298, %v321
    %v329 = vsel %vm114, %v301, %v324
    %v330 = vadd.f32 %v326, %v328
    %v331 = vadd.f32 %v327, %v329
    %v332 = vxor.u32 %v330, 2147483648
    %v333 = vxor.u32 %v331, 2147483648
    %v334 = vmul.f32 %v332, 1.442695
    %v335 = vpow.pop %v334
    %v336 = vmul.f32 %v333, 1.442695
    %v337 = vpow.pop %v336
    %v338 = vadd.f32 %v335, 1.0
    %v339 = vadd.f32 %v337, 1.0
    %v340 = vrcp.pop %v338
    %v341 = vmul.f32 %v338, %v340
    %v342 = vsub.f32 1.0, %v341
    %v343 = vmul.f32 %v340, %v342
    %v344 = vadd.f32 %v340, %v343
    %vm345 = vweird.f32 %v338
    %vm346 = vweird.f32 %v340
    %vm347 = vmor %vm345, %vm346
    %v348 = vsel %vm347, %v340, %v344
    %v349 = vand.u32 2147483647, %v338
    %vm350 = vcmp.eq.f32.partialorder %v349, 8.507059e+37
    %v351 = vand.u32 %v338, 2147483648
    %v352 = vor.u32 1.1754944e-38, %v351
    %v353 = vsel %vm350, %v352, %v348
    %v354 = vmul.f32 1.0, %v353
    %v355 = vrcp.pop %v339
    %v356 = vmul.f32 %v339, %v355
    %v357 = vsub.f32 1.0, %v356
    %v358 = vmul.f32 %v355, %v357
    %v359 = vadd.f32 %v355, %v358
    %vm360 = vweird.f32 %v339
    %vm361 = vweird.f32 %v355
    %vm362 = vmor %vm360, %vm361
    %v363 = vsel %vm362, %v355, %v359
    %v364 = vand.u32 2147483647, %v339
    %vm365 = vcmp.eq.f32.partialorder %v364, 8.507059e+37
    %v366 = vand.u32 %v339, 2147483648
    %v367 = vor.u32 1.1754944e-38, %v366
    %v368 = vsel %vm365, %v367, %v363
    %v369 = vmul.f32 1.0, %v368
    %v370 = vtanh.pop %v330
    %v371 = vtanh.pop %v331
    %v372 = vmul.f32 %v354, 0.0
    %v373 = vmul.f32 %v369, 0.0
    %376 = vrot.lane.b32.xlu0 %v370, 32
    %v377 = vpop.permute.xlu0 %376
    %378 = vrot.lane.b32.xlu0 %v371, 32
    %v379 = vpop.permute.xlu0 %378
    %v382 = vmul.f32 %v354, %v377
    %v383 = vmul.f32 %v369, %v379
    %386 = vrot.lane.b32.xlu0 %v382, 32
    %v387 = vpop.permute.xlu0 %386
    %388 = vrot.lane.b32.xlu0 %v383, 32
    %v389 = vpop.permute.xlu0 %388
    %v392 = vadd.f32 %v372, %v387
    %v393 = vadd.f32 %v373, %v389
    %v394 = vtanh.pop %v392
    %v395 = vtanh.pop %v393
    %398 = vrot.lane.b32.xlu0 %v394, 32
    %v399 = vpop.permute.xlu0 %398
    %400 = vrot.lane.b32.xlu0 %v395, 32
    %v401 = vpop.permute.xlu0 %400
    %v404 = vmul.f32 %v354, %v399
    %v405 = vmul.f32 %v369, %v401
    %407 = vrot.lane.b32.xlu0 %v404, 64
    %v408 = vpop.permute.xlu0 %407
    %410 = vst.msk [vmem:[#allocation4] sm:$0xff] %vm276, %v408
    %412 = vrot.lane.b32.xlu0 %v405, 64
    %v413 = vpop.permute.xlu0 %412
    %415 = vst.msk [vmem:[#allocation5 + $0x38] sm:$0xff] %vm276, %v413
    %v416 = vsel %vm276, %v408, 0
    %v418 = vsel %vm276, %v413, 0
    %420 = vmatpush.msra.mxu0 0.0
    %421 = vmatpush.msra.mxu0 0.0
    %422 = vmatpush.msra.mxu0 0.0
    %423 = vmatpush.msra.mxu0 0.0
    %424 = vmatpush.msra.mxu0 0.0
    %425 = vmatpush.msra.mxu0 0.0
    %426 = vmatpush.msra.mxu0 0.0
    %427 = vmatpush.msra.mxu0 0.0
    %428 = vmatpush.msra.mxu0 0.0
    %429 = vmatpush.msra.mxu0 0.0
    %430 = vmatpush.msra.mxu0 0.0
    %431 = vmatpush.msra.mxu0 0.0
    %432 = vmatpush.msra.mxu0 %v274
    %433 = vmatpush.msra.mxu0 %v272
    %434 = vmatpush.msra.mxu0 %v270
    %435 = vmatpush.msra.mxu0 %v268
    %436 = vmatmul.f32.gmra.mxu0 %v416
    %v437 = vpop.f32.mrf.mxu0
    %v438 = vadd.f32 0.0, %v437
    %439 = vmatmul.f32.gmra.mxu0 %v418
    %v440 = vpop.f32.mrf.mxu0
    %v441 = vadd.f32 0.0, %v440
    %442 = vdwg.mxu0
    %443 = vmatpush.msra.mxu0 0.0
    %444 = vmatpush.msra.mxu0 0.0
    %445 = vmatpush.msra.mxu0 0.0
    %446 = vmatpush.msra.mxu0 0.0
    %447 = vmatpush.msra.mxu0 0.0
    %448 = vmatpush.msra.mxu0 0.0
    %449 = vmatpush.msra.mxu0 0.0
    %450 = vmatpush.msra.mxu0 0.0
    %451 = vmatpush.msra.mxu0 0.0
    %452 = vmatpush.msra.mxu0 0.0
    %453 = vmatpush.msra.mxu0 0.0
    %454 = vmatpush.msra.mxu0 0.0
    %455 = vmatpush.msra.mxu0 %v275
    %456 = vmatpush.msra.mxu0 %v273
    %457 = vmatpush.msra.mxu0 %v271
    %458 = vmatpush.msra.mxu0 %v269
    %459 = vmatmul.f32.gmra.mxu0 %v416
    %v460 = vpop.f32.mrf.mxu0
    %v461 = vadd.f32 0.0, %v460
    %462 = vmatmul.f32.gmra.mxu0 %v418
    %v463 = vpop.f32.mrf.mxu0
    %v464 = vadd.f32 0.0, %v463
    %465 = vdwg.mxu0
    %v466 = vld [vmem:[#allocation2 + $0x10] sm:$0xff]
    %v467 = vld [vmem:[#allocation2 + $0x18] sm:$0xff]
    %v468 = vsel %vm113, %v438, %v461
    %v469 = vsel %vm114, %v441, %v464
    %v470 = vadd.f32 %v466, %v468
    %v471 = vadd.f32 %v467, %v469
    %v472 = vxor.u32 %v470, 2147483648
    %v473 = vxor.u32 %v471, 2147483648
    %v474 = vmul.f32 %v472, 1.442695
    %v475 = vpow.pop %v474
    %v476 = vmul.f32 %v473, 1.442695
    %v477 = vpow.pop %v476
    %v478 = vadd.f32 %v475, 1.0
    %v479 = vadd.f32 %v477, 1.0
    %v480 = vrcp.pop %v478
    %v481 = vmul.f32 %v478, %v480
    %v482 = vsub.f32 1.0, %v481
    %v483 = vmul.f32 %v480, %v482
    %v484 = vadd.f32 %v480, %v483
    %vm485 = vweird.f32 %v478
    %vm486 = vweird.f32 %v480
    %vm487 = vmor %vm485, %vm486
    %v488 = vsel %vm487, %v480, %v484
    %v489 = vand.u32 2147483647, %v478
    %vm490 = vcmp.eq.f32.partialorder %v489, 8.507059e+37
    %v491 = vand.u32 %v478, 2147483648
    %v492 = vor.u32 1.1754944e-38, %v491
    %v493 = vsel %vm490, %v492, %v488
    %v494 = vmul.f32 1.0, %v493
    %v495 = vrcp.pop %v479
    %v496 = vmul.f32 %v479, %v495
    %v497 = vsub.f32 1.0, %v496
    %v498 = vmul.f32 %v495, %v497
    %v499 = vadd.f32 %v495, %v498
    %vm500 = vweird.f32 %v479
    %vm501 = vweird.f32 %v495
    %vm502 = vmor %vm500, %vm501
    %v503 = vsel %vm502, %v495, %v499
    %v504 = vand.u32 2147483647, %v479
    %vm505 = vcmp.eq.f32.partialorder %v504, 8.507059e+37
    %v506 = vand.u32 %v479, 2147483648
    %v507 = vor.u32 1.1754944e-38, %v506
    %v508 = vsel %vm505, %v507, %v503
    %v509 = vmul.f32 1.0, %v508
    %v510 = vtanh.pop %v470
    %v511 = vtanh.pop %v471
    %v512 = vmul.f32 %v494, %v392
    %v513 = vmul.f32 %v509, %v393
    %516 = vrot.lane.b32.xlu0 %v510, 32
    %v517 = vpop.permute.xlu0 %516
    %518 = vrot.lane.b32.xlu0 %v511, 32
    %v519 = vpop.permute.xlu0 %518
    %v522 = vmul.f32 %v494, %v517
    %v523 = vmul.f32 %v509, %v519
    %526 = vrot.lane.b32.xlu0 %v522, 32
    %v527 = vpop.permute.xlu0 %526
    %528 = vrot.lane.b32.xlu0 %v523, 32
    %v529 = vpop.permute.xlu0 %528
    %v532 = vadd.f32 %v512, %v527
    %v533 = vadd.f32 %v513, %v529
    %v534 = vtanh.pop %v532
    %v535 = vtanh.pop %v533
    %538 = vrot.lane.b32.xlu0 %v534, 32
    %v539 = vpop.permute.xlu0 %538
    %540 = vrot.lane.b32.xlu0 %v535, 32
    %v541 = vpop.permute.xlu0 %540
    %v544 = vmul.f32 %v494, %v539
    %v545 = vmul.f32 %v509, %v541
    %547 = vrot.lane.b32.xlu0 %v544, 64
    %v548 = vpop.permute.xlu0 %547
    %550 = vst.msk [vmem:[#allocation4 + $0x8] sm:$0xff] %vm276, %v548
    %552 = vrot.lane.b32.xlu0 %v545, 64
    %v553 = vpop.permute.xlu0 %552
    %555 = vst.msk [vmem:[#allocation5 + $0x30] sm:$0xff] %vm276, %v553
    %v556 = vsel %vm276, %v548, 0
    %v558 = vsel %vm276, %v553, 0
    %560 = vmatpush.msra.mxu0 0.0
    %561 = vmatpush.msra.mxu0 0.0
    %562 = vmatpush.msra.mxu0 0.0
    %563 = vmatpush.msra.mxu0 0.0
    %564 = vmatpush.msra.mxu0 0.0
    %565 = vmatpush.msra.mxu0 0.0
    %566 = vmatpush.msra.mxu0 0.0
    %567 = vmatpush.msra.mxu0 0.0
    %568 = vmatpush.msra.mxu0 0.0
    %569 = vmatpush.msra.mxu0 0.0
    %570 = vmatpush.msra.mxu0 0.0
    %571 = vmatpush.msra.mxu0 0.0
    %572 = vmatpush.msra.mxu0 %v274
    %573 = vmatpush.msra.mxu0 %v272
    %574 = vmatpush.msra.mxu0 %v270
    %575 = vmatpush.msra.mxu0 %v268
    %576 = vmatmul.f32.gmra.mxu0 %v556
    %v577 = vpop.f32.mrf.mxu0
    %v578 = vadd.f32 0.0, %v577
    %579 = vmatmul.f32.gmra.mxu0 %v558
    %v580 = vpop.f32.mrf.mxu0
    %v581 = vadd.f32 0.0, %v580
    %582 = vdwg.mxu0
    %583 = vmatpush.msra.mxu0 0.0
    %584 = vmatpush.msra.mxu0 0.0
    %585 = vmatpush.msra.mxu0 0.0
    %586 = vmatpush.msra.mxu0 0.0
    %587 = vmatpush.msra.mxu0 0.0
    %588 = vmatpush.msra.mxu0 0.0
    %589 = vmatpush.msra.mxu0 0.0
    %590 = vmatpush.msra.mxu0 0.0
    %591 = vmatpush.msra.mxu0 0.0
    %592 = vmatpush.msra.mxu0 0.0
    %593 = vmatpush.msra.mxu0 0.0
    %594 = vmatpush.msra.mxu0 0.0
    %595 = vmatpush.msra.mxu0 %v275
    %596 = vmatpush.msra.mxu0 %v273
    %597 = vmatpush.msra.mxu0 %v271
    %598 = vmatpush.msra.mxu0 %v269
    %599 = vmatmul.f32.gmra.mxu0 %v556
    %v600 = vpop.f32.mrf.mxu0
    %v601 = vadd.f32 0.0, %v600
    %602 = vmatmul.f32.gmra.mxu0 %v558
    %v603 = vpop.f32.mrf.mxu0
    %v604 = vadd.f32 0.0, %v603
    %605 = vdwg.mxu0
    %v606 = vld [vmem:[#allocation2 + $0x20] sm:$0xff]
    %v607 = vld [vmem:[#allocation2 + $0x28] sm:$0xff]
    %v608 = vsel %vm113, %v578, %v601
    %v609 = vsel %vm114, %v581, %v604
    %v610 = vadd.f32 %v606, %v608
    %v611 = vadd.f32 %v607, %v609
    %v612 = vxor.u32 %v610, 2147483648
    %v613 = vxor.u32 %v611, 2147483648
    %v614 = vmul.f32 %v612, 1.442695
    %v615 = vpow.pop %v614
    %v616 = vmul.f32 %v613, 1.442695
    %v617 = vpow.pop %v616
    %v618 = vadd.f32 %v615, 1.0
    %v619 = vadd.f32 %v617, 1.0
    %v620 = vrcp.pop %v618
    %v621 = vmul.f32 %v618, %v620
    %v622 = vsub.f32 1.0, %v621
    %v623 = vmul.f32 %v620, %v622
    %v624 = vadd.f32 %v620, %v623
    %vm625 = vweird.f32 %v618
    %vm626 = vweird.f32 %v620
    %vm627 = vmor %vm625, %vm626
    %v628 = vsel %vm627, %v620, %v624
    %v629 = vand.u32 2147483647, %v618
    %vm630 = vcmp.eq.f32.partialorder %v629, 8.507059e+37
    %v631 = vand.u32 %v618, 2147483648
    %v632 = vor.u32 1.1754944e-38, %v631
    %v633 = vsel %vm630, %v632, %v628
    %v634 = vmul.f32 1.0, %v633
    %v635 = vrcp.pop %v619
    %v636 = vmul.f32 %v619, %v635
    %v637 = vsub.f32 1.0, %v636
    %v638 = vmul.f32 %v635, %v637
    %v639 = vadd.f32 %v635, %v638
    %vm640 = vweird.f32 %v619
    %vm641 = vweird.f32 %v635
    %vm642 = vmor %vm640, %vm641
    %v643 = vsel %vm642, %v635, %v639
    %v644 = vand.u32 2147483647, %v619
    %vm645 = vcmp.eq.f32.partialorder %v644, 8.507059e+37
    %v646 = vand.u32 %v619, 2147483648
    %v647 = vor.u32 1.1754944e-38, %v646
    %v648 = vsel %vm645, %v647, %v643
    %v649 = vmul.f32 1.0, %v648
    %v650 = vtanh.pop %v610
    %v651 = vtanh.pop %v611
    %v652 = vmul.f32 %v634, %v532
    %v653 = vmul.f32 %v649, %v533
    %656 = vrot.lane.b32.xlu0 %v650, 32
    %v657 = vpop.permute.xlu0 %656
    %658 = vrot.lane.b32.xlu0 %v651, 32
    %v659 = vpop.permute.xlu0 %658
    %v662 = vmul.f32 %v634, %v657
    %v663 = vmul.f32 %v649, %v659
    %666 = vrot.lane.b32.xlu0 %v662, 32
    %v667 = vpop.permute.xlu0 %666
    %668 = vrot.lane.b32.xlu0 %v663, 32
    %v669 = vpop.permute.xlu0 %668
    %v672 = vadd.f32 %v652, %v667
    %v673 = vadd.f32 %v653, %v669
    %v674 = vtanh.pop %v672
    %v675 = vtanh.pop %v673
    %678 = vrot.lane.b32.xlu0 %v674, 32
    %v679 = vpop.permute.xlu0 %678
    %680 = vrot.lane.b32.xlu0 %v675, 32
    %v681 = vpop.permute.xlu0 %680
    %v684 = vmul.f32 %v634, %v679
    %v685 = vmul.f32 %v649, %v681
    %687 = vrot.lane.b32.xlu0 %v684, 64
    %v688 = vpop.permute.xlu0 %687
    %690 = vst.msk [vmem:[#allocation4 + $0x10] sm:$0xff] %vm276, %v688
    %692 = vrot.lane.b32.xlu0 %v685, 64
    %v693 = vpop.permute.xlu0 %692
    %695 = vst.msk [vmem:[#allocation5 + $0x28] sm:$0xff] %vm276, %v693
    %v696 = vsel %vm276, %v688, 0
    %v698 = vsel %vm276, %v693, 0
    %700 = vmatpush.msra.mxu0 0.0
    %701 = vmatpush.msra.mxu0 0.0
    %702 = vmatpush.msra.mxu0 0.0
    %703 = vmatpush.msra.mxu0 0.0
    %704 = vmatpush.msra.mxu0 0.0
    %705 = vmatpush.msra.mxu0 0.0
    %706 = vmatpush.msra.mxu0 0.0
    %707 = vmatpush.msra.mxu0 0.0
    %708 = vmatpush.msra.mxu0 0.0
    %709 = vmatpush.msra.mxu0 0.0
    %710 = vmatpush.msra.mxu0 0.0
    %711 = vmatpush.msra.mxu0 0.0
    %712 = vmatpush.msra.mxu0 %v274
    %713 = vmatpush.msra.mxu0 %v272
    %714 = vmatpush.msra.mxu0 %v270
    %715 = vmatpush.msra.mxu0 %v268
    %716 = vmatmul.f32.gmra.mxu0 %v696
    %v717 = vpop.f32.mrf.mxu0
    %v718 = vadd.f32 0.0, %v717
    %719 = vmatmul.f32.gmra.mxu0 %v698
    %v720 = vpop.f32.mrf.mxu0
    %v721 = vadd.f32 0.0, %v720
    %722 = vdwg.mxu0
    %723 = vmatpush.msra.mxu0 0.0
    %724 = vmatpush.msra.mxu0 0.0
    %725 = vmatpush.msra.mxu0 0.0
    %726 = vmatpush.msra.mxu0 0.0
    %727 = vmatpush.msra.mxu0 0.0
    %728 = vmatpush.msra.mxu0 0.0
    %729 = vmatpush.msra.mxu0 0.0
    %730 = vmatpush.msra.mxu0 0.0
    %731 = vmatpush.msra.mxu0 0.0
    %732 = vmatpush.msra.mxu0 0.0
    %733 = vmatpush.msra.mxu0 0.0
    %734 = vmatpush.msra.mxu0 0.0
    %735 = vmatpush.msra.mxu0 %v275
    %736 = vmatpush.msra.mxu0 %v273
    %737 = vmatpush.msra.mxu0 %v271
    %738 = vmatpush.msra.mxu0 %v269
    %739 = vmatmul.f32.gmra.mxu0 %v696
    %v740 = vpop.f32.mrf.mxu0
    %v741 = vadd.f32 0.0, %v740
    %742 = vmatmul.f32.gmra.mxu0 %v698
    %v743 = vpop.f32.mrf.mxu0
    %v744 = vadd.f32 0.0, %v743
    %745 = vdwg.mxu0
    %v746 = vld [vmem:[#allocation2 + $0x30] sm:$0xff]
    %v747 = vld [vmem:[#allocation2 + $0x38] sm:$0xff]
    %v748 = vsel %vm113, %v718, %v741
    %v749 = vsel %vm114, %v721, %v744
    %v750 = vadd.f32 %v746, %v748
    %v751 = vadd.f32 %v747, %v749
    %v752 = vxor.u32 %v750, 2147483648
    %v753 = vxor.u32 %v751, 2147483648
    %v754 = vmul.f32 %v752, 1.442695
    %v755 = vpow.pop %v754
    %v756 = vmul.f32 %v753, 1.442695
    %v757 = vpow.pop %v756
    %v758 = vadd.f32 %v755, 1.0
    %v759 = vadd.f32 %v757, 1.0
    %v760 = vrcp.pop %v758
    %v761 = vmul.f32 %v758, %v760
    %v762 = vsub.f32 1.0, %v761
    %v763 = vmul.f32 %v760, %v762
    %v764 = vadd.f32 %v760, %v763
    %vm765 = vweird.f32 %v758
    %vm766 = vweird.f32 %v760
    %vm767 = vmor %vm765, %vm766
    %v768 = vsel %vm767, %v760, %v764
    %v769 = vand.u32 2147483647, %v758
    %vm770 = vcmp.eq.f32.partialorder %v769, 8.507059e+37
    %v771 = vand.u32 %v758, 2147483648
    %v772 = vor.u32 1.1754944e-38, %v771
    %v773 = vsel %vm770, %v772, %v768
    %v774 = vmul.f32 1.0, %v773
    %v775 = vrcp.pop %v759
    %v776 = vmul.f32 %v759, %v775
    %v777 = vsub.f32 1.0, %v776
    %v778 = vmul.f32 %v775, %v777
    %v779 = vadd.f32 %v775, %v778
    %vm780 = vweird.f32 %v759
    %vm781 = vweird.f32 %v775
    %vm782 = vmor %vm780, %vm781
    %v783 = vsel %vm782, %v775, %v779
    %v784 = vand.u32 2147483647, %v759
    %vm785 = vcmp.eq.f32.partialorder %v784, 8.507059e+37
    %v786 = vand.u32 %v759, 2147483648
    %v787 = vor.u32 1.1754944e-38, %v786
    %v788 = vsel %vm785, %v787, %v783
    %v789 = vmul.f32 1.0, %v788
    %v790 = vtanh.pop %v750
    %v791 = vtanh.pop %v751
    %v792 = vmul.f32 %v774, %v672
    %v793 = vmul.f32 %v789, %v673
    %796 = vrot.lane.b32.xlu0 %v790, 32
    %v797 = vpop.permute.xlu0 %796
    %798 = vrot.lane.b32.xlu0 %v791, 32
    %v799 = vpop.permute.xlu0 %798
    %v802 = vmul.f32 %v774, %v797
    %v803 = vmul.f32 %v789, %v799
    %806 = vrot.lane.b32.xlu0 %v802, 32
    %v807 = vpop.permute.xlu0 %806
    %808 = vrot.lane.b32.xlu0 %v803, 32
    %v809 = vpop.permute.xlu0 %808
    %v812 = vadd.f32 %v792, %v807
    %v813 = vadd.f32 %v793, %v809
    %v814 = vtanh.pop %v812
    %v815 = vtanh.pop %v813
    %818 = vrot.lane.b32.xlu0 %v814, 32
    %v819 = vpop.permute.xlu0 %818
    %820 = vrot.lane.b32.xlu0 %v815, 32
    %v821 = vpop.permute.xlu0 %820
    %v824 = vmul.f32 %v774, %v819
    %v825 = vmul.f32 %v789, %v821
    %827 = vrot.lane.b32.xlu0 %v824, 64
    %v828 = vpop.permute.xlu0 %827
    %830 = vst.msk [vmem:[#allocation4 + $0x18] sm:$0xff] %vm276, %v828
    %832 = vrot.lane.b32.xlu0 %v825, 64
    %v833 = vpop.permute.xlu0 %832
    %835 = vst.msk [vmem:[#allocation5 + $0x20] sm:$0xff] %vm276, %v833
    %v836 = vsel %vm276, %v828, 0
    %v838 = vsel %vm276, %v833, 0
    %840 = vmatpush.msra.mxu0 0.0
    %841 = vmatpush.msra.mxu0 0.0
    %842 = vmatpush.msra.mxu0 0.0
    %843 = vmatpush.msra.mxu0 0.0
    %844 = vmatpush.msra.mxu0 0.0
    %845 = vmatpush.msra.mxu0 0.0
    %846 = vmatpush.msra.mxu0 0.0
    %847 = vmatpush.msra.mxu0 0.0
    %848 = vmatpush.msra.mxu0 0.0
    %849 = vmatpush.msra.mxu0 0.0
    %850 = vmatpush.msra.mxu0 0.0
    %851 = vmatpush.msra.mxu0 0.0
    %852 = vmatpush.msra.mxu0 %v274
    %853 = vmatpush.msra.mxu0 %v272
    %854 = vmatpush.msra.mxu0 %v270
    %855 = vmatpush.msra.mxu0 %v268
    %856 = vmatmul.f32.gmra.mxu0 %v836
    %v857 = vpop.f32.mrf.mxu0
    %v858 = vadd.f32 0.0, %v857
    %859 = vmatmul.f32.gmra.mxu0 %v838
    %v860 = vpop.f32.mrf.mxu0
    %v861 = vadd.f32 0.0, %v860
    %862 = vdwg.mxu0
    %863 = vmatpush.msra.mxu0 0.0
    %864 = vmatpush.msra.mxu0 0.0
    %865 = vmatpush.msra.mxu0 0.0
    %866 = vmatpush.msra.mxu0 0.0
    %867 = vmatpush.msra.mxu0 0.0
    %868 = vmatpush.msra.mxu0 0.0
    %869 = vmatpush.msra.mxu0 0.0
    %870 = vmatpush.msra.mxu0 0.0
    %871 = vmatpush.msra.mxu0 0.0
    %872 = vmatpush.msra.mxu0 0.0
    %873 = vmatpush.msra.mxu0 0.0
    %874 = vmatpush.msra.mxu0 0.0
    %875 = vmatpush.msra.mxu0 %v275
    %876 = vmatpush.msra.mxu0 %v273
    %877 = vmatpush.msra.mxu0 %v271
    %878 = vmatpush.msra.mxu0 %v269
    %879 = vmatmul.f32.gmra.mxu0 %v836
    %v880 = vpop.f32.mrf.mxu0
    %v881 = vadd.f32 0.0, %v880
    %882 = vmatmul.f32.gmra.mxu0 %v838
    %v883 = vpop.f32.mrf.mxu0
    %v884 = vadd.f32 0.0, %v883
    %885 = vdwg.mxu0
    %v886 = vld [vmem:[#allocation2 + $0x40] sm:$0xff]
    %v887 = vld [vmem:[#allocation2 + $0x48] sm:$0xff]
    %v888 = vsel %vm113, %v858, %v881
    %v889 = vsel %vm114, %v861, %v884
    %v890 = vadd.f32 %v886, %v888
    %v891 = vadd.f32 %v887, %v889
    %v892 = vxor.u32 %v890, 2147483648
    %v893 = vxor.u32 %v891, 2147483648
    %v894 = vmul.f32 %v892, 1.442695
    %v895 = vpow.pop %v894
    %v896 = vmul.f32 %v893, 1.442695
    %v897 = vpow.pop %v896
    %v898 = vadd.f32 %v895, 1.0
    %v899 = vadd.f32 %v897, 1.0
    %v900 = vrcp.pop %v898
    %v901 = vmul.f32 %v898, %v900
    %v902 = vsub.f32 1.0, %v901
    %v903 = vmul.f32 %v900, %v902
    %v904 = vadd.f32 %v900, %v903
    %vm905 = vweird.f32 %v898
    %vm906 = vweird.f32 %v900
    %vm907 = vmor %vm905, %vm906
    %v908 = vsel %vm907, %v900, %v904
    %v909 = vand.u32 2147483647, %v898
    %vm910 = vcmp.eq.f32.partialorder %v909, 8.507059e+37
    %v911 = vand.u32 %v898, 2147483648
    %v912 = vor.u32 1.1754944e-38, %v911
    %v913 = vsel %vm910, %v912, %v908
    %v914 = vmul.f32 1.0, %v913
    %v915 = vrcp.pop %v899
    %v916 = vmul.f32 %v899, %v915
    %v917 = vsub.f32 1.0, %v916
    %v918 = vmul.f32 %v915, %v917
    %v919 = vadd.f32 %v915, %v918
    %vm920 = vweird.f32 %v899
    %vm921 = vweird.f32 %v915
    %vm922 = vmor %vm920, %vm921
    %v923 = vsel %vm922, %v915, %v919
    %v924 = vand.u32 2147483647, %v899
    %vm925 = vcmp.eq.f32.partialorder %v924, 8.507059e+37
    %v926 = vand.u32 %v899, 2147483648
    %v927 = vor.u32 1.1754944e-38, %v926
    %v928 = vsel %vm925, %v927, %v923
    %v929 = vmul.f32 1.0, %v928
    %v930 = vtanh.pop %v890
    %v931 = vtanh.pop %v891
    %v932 = vmul.f32 %v914, %v812
    %v933 = vmul.f32 %v929, %v813
    %936 = vrot.lane.b32.xlu0 %v930, 32
    %v937 = vpop.permute.xlu0 %936
    %938 = vrot.lane.b32.xlu0 %v931, 32
    %v939 = vpop.permute.xlu0 %938
    %v942 = vmul.f32 %v914, %v937
    %v943 = vmul.f32 %v929, %v939
    %946 = vrot.lane.b32.xlu0 %v942, 32
    %v947 = vpop.permute.xlu0 %946
    %948 = vrot.lane.b32.xlu0 %v943, 32
    %v949 = vpop.permute.xlu0 %948
    %v952 = vadd.f32 %v932, %v947
    %v953 = vadd.f32 %v933, %v949
    %v954 = vtanh.pop %v952
    %v955 = vtanh.pop %v953
    %958 = vrot.lane.b32.xlu0 %v954, 32
    %v959 = vpop.permute.xlu0 %958
    %960 = vrot.lane.b32.xlu0 %v955, 32
    %v961 = vpop.permute.xlu0 %960
    %v964 = vmul.f32 %v914, %v959
    %v965 = vmul.f32 %v929, %v961
    %967 = vrot.lane.b32.xlu0 %v964, 64
    %v968 = vpop.permute.xlu0 %967
    %970 = vst.msk [vmem:[#allocation4 + $0x20] sm:$0xff] %vm276, %v968
    %972 = vrot.lane.b32.xlu0 %v965, 64
    %v973 = vpop.permute.xlu0 %972
    %975 = vst.msk [vmem:[#allocation5 + $0x18] sm:$0xff] %vm276, %v973
    %v976 = vsel %vm276, %v968, 0
    %v978 = vsel %vm276, %v973, 0
    %980 = vmatpush.msra.mxu0 0.0
    %981 = vmatpush.msra.mxu0 0.0
    %982 = vmatpush.msra.mxu0 0.0
    %983 = vmatpush.msra.mxu0 0.0
    %984 = vmatpush.msra.mxu0 0.0
    %985 = vmatpush.msra.mxu0 0.0
    %986 = vmatpush.msra.mxu0 0.0
    %987 = vmatpush.msra.mxu0 0.0
    %988 = vmatpush.msra.mxu0 0.0
    %989 = vmatpush.msra.mxu0 0.0
    %990 = vmatpush.msra.mxu0 0.0
    %991 = vmatpush.msra.mxu0 0.0
    %992 = vmatpush.msra.mxu0 %v274
    %993 = vmatpush.msra.mxu0 %v272
    %994 = vmatpush.msra.mxu0 %v270
    %995 = vmatpush.msra.mxu0 %v268
    %996 = vmatmul.f32.gmra.mxu0 %v976
    %v997 = vpop.f32.mrf.mxu0
    %v998 = vadd.f32 0.0, %v997
    %999 = vmatmul.f32.gmra.mxu0 %v978
    %v1000 = vpop.f32.mrf.mxu0
    %v1001 = vadd.f32 0.0, %v1000
    %1002 = vdwg.mxu0
    %1003 = vmatpush.msra.mxu0 0.0
    %1004 = vmatpush.msra.mxu0 0.0
    %1005 = vmatpush.msra.mxu0 0.0
    %1006 = vmatpush.msra.mxu0 0.0
    %1007 = vmatpush.msra.mxu0 0.0
    %1008 = vmatpush.msra.mxu0 0.0
    %1009 = vmatpush.msra.mxu0 0.0
    %1010 = vmatpush.msra.mxu0 0.0
    %1011 = vmatpush.msra.mxu0 0.0
    %1012 = vmatpush.msra.mxu0 0.0
    %1013 = vmatpush.msra.mxu0 0.0
    %1014 = vmatpush.msra.mxu0 0.0
    %1015 = vmatpush.msra.mxu0 %v275
    %1016 = vmatpush.msra.mxu0 %v273
    %1017 = vmatpush.msra.mxu0 %v271
    %1018 = vmatpush.msra.mxu0 %v269
    %1019 = vmatmul.f32.gmra.mxu0 %v976
    %v1020 = vpop.f32.mrf.mxu0
    %v1021 = vadd.f32 0.0, %v1020
    %1022 = vmatmul.f32.gmra.mxu0 %v978
    %v1023 = vpop.f32.mrf.mxu0
    %v1024 = vadd.f32 0.0, %v1023
    %1025 = vdwg.mxu0
    %v1026 = vld [vmem:[#allocation2 + $0x50] sm:$0xff]
    %v1027 = vld [vmem:[#allocation2 + $0x58] sm:$0xff]
    %v1028 = vsel %vm113, %v998, %v1021
    %v1029 = vsel %vm114, %v1001, %v1024
    %v1030 = vadd.f32 %v1026, %v1028
    %v1031 = vadd.f32 %v1027, %v1029
    %v1032 = vxor.u32 %v1030, 2147483648
    %v1033 = vxor.u32 %v1031, 2147483648
    %v1034 = vmul.f32 %v1032, 1.442695
    %v1035 = vpow.pop %v1034
    %v1036 = vmul.f32 %v1033, 1.442695
    %v1037 = vpow.pop %v1036
    %v1038 = vadd.f32 %v1035, 1.0
    %v1039 = vadd.f32 %v1037, 1.0
    %v1040 = vrcp.pop %v1038
    %v1041 = vmul.f32 %v1038, %v1040
    %v1042 = vsub.f32 1.0, %v1041
    %v1043 = vmul.f32 %v1040, %v1042
    %v1044 = vadd.f32 %v1040, %v1043
    %vm1045 = vweird.f32 %v1038
    %vm1046 = vweird.f32 %v1040
    %vm1047 = vmor %vm1045, %vm1046
    %v1048 = vsel %vm1047, %v1040, %v1044
    %v1049 = vand.u32 2147483647, %v1038
    %vm1050 = vcmp.eq.f32.partialorder %v1049, 8.507059e+37
    %v1051 = vand.u32 %v1038, 2147483648
    %v1052 = vor.u32 1.1754944e-38, %v1051
    %v1053 = vsel %vm1050, %v1052, %v1048
    %v1054 = vmul.f32 1.0, %v1053
    %v1055 = vrcp.pop %v1039
    %v1056 = vmul.f32 %v1039, %v1055
    %v1057 = vsub.f32 1.0, %v1056
    %v1058 = vmul.f32 %v1055, %v1057
    %v1059 = vadd.f32 %v1055, %v1058
    %vm1060 = vweird.f32 %v1039
    %vm1061 = vweird.f32 %v1055
    %vm1062 = vmor %vm1060, %vm1061
    %v1063 = vsel %vm1062, %v1055, %v1059
    %v1064 = vand.u32 2147483647, %v1039
    %vm1065 = vcmp.eq.f32.partialorder %v1064, 8.507059e+37
    %v1066 = vand.u32 %v1039, 2147483648
    %v1067 = vor.u32 1.1754944e-38, %v1066
    %v1068 = vsel %vm1065, %v1067, %v1063
    %v1069 = vmul.f32 1.0, %v1068
    %v1070 = vtanh.pop %v1030
    %v1071 = vtanh.pop %v1031
    %v1072 = vmul.f32 %v1054, %v952
    %v1073 = vmul.f32 %v1069, %v953
    %1076 = vrot.lane.b32.xlu0 %v1070, 32
    %v1077 = vpop.permute.xlu0 %1076
    %1078 = vrot.lane.b32.xlu0 %v1071, 32
    %v1079 = vpop.permute.xlu0 %1078
    %v1082 = vmul.f32 %v1054, %v1077
    %v1083 = vmul.f32 %v1069, %v1079
    %1086 = vrot.lane.b32.xlu0 %v1082, 32
    %v1087 = vpop.permute.xlu0 %1086
    %1088 = vrot.lane.b32.xlu0 %v1083, 32
    %v1089 = vpop.permute.xlu0 %1088
    %v1092 = vadd.f32 %v1072, %v1087
    %v1093 = vadd.f32 %v1073, %v1089
    %v1094 = vtanh.pop %v1092
    %v1095 = vtanh.pop %v1093
    %1098 = vrot.lane.b32.xlu0 %v1094, 32
    %v1099 = vpop.permute.xlu0 %1098
    %1100 = vrot.lane.b32.xlu0 %v1095, 32
    %v1101 = vpop.permute.xlu0 %1100
    %v1104 = vmul.f32 %v1054, %v1099
    %v1105 = vmul.f32 %v1069, %v1101
    %1107 = vrot.lane.b32.xlu0 %v1104, 64
    %v1108 = vpop.permute.xlu0 %1107
    %1110 = vst.msk [vmem:[#allocation4 + $0x28] sm:$0xff] %vm276, %v1108
    %1112 = vrot.lane.b32.xlu0 %v1105, 64
    %v1113 = vpop.permute.xlu0 %1112
    %1115 = vst.msk [vmem:[#allocation5 + $0x10] sm:$0xff] %vm276, %v1113
    %v1116 = vsel %vm276, %v1108, 0
    %v1118 = vsel %vm276, %v1113, 0
    %1120 = vmatpush.msra.mxu0 0.0
    %1121 = vmatpush.msra.mxu0 0.0
    %1122 = vmatpush.msra.mxu0 0.0
    %1123 = vmatpush.msra.mxu0 0.0
    %1124 = vmatpush.msra.mxu0 0.0
    %1125 = vmatpush.msra.mxu0 0.0
    %1126 = vmatpush.msra.mxu0 0.0
    %1127 = vmatpush.msra.mxu0 0.0
    %1128 = vmatpush.msra.mxu0 0.0
    %1129 = vmatpush.msra.mxu0 0.0
    %1130 = vmatpush.msra.mxu0 0.0
    %1131 = vmatpush.msra.mxu0 0.0
    %1132 = vmatpush.msra.mxu0 %v274
    %1133 = vmatpush.msra.mxu0 %v272
    %1134 = vmatpush.msra.mxu0 %v270
    %1135 = vmatpush.msra.mxu0 %v268
    %1136 = vmatmul.f32.gmra.mxu0 %v1116
    %v1137 = vpop.f32.mrf.mxu0
    %v1138 = vadd.f32 0.0, %v1137
    %1139 = vmatmul.f32.gmra.mxu0 %v1118
    %v1140 = vpop.f32.mrf.mxu0
    %v1141 = vadd.f32 0.0, %v1140
    %1142 = vdwg.mxu0
    %1143 = vmatpush.msra.mxu0 0.0
    %1144 = vmatpush.msra.mxu0 0.0
    %1145 = vmatpush.msra.mxu0 0.0
    %1146 = vmatpush.msra.mxu0 0.0
    %1147 = vmatpush.msra.mxu0 0.0
    %1148 = vmatpush.msra.mxu0 0.0
    %1149 = vmatpush.msra.mxu0 0.0
    %1150 = vmatpush.msra.mxu0 0.0
    %1151 = vmatpush.msra.mxu0 0.0
    %1152 = vmatpush.msra.mxu0 0.0
    %1153 = vmatpush.msra.mxu0 0.0
    %1154 = vmatpush.msra.mxu0 0.0
    %1155 = vmatpush.msra.mxu0 %v275
    %1156 = vmatpush.msra.mxu0 %v273
    %1157 = vmatpush.msra.mxu0 %v271
    %1158 = vmatpush.msra.mxu0 %v269
    %1159 = vmatmul.f32.gmra.mxu0 %v1116
    %v1160 = vpop.f32.mrf.mxu0
    %v1161 = vadd.f32 0.0, %v1160
    %1162 = vmatmul.f32.gmra.mxu0 %v1118
    %v1163 = vpop.f32.mrf.mxu0
    %v1164 = vadd.f32 0.0, %v1163
    %1165 = vdwg.mxu0
    %v1166 = vld [vmem:[#allocation2 + $0x60] sm:$0xff]
    %v1167 = vld [vmem:[#allocation2 + $0x68] sm:$0xff]
    %v1168 = vsel %vm113, %v1138, %v1161
    %v1169 = vsel %vm114, %v1141, %v1164
    %v1170 = vadd.f32 %v1166, %v1168
    %v1171 = vadd.f32 %v1167, %v1169
    %v1172 = vxor.u32 %v1170, 2147483648
    %v1173 = vxor.u32 %v1171, 2147483648
    %v1174 = vmul.f32 %v1172, 1.442695
    %v1175 = vpow.pop %v1174
    %v1176 = vmul.f32 %v1173, 1.442695
    %v1177 = vpow.pop %v1176
    %v1178 = vadd.f32 %v1175, 1.0
    %v1179 = vadd.f32 %v1177, 1.0
    %v1180 = vrcp.pop %v1178
    %v1181 = vmul.f32 %v1178, %v1180
    %v1182 = vsub.f32 1.0, %v1181
    %v1183 = vmul.f32 %v1180, %v1182
    %v1184 = vadd.f32 %v1180, %v1183
    %vm1185 = vweird.f32 %v1178
    %vm1186 = vweird.f32 %v1180
    %vm1187 = vmor %vm1185, %vm1186
    %v1188 = vsel %vm1187, %v1180, %v1184
    %v1189 = vand.u32 2147483647, %v1178
    %vm1190 = vcmp.eq.f32.partialorder %v1189, 8.507059e+37
    %v1191 = vand.u32 %v1178, 2147483648
    %v1192 = vor.u32 1.1754944e-38, %v1191
    %v1193 = vsel %vm1190, %v1192, %v1188
    %v1194 = vmul.f32 1.0, %v1193
    %v1195 = vrcp.pop %v1179
    %v1196 = vmul.f32 %v1179, %v1195
    %v1197 = vsub.f32 1.0, %v1196
    %v1198 = vmul.f32 %v1195, %v1197
    %v1199 = vadd.f32 %v1195, %v1198
    %vm1200 = vweird.f32 %v1179
    %vm1201 = vweird.f32 %v1195
    %vm1202 = vmor %vm1200, %vm1201
    %v1203 = vsel %vm1202, %v1195, %v1199
    %v1204 = vand.u32 2147483647, %v1179
    %vm1205 = vcmp.eq.f32.partialorder %v1204, 8.507059e+37
    %v1206 = vand.u32 %v1179, 2147483648
    %v1207 = vor.u32 1.1754944e-38, %v1206
    %v1208 = vsel %vm1205, %v1207, %v1203
    %v1209 = vmul.f32 1.0, %v1208
    %v1210 = vtanh.pop %v1170
    %v1211 = vtanh.pop %v1171
    %v1212 = vmul.f32 %v1194, %v1092
    %v1213 = vmul.f32 %v1209, %v1093
    %1216 = vrot.lane.b32.xlu0 %v1210, 32
    %v1217 = vpop.permute.xlu0 %1216
    %1218 = vrot.lane.b32.xlu0 %v1211, 32
    %v1219 = vpop.permute.xlu0 %1218
    %v1222 = vmul.f32 %v1194, %v1217
    %v1223 = vmul.f32 %v1209, %v1219
    %1226 = vrot.lane.b32.xlu0 %v1222, 32
    %v1227 = vpop.permute.xlu0 %1226
    %1228 = vrot.lane.b32.xlu0 %v1223, 32
    %v1229 = vpop.permute.xlu0 %1228
    %v1232 = vadd.f32 %v1212, %v1227
    %v1233 = vadd.f32 %v1213, %v1229
    %v1234 = vtanh.pop %v1232
    %v1235 = vtanh.pop %v1233
    %1238 = vrot.lane.b32.xlu0 %v1234, 32
    %v1239 = vpop.permute.xlu0 %1238
    %1240 = vrot.lane.b32.xlu0 %v1235, 32
    %v1241 = vpop.permute.xlu0 %1240
    %v1244 = vmul.f32 %v1194, %v1239
    %v1245 = vmul.f32 %v1209, %v1241
    %1247 = vrot.lane.b32.xlu0 %v1244, 64
    %v1248 = vpop.permute.xlu0 %1247
    %1250 = vst.msk [vmem:[#allocation4 + $0x30] sm:$0xff] %vm276, %v1248
    %1252 = vrot.lane.b32.xlu0 %v1245, 64
    %v1253 = vpop.permute.xlu0 %1252
    %1255 = vst.msk [vmem:[#allocation5 + $0x8] sm:$0xff] %vm276, %v1253
    %v1256 = vsel %vm276, %v1248, 0
    %v1258 = vsel %vm276, %v1253, 0
    %1260 = vmatpush.msra.mxu0 0.0
    %1261 = vmatpush.msra.mxu0 0.0
    %1262 = vmatpush.msra.mxu0 0.0
    %1263 = vmatpush.msra.mxu0 0.0
    %1264 = vmatpush.msra.mxu0 0.0
    %1265 = vmatpush.msra.mxu0 0.0
    %1266 = vmatpush.msra.mxu0 0.0
    %1267 = vmatpush.msra.mxu0 0.0
    %1268 = vmatpush.msra.mxu0 0.0
    %1269 = vmatpush.msra.mxu0 0.0
    %1270 = vmatpush.msra.mxu0 0.0
    %1271 = vmatpush.msra.mxu0 0.0
    %1272 = vmatpush.msra.mxu0 %v274
    %1273 = vmatpush.msra.mxu0 %v272
    %1274 = vmatpush.msra.mxu0 %v270
    %1275 = vmatpush.msra.mxu0 %v268
    %1276 = vmatmul.f32.gmra.mxu0 %v1256
    %v1277 = vpop.f32.mrf.mxu0
    %v1278 = vadd.f32 0.0, %v1277
    %1279 = vmatmul.f32.gmra.mxu0 %v1258
    %v1280 = vpop.f32.mrf.mxu0
    %v1281 = vadd.f32 0.0, %v1280
    %1282 = vdwg.mxu0
    %1283 = vmatpush.msra.mxu0 0.0
    %1284 = vmatpush.msra.mxu0 0.0
    %1285 = vmatpush.msra.mxu0 0.0
    %1286 = vmatpush.msra.mxu0 0.0
    %1287 = vmatpush.msra.mxu0 0.0
    %1288 = vmatpush.msra.mxu0 0.0
    %1289 = vmatpush.msra.mxu0 0.0
    %1290 = vmatpush.msra.mxu0 0.0
    %1291 = vmatpush.msra.mxu0 0.0
    %1292 = vmatpush.msra.mxu0 0.0
    %1293 = vmatpush.msra.mxu0 0.0
    %1294 = vmatpush.msra.mxu0 0.0
    %1295 = vmatpush.msra.mxu0 %v275
    %1296 = vmatpush.msra.mxu0 %v273
    %1297 = vmatpush.msra.mxu0 %v271
    %1298 = vmatpush.msra.mxu0 %v269
    %1299 = vmatmul.f32.gmra.mxu0 %v1256
    %v1300 = vpop.f32.mrf.mxu0
    %v1301 = vadd.f32 0.0, %v1300
    %1302 = vmatmul.f32.gmra.mxu0 %v1258
    %v1303 = vpop.f32.mrf.mxu0
    %v1304 = vadd.f32 0.0, %v1303
    %1305 = vdwg.mxu0
    %v1306 = vld [vmem:[#allocation2 + $0x70] sm:$0xff]
    %v1307 = vld [vmem:[#allocation2 + $0x78] sm:$0xff]
    %v1308 = vsel %vm113, %v1278, %v1301
    %v1309 = vsel %vm114, %v1281, %v1304
    %v1310 = vadd.f32 %v1306, %v1308
    %v1311 = vadd.f32 %v1307, %v1309
    %v1312 = vxor.u32 %v1310, 2147483648
    %v1313 = vxor.u32 %v1311, 2147483648
    %v1314 = vmul.f32 %v1312, 1.442695
    %v1315 = vpow.pop %v1314
    %v1316 = vmul.f32 %v1313, 1.442695
    %v1317 = vpow.pop %v1316
    %v1318 = vadd.f32 %v1315, 1.0
    %v1319 = vadd.f32 %v1317, 1.0
    %v1320 = vrcp.pop %v1318
    %v1321 = vmul.f32 %v1318, %v1320
    %v1322 = vsub.f32 1.0, %v1321
    %v1323 = vmul.f32 %v1320, %v1322
    %v1324 = vadd.f32 %v1320, %v1323
    %vm1325 = vweird.f32 %v1318
    %vm1326 = vweird.f32 %v1320
    %vm1327 = vmor %vm1325, %vm1326
    %v1328 = vsel %vm1327, %v1320, %v1324
    %v1329 = vand.u32 2147483647, %v1318
    %vm1330 = vcmp.eq.f32.partialorder %v1329, 8.507059e+37
    %v1331 = vand.u32 %v1318, 2147483648
    %v1332 = vor.u32 1.1754944e-38, %v1331
    %v1333 = vsel %vm1330, %v1332, %v1328
    %v1334 = vmul.f32 1.0, %v1333
    %v1335 = vrcp.pop %v1319
    %v1336 = vmul.f32 %v1319, %v1335
    %v1337 = vsub.f32 1.0, %v1336
    %v1338 = vmul.f32 %v1335, %v1337
    %v1339 = vadd.f32 %v1335, %v1338
    %vm1340 = vweird.f32 %v1319
    %vm1341 = vweird.f32 %v1335
    %vm1342 = vmor %vm1340, %vm1341
    %v1343 = vsel %vm1342, %v1335, %v1339
    %v1344 = vand.u32 2147483647, %v1319
    %vm1345 = vcmp.eq.f32.partialorder %v1344, 8.507059e+37
    %v1346 = vand.u32 %v1319, 2147483648
    %v1347 = vor.u32 1.1754944e-38, %v1346
    %v1348 = vsel %vm1345, %v1347, %v1343
    %v1349 = vmul.f32 1.0, %v1348
    %v1350 = vtanh.pop %v1310
    %v1351 = vtanh.pop %v1311
    %v1352 = vmul.f32 %v1334, %v1232
    %v1353 = vmul.f32 %v1349, %v1233
    %1356 = vrot.lane.b32.xlu0 %v1350, 32
    %v1357 = vpop.permute.xlu0 %1356
    %1358 = vrot.lane.b32.xlu0 %v1351, 32
    %v1359 = vpop.permute.xlu0 %1358
    %v1362 = vmul.f32 %v1334, %v1357
    %v1363 = vmul.f32 %v1349, %v1359
    %1366 = vrot.lane.b32.xlu0 %v1362, 32
    %v1367 = vpop.permute.xlu0 %1366
    %1368 = vrot.lane.b32.xlu0 %v1363, 32
    %v1369 = vpop.permute.xlu0 %1368
    %v1372 = vadd.f32 %v1352, %v1367
    %v1373 = vadd.f32 %v1353, %v1369
    %v1374 = vtanh.pop %v1372
    %v1375 = vtanh.pop %v1373
    %1378 = vrot.lane.b32.xlu0 %v1374, 32
    %v1379 = vpop.permute.xlu0 %1378
    %1380 = vrot.lane.b32.xlu0 %v1375, 32
    %v1381 = vpop.permute.xlu0 %1380
    %v1384 = vmul.f32 %v1334, %v1379
    %v1385 = vmul.f32 %v1349, %v1381
    %1387 = vrot.lane.b32.xlu0 %v1384, 64
    %v1388 = vpop.permute.xlu0 %1387
    %1390 = vst.msk [vmem:[#allocation4 + $0x38] sm:$0xff] %vm276, %v1388
    %1392 = vrot.lane.b32.xlu0 %v1385, 64
    %v1393 = vpop.permute.xlu0 %1392
    %1395 = vst.msk [vmem:[#allocation5] sm:$0xff] %vm276, %v1393
    %v1396 = vld [vmem:[#allocation4] sm:$0xff]
    %v1397 = vld [vmem:[#allocation4 + $0x8] sm:$0xff]
    %v1398 = vld [vmem:[#allocation4 + $0x10] sm:$0xff]
    %v1399 = vld [vmem:[#allocation4 + $0x18] sm:$0xff]
    %v1400 = vld [vmem:[#allocation4 + $0x20] sm:$0xff]
    %v1401 = vld [vmem:[#allocation4 + $0x28] sm:$0xff]
    %v1402 = vld [vmem:[#allocation4 + $0x30] sm:$0xff]
    %v1403 = vld [vmem:[#allocation4 + $0x38] sm:$0xff]
    %v1404 = vld [vmem:[#allocation11] sm:$0xff]
    %v1405 = vld [vmem:[#allocation11 + $0x8] sm:$0xff]
    %v1406 = vld [vmem:[#allocation11 + $0x10] sm:$0xff]
    %v1407 = vld [vmem:[#allocation11 + $0x18] sm:$0xff]
    %v1408 = vld [vmem:[#allocation11 + $0x20] sm:$0xff]
    %v1409 = vld [vmem:[#allocation11 + $0x28] sm:$0xff]
    %v1410 = vld [vmem:[#allocation11 + $0x30] sm:$0xff]
    %v1411 = vld [vmem:[#allocation11 + $0x38] sm:$0xff]
    %v1412 = vld [vmem:[#allocation5] sm:$0xff]
    %v1413 = vld [vmem:[#allocation5 + $0x8] sm:$0xff]
    %v1414 = vld [vmem:[#allocation5 + $0x10] sm:$0xff]
    %v1415 = vld [vmem:[#allocation5 + $0x18] sm:$0xff]
    %v1416 = vld [vmem:[#allocation5 + $0x20] sm:$0xff]
    %v1417 = vld [vmem:[#allocation5 + $0x28] sm:$0xff]
    %v1418 = vld [vmem:[#allocation5 + $0x30] sm:$0xff]
    %v1419 = vld [vmem:[#allocation5 + $0x38] sm:$0xff]
    %v1420 = vld [vmem:[#allocation11 + $0x40] sm:$0xff]
    %v1421 = vld [vmem:[#allocation11 + $0x48] sm:$0xff]
    %v1422 = vld [vmem:[#allocation11 + $0x50] sm:$0xff]
    %v1423 = vld [vmem:[#allocation11 + $0x58] sm:$0xff]
    %v1424 = vld [vmem:[#allocation11 + $0x60] sm:$0xff]
    %v1425 = vld [vmem:[#allocation11 + $0x68] sm:$0xff]
    %v1426 = vld [vmem:[#allocation11 + $0x70] sm:$0xff]
    %v1427 = vld [vmem:[#allocation11 + $0x78] sm:$0xff]
    %v1429 = vsel %vm276, %v1412, 0
    %v1432 = vsel %vm276, %v1413, 0
    %v1435 = vsel %vm276, %v1414, 0
    %v1438 = vsel %vm276, %v1415, 0
    %v1441 = vsel %vm276, %v1416, 0
    %v1444 = vsel %vm276, %v1417, 0
    %v1447 = vsel %vm276, %v1418, 0
    %v1450 = vsel %vm276, %v1419, 0
    %1452 = vmatpush.msra.mxu0 0.0
    %1453 = vmatpush.msra.mxu0 0.0
    %1454 = vmatpush.msra.mxu0 0.0
    %1455 = vmatpush.msra.mxu0 0.0
    %1456 = vmatpush.msra.mxu0 0.0
    %1457 = vmatpush.msra.mxu0 0.0
    %1458 = vmatpush.msra.mxu0 0.0
    %1459 = vmatpush.msra.mxu0 0.0
    %1460 = vmatpush.msra.mxu0 0.0
    %1461 = vmatpush.msra.mxu0 0.0
    %1462 = vmatpush.msra.mxu0 0.0
    %1463 = vmatpush.msra.mxu0 0.0
    %1464 = vmatpush.msra.mxu0 %v1426
    %1465 = vmatpush.msra.mxu0 %v1424
    %1466 = vmatpush.msra.mxu0 %v1422
    %1467 = vmatpush.msra.mxu0 %v1420
    %1468 = vmatmul.f32.gmra.mxu0 %v1429
    %v1469 = vpop.f32.mrf.mxu0
    %v1470 = vadd.f32 0.0, %v1469
    %1471 = vmatmul.f32.gmra.mxu0 %v1432
    %v1472 = vpop.f32.mrf.mxu0
    %v1473 = vadd.f32 0.0, %v1472
    %1474 = vmatmul.f32.gmra.mxu0 %v1435
    %v1475 = vpop.f32.mrf.mxu0
    %v1476 = vadd.f32 0.0, %v1475
    %1477 = vmatmul.f32.gmra.mxu0 %v1438
    %v1478 = vpop.f32.mrf.mxu0
    %v1479 = vadd.f32 0.0, %v1478
    %1480 = vmatmul.f32.gmra.mxu0 %v1441
    %v1481 = vpop.f32.mrf.mxu0
    %v1482 = vadd.f32 0.0, %v1481
    %1483 = vmatmul.f32.gmra.mxu0 %v1444
    %v1484 = vpop.f32.mrf.mxu0
    %v1485 = vadd.f32 0.0, %v1484
    %1486 = vmatmul.f32.gmra.mxu0 %v1447
    %v1487 = vpop.f32.mrf.mxu0
    %v1488 = vadd.f32 0.0, %v1487
    %1489 = vmatmul.f32.gmra.mxu0 %v1450
    %v1490 = vpop.f32.mrf.mxu0
    %v1491 = vadd.f32 0.0, %v1490
    %1492 = vdwg.mxu0
    %1493 = vmatpush.msra.mxu0 0.0
    %1494 = vmatpush.msra.mxu0 0.0
    %1495 = vmatpush.msra.mxu0 0.0
    %1496 = vmatpush.msra.mxu0 0.0
    %1497 = vmatpush.msra.mxu0 0.0
    %1498 = vmatpush.msra.mxu0 0.0
    %1499 = vmatpush.msra.mxu0 0.0
    %1500 = vmatpush.msra.mxu0 0.0
    %1501 = vmatpush.msra.mxu0 0.0
    %1502 = vmatpush.msra.mxu0 0.0
    %1503 = vmatpush.msra.mxu0 0.0
    %1504 = vmatpush.msra.mxu0 0.0
    %1505 = vmatpush.msra.mxu0 %v1427
    %1506 = vmatpush.msra.mxu0 %v1425
    %1507 = vmatpush.msra.mxu0 %v1423
    %1508 = vmatpush.msra.mxu0 %v1421
    %1509 = vmatmul.f32.gmra.mxu0 %v1429
    %v1510 = vpop.f32.mrf.mxu0
    %v1511 = vadd.f32 0.0, %v1510
    %1512 = vmatmul.f32.gmra.mxu0 %v1432
    %v1513 = vpop.f32.mrf.mxu0
    %v1514 = vadd.f32 0.0, %v1513
    %1515 = vmatmul.f32.gmra.mxu0 %v1435
    %v1516 = vpop.f32.mrf.mxu0
    %v1517 = vadd.f32 0.0, %v1516
    %1518 = vmatmul.f32.gmra.mxu0 %v1438
    %v1519 = vpop.f32.mrf.mxu0
    %v1520 = vadd.f32 0.0, %v1519
    %1521 = vmatmul.f32.gmra.mxu0 %v1441
    %v1522 = vpop.f32.mrf.mxu0
    %v1523 = vadd.f32 0.0, %v1522
    %1524 = vmatmul.f32.gmra.mxu0 %v1444
    %v1525 = vpop.f32.mrf.mxu0
    %v1526 = vadd.f32 0.0, %v1525
    %1527 = vmatmul.f32.gmra.mxu0 %v1447
    %v1528 = vpop.f32.mrf.mxu0
    %v1529 = vadd.f32 0.0, %v1528
    %1530 = vmatmul.f32.gmra.mxu0 %v1450
    %v1531 = vpop.f32.mrf.mxu0
    %v1532 = vadd.f32 0.0, %v1531
    %1533 = vdwg.mxu0
    %v1535 = vsel %vm276, %v1396, 0
    %v1538 = vsel %vm276, %v1397, 0
    %v1541 = vsel %vm276, %v1398, 0
    %v1544 = vsel %vm276, %v1399, 0
    %v1547 = vsel %vm276, %v1400, 0
    %v1550 = vsel %vm276, %v1401, 0
    %v1553 = vsel %vm276, %v1402, 0
    %v1556 = vsel %vm276, %v1403, 0
    %1558 = vmatpush.msra.mxu0 0.0
    %1559 = vmatpush.msra.mxu0 0.0
    %1560 = vmatpush.msra.mxu0 0.0
    %1561 = vmatpush.msra.mxu0 0.0
    %1562 = vmatpush.msra.mxu0 0.0
    %1563 = vmatpush.msra.mxu0 0.0
    %1564 = vmatpush.msra.mxu0 0.0
    %1565 = vmatpush.msra.mxu0 0.0
    %1566 = vmatpush.msra.mxu0 0.0
    %1567 = vmatpush.msra.mxu0 0.0
    %1568 = vmatpush.msra.mxu0 0.0
    %1569 = vmatpush.msra.mxu0 0.0
    %1570 = vmatpush.msra.mxu0 %v1410
    %1571 = vmatpush.msra.mxu0 %v1408
    %1572 = vmatpush.msra.mxu0 %v1406
    %1573 = vmatpush.msra.mxu0 %v1404
    %1574 = vmatmul.f32.gmra.mxu0 %v1535
    %v1575 = vpop.f32.mrf.mxu0
    %v1576 = vadd.f32 %v1470, %v1575
    %1577 = vmatmul.f32.gmra.mxu0 %v1538
    %v1578 = vpop.f32.mrf.mxu0
    %v1579 = vadd.f32 %v1473, %v1578
    %1580 = vmatmul.f32.gmra.mxu0 %v1541
    %v1581 = vpop.f32.mrf.mxu0
    %v1582 = vadd.f32 %v1476, %v1581
    %1583 = vmatmul.f32.gmra.mxu0 %v1544
    %v1584 = vpop.f32.mrf.mxu0
    %v1585 = vadd.f32 %v1479, %v1584
    %1586 = vmatmul.f32.gmra.mxu0 %v1547
    %v1587 = vpop.f32.mrf.mxu0
    %v1588 = vadd.f32 %v1482, %v1587
    %1589 = vmatmul.f32.gmra.mxu0 %v1550
    %v1590 = vpop.f32.mrf.mxu0
    %v1591 = vadd.f32 %v1485, %v1590
    %1592 = vmatmul.f32.gmra.mxu0 %v1553
    %v1593 = vpop.f32.mrf.mxu0
    %v1594 = vadd.f32 %v1488, %v1593
    %1595 = vmatmul.f32.gmra.mxu0 %v1556
    %v1596 = vpop.f32.mrf.mxu0
    %v1597 = vadd.f32 %v1491, %v1596
    %1598 = vdwg.mxu0
    %1599 = vmatpush.msra.mxu0 0.0
    %1600 = vmatpush.msra.mxu0 0.0
    %1601 = vmatpush.msra.mxu0 0.0
    %1602 = vmatpush.msra.mxu0 0.0
    %1603 = vmatpush.msra.mxu0 0.0
    %1604 = vmatpush.msra.mxu0 0.0
    %1605 = vmatpush.msra.mxu0 0.0
    %1606 = vmatpush.msra.mxu0 0.0
    %1607 = vmatpush.msra.mxu0 0.0
    %1608 = vmatpush.msra.mxu0 0.0
    %1609 = vmatpush.msra.mxu0 0.0
    %1610 = vmatpush.msra.mxu0 0.0
    %1611 = vmatpush.msra.mxu0 %v1411
    %1612 = vmatpush.msra.mxu0 %v1409
    %1613 = vmatpush.msra.mxu0 %v1407
    %1614 = vmatpush.msra.mxu0 %v1405
    %1615 = vmatmul.f32.gmra.mxu0 %v1535
    %v1616 = vpop.f32.mrf.mxu0
    %v1617 = vadd.f32 %v1511, %v1616
    %1618 = vmatmul.f32.gmra.mxu0 %v1538
    %v1619 = vpop.f32.mrf.mxu0
    %v1620 = vadd.f32 %v1514, %v1619
    %1621 = vmatmul.f32.gmra.mxu0 %v1541
    %v1622 = vpop.f32.mrf.mxu0
    %v1623 = vadd.f32 %v1517, %v1622
    %1624 = vmatmul.f32.gmra.mxu0 %v1544
    %v1625 = vpop.f32.mrf.mxu0
    %v1626 = vadd.f32 %v1520, %v1625
    %1627 = vmatmul.f32.gmra.mxu0 %v1547
    %v1628 = vpop.f32.mrf.mxu0
    %v1629 = vadd.f32 %v1523, %v1628
    %1630 = vmatmul.f32.gmra.mxu0 %v1550
    %v1631 = vpop.f32.mrf.mxu0
    %v1632 = vadd.f32 %v1526, %v1631
    %1633 = vmatmul.f32.gmra.mxu0 %v1553
    %v1634 = vpop.f32.mrf.mxu0
    %v1635 = vadd.f32 %v1529, %v1634
    %1636 = vmatmul.f32.gmra.mxu0 %v1556
    %v1637 = vpop.f32.mrf.mxu0
    %v1638 = vadd.f32 %v1532, %v1637
    %1639 = vdwg.mxu0
    %v1640 = vld [vmem:[%s5] sm:$0x3]
    %v1642 = vperm.slane %v1640, 0
    %v1643 = vperm.slane %v1640, 1
    %v1646 = vadd.f32 %v1576, %v1642
    %v1647 = vadd.f32 %v1617, %v1643
    %v1648 = vadd.f32 %v1579, %v1642
    %v1649 = vadd.f32 %v1620, %v1643
    %v1650 = vadd.f32 %v1582, %v1642
    %v1651 = vadd.f32 %v1623, %v1643
    %v1652 = vadd.f32 %v1585, %v1642
    %v1653 = vadd.f32 %v1626, %v1643
    %v1654 = vadd.f32 %v1588, %v1642
    %v1655 = vadd.f32 %v1629, %v1643
    %v1656 = vadd.f32 %v1591, %v1642
    %v1657 = vadd.f32 %v1632, %v1643
    %v1658 = vadd.f32 %v1594, %v1642
    %v1659 = vadd.f32 %v1635, %v1643
    %v1660 = vadd.f32 %v1597, %v1642
    %v1661 = vadd.f32 %v1638, %v1643
    %1662 = vst [vmem:[#allocation3] sm:$0xff] %v1646
    %1663 = vst [vmem:[#allocation3 + $0x78] sm:$0xff] %v1647
    %1664 = vst [vmem:[#allocation3 + $0x10] sm:$0xff] %v1648
    %1665 = vst [vmem:[#allocation3 + $0x68] sm:$0xff] %v1649
    %1666 = vst [vmem:[#allocation3 + $0x20] sm:$0xff] %v1650
    %1667 = vst [vmem:[#allocation3 + $0x58] sm:$0xff] %v1651
    %1668 = vst [vmem:[#allocation3 + $0x30] sm:$0xff] %v1652
    %1669 = vst [vmem:[#allocation3 + $0x48] sm:$0xff] %v1653
    %1670 = vst [vmem:[#allocation3 + $0x40] sm:$0xff] %v1654
    %1671 = vst [vmem:[#allocation3 + $0x38] sm:$0xff] %v1655
    %1672 = vst [vmem:[#allocation3 + $0x50] sm:$0xff] %v1656
    %1673 = vst [vmem:[#allocation3 + $0x28] sm:$0xff] %v1657
    %1674 = vst [vmem:[#allocation3 + $0x60] sm:$0xff] %v1658
    %1675 = vst [vmem:[#allocation3 + $0x18] sm:$0xff] %v1659
    %1676 = vst [vmem:[#allocation3 + $0x70] sm:$0xff] %v1660
    %1677 = vst [vmem:[#allocation3 + $0x8] sm:$0xff] %v1661
    %v1678 = vld [vmem:[#allocation13] sm:$0xff]
    %v1679 = vld [vmem:[#allocation13 + $0x8] sm:$0xff]
    %v1680 = vld [vmem:[#allocation13 + $0x10] sm:$0xff]
    %v1681 = vld [vmem:[#allocation13 + $0x18] sm:$0xff]
    %v1682 = vld [vmem:[#allocation13 + $0x20] sm:$0xff]
    %v1683 = vld [vmem:[#allocation13 + $0x28] sm:$0xff]
    %v1684 = vld [vmem:[#allocation13 + $0x30] sm:$0xff]
    %v1685 = vld [vmem:[#allocation13 + $0x38] sm:$0xff]
    %1686 = vmatpush.msra.mxu0 0.0
    %1687 = vmatpush.msra.mxu0 0.0
    %1688 = vmatpush.msra.mxu0 0.0
    %1689 = vmatpush.msra.mxu0 0.0
    %1690 = vmatpush.msra.mxu0 0.0
    %1691 = vmatpush.msra.mxu0 0.0
    %1692 = vmatpush.msra.mxu0 0.0
    %1693 = vmatpush.msra.mxu0 0.0
    %1694 = vmatpush.msra.mxu0 0.0
    %1695 = vmatpush.msra.mxu0 0.0
    %1696 = vmatpush.msra.mxu0 0.0
    %1697 = vmatpush.msra.mxu0 0.0
    %1698 = vmatpush.msra.mxu0 %v1684
    %1699 = vmatpush.msra.mxu0 %v1682
    %1700 = vmatpush.msra.mxu0 %v1680
    %1701 = vmatpush.msra.mxu0 %v1678
    %1702 = vmatmul.f32.gmra.mxu0 %v278
    %v1703 = vpop.f32.mrf.mxu0
    %v1704 = vadd.f32 0.0, %v1703
    %1705 = vmatmul.f32.gmra.mxu0 %v278
    %v1706 = vpop.f32.mrf.mxu0
    %v1707 = vadd.f32 0.0, %v1706
    %1708 = vdwg.mxu0
    %1709 = vmatpush.msra.mxu0 0.0
    %1710 = vmatpush.msra.mxu0 0.0
    %1711 = vmatpush.msra.mxu0 0.0
    %1712 = vmatpush.msra.mxu0 0.0
    %1713 = vmatpush.msra.mxu0 0.0
    %1714 = vmatpush.msra.mxu0 0.0
    %1715 = vmatpush.msra.mxu0 0.0
    %1716 = vmatpush.msra.mxu0 0.0
    %1717 = vmatpush.msra.mxu0 0.0
    %1718 = vmatpush.msra.mxu0 0.0
    %1719 = vmatpush.msra.mxu0 0.0
    %1720 = vmatpush.msra.mxu0 0.0
    %1721 = vmatpush.msra.mxu0 %v1685
    %1722 = vmatpush.msra.mxu0 %v1683
    %1723 = vmatpush.msra.mxu0 %v1681
    %1724 = vmatpush.msra.mxu0 %v1679
    %1725 = vmatmul.f32.gmra.mxu0 %v278
    %v1726 = vpop.f32.mrf.mxu0
    %v1727 = vadd.f32 0.0, %v1726
    %1728 = vmatmul.f32.gmra.mxu0 %v278
    %v1729 = vpop.f32.mrf.mxu0
    %v1730 = vadd.f32 0.0, %v1729
    %1731 = vdwg.mxu0
    %v1732 = vld [vmem:[#allocation3] sm:$0xff]
    %v1733 = vld [vmem:[#allocation3 + $0x8] sm:$0xff]
    %v1734 = vsel %vm113, %v1704, %v1727
    %v1735 = vsel %vm114, %v1707, %v1730
    %v1736 = vadd.f32 %v1732, %v1734
    %v1737 = vadd.f32 %v1733, %v1735
    %v1738 = vxor.u32 %v1736, 2147483648
    %v1739 = vxor.u32 %v1737, 2147483648
    %v1740 = vmul.f32 %v1738, 1.442695
    %v1741 = vpow.pop %v1740
    %v1742 = vmul.f32 %v1739, 1.442695
    %v1743 = vpow.pop %v1742
    %v1744 = vadd.f32 %v1741, 1.0
    %v1745 = vadd.f32 %v1743, 1.0
    %v1746 = vrcp.pop %v1744
    %v1747 = vmul.f32 %v1744, %v1746
    %v1748 = vsub.f32 1.0, %v1747
    %v1749 = vmul.f32 %v1746, %v1748
    %v1750 = vadd.f32 %v1746, %v1749
    %vm1751 = vweird.f32 %v1744
    %vm1752 = vweird.f32 %v1746
    %vm1753 = vmor %vm1751, %vm1752
    %v1754 = vsel %vm1753, %v1746, %v1750
    %v1755 = vand.u32 2147483647, %v1744
    %vm1756 = vcmp.eq.f32.partialorder %v1755, 8.507059e+37
    %v1757 = vand.u32 %v1744, 2147483648
    %v1758 = vor.u32 1.1754944e-38, %v1757
    %v1759 = vsel %vm1756, %v1758, %v1754
    %v1760 = vmul.f32 1.0, %v1759
    %v1761 = vrcp.pop %v1745
    %v1762 = vmul.f32 %v1745, %v1761
    %v1763 = vsub.f32 1.0, %v1762
    %v1764 = vmul.f32 %v1761, %v1763
    %v1765 = vadd.f32 %v1761, %v1764
    %vm1766 = vweird.f32 %v1745
    %vm1767 = vweird.f32 %v1761
    %vm1768 = vmor %vm1766, %vm1767
    %v1769 = vsel %vm1768, %v1761, %v1765
    %v1770 = vand.u32 2147483647, %v1745
    %vm1771 = vcmp.eq.f32.partialorder %v1770, 8.507059e+37
    %v1772 = vand.u32 %v1745, 2147483648
    %v1773 = vor.u32 1.1754944e-38, %v1772
    %v1774 = vsel %vm1771, %v1773, %v1769
    %v1775 = vmul.f32 1.0, %v1774
    %v1776 = vtanh.pop %v1736
    %v1777 = vtanh.pop %v1737
    %v1778 = vmul.f32 %v1760, 0.0
    %v1779 = vmul.f32 %v1775, 0.0
    %1782 = vrot.lane.b32.xlu0 %v1776, 32
    %v1783 = vpop.permute.xlu0 %1782
    %1784 = vrot.lane.b32.xlu0 %v1777, 32
    %v1785 = vpop.permute.xlu0 %1784
    %v1788 = vmul.f32 %v1760, %v1783
    %v1789 = vmul.f32 %v1775, %v1785
    %1792 = vrot.lane.b32.xlu0 %v1788, 32
    %v1793 = vpop.permute.xlu0 %1792
    %1794 = vrot.lane.b32.xlu0 %v1789, 32
    %v1795 = vpop.permute.xlu0 %1794
    %v1798 = vadd.f32 %v1778, %v1793
    %v1799 = vadd.f32 %v1779, %v1795
    %v1800 = vtanh.pop %v1798
    %v1801 = vtanh.pop %v1799
    %1804 = vrot.lane.b32.xlu0 %v1800, 32
    %v1805 = vpop.permute.xlu0 %1804
    %1806 = vrot.lane.b32.xlu0 %v1801, 32
    %v1807 = vpop.permute.xlu0 %1806
    %v1810 = vmul.f32 %v1760, %v1805
    %v1811 = vmul.f32 %v1775, %v1807
    %1814 = vrot.lane.b32.xlu0 %v1810, 64
    %v1815 = vpop.permute.xlu0 %1814
    %1816 = vrot.lane.b32.xlu0 %v1811, 64
    %v1817 = vpop.permute.xlu0 %1816
    %v1818 = vsel %vm276, %v1815, 0
    %v1820 = vsel %vm276, %v1817, 0
    %1822 = vmatpush.msra.mxu0 0.0
    %1823 = vmatpush.msra.mxu0 0.0
    %1824 = vmatpush.msra.mxu0 0.0
    %1825 = vmatpush.msra.mxu0 0.0
    %1826 = vmatpush.msra.mxu0 0.0
    %1827 = vmatpush.msra.mxu0 0.0
    %1828 = vmatpush.msra.mxu0 0.0
    %1829 = vmatpush.msra.mxu0 0.0
    %1830 = vmatpush.msra.mxu0 0.0
    %1831 = vmatpush.msra.mxu0 0.0
    %1832 = vmatpush.msra.mxu0 0.0
    %1833 = vmatpush.msra.mxu0 0.0
    %1834 = vmatpush.msra.mxu0 %v1684
    %1835 = vmatpush.msra.mxu0 %v1682
    %1836 = vmatpush.msra.mxu0 %v1680
    %1837 = vmatpush.msra.mxu0 %v1678
    %1838 = vmatmul.f32.gmra.mxu0 %v1818
    %v1839 = vpop.f32.mrf.mxu0
    %v1840 = vadd.f32 0.0, %v1839
    %1841 = vmatmul.f32.gmra.mxu0 %v1820
    %v1842 = vpop.f32.mrf.mxu0
    %v1843 = vadd.f32 0.0, %v1842
    %1844 = vdwg.mxu0
    %1845 = vmatpush.msra.mxu0 0.0
    %1846 = vmatpush.msra.mxu0 0.0
    %1847 = vmatpush.msra.mxu0 0.0
    %1848 = vmatpush.msra.mxu0 0.0
    %1849 = vmatpush.msra.mxu0 0.0
    %1850 = vmatpush.msra.mxu0 0.0
    %1851 = vmatpush.msra.mxu0 0.0
    %1852 = vmatpush.msra.mxu0 0.0
    %1853 = vmatpush.msra.mxu0 0.0
    %1854 = vmatpush.msra.mxu0 0.0
    %1855 = vmatpush.msra.mxu0 0.0
    %1856 = vmatpush.msra.mxu0 0.0
    %1857 = vmatpush.msra.mxu0 %v1685
    %1858 = vmatpush.msra.mxu0 %v1683
    %1859 = vmatpush.msra.mxu0 %v1681
    %1860 = vmatpush.msra.mxu0 %v1679
    %1861 = vmatmul.f32.gmra.mxu0 %v1818
    %v1862 = vpop.f32.mrf.mxu0
    %v1863 = vadd.f32 0.0, %v1862
    %1864 = vmatmul.f32.gmra.mxu0 %v1820
    %v1865 = vpop.f32.mrf.mxu0
    %v1866 = vadd.f32 0.0, %v1865
    %1867 = vdwg.mxu0
    %v1868 = vld [vmem:[#allocation3 + $0x10] sm:$0xff]
    %v1869 = vld [vmem:[#allocation3 + $0x18] sm:$0xff]
    %v1870 = vsel %vm113, %v1840, %v1863
    %v1871 = vsel %vm114, %v1843, %v1866
    %v1872 = vadd.f32 %v1868, %v1870
    %v1873 = vadd.f32 %v1869, %v1871
    %v1874 = vxor.u32 %v1872, 2147483648
    %v1875 = vxor.u32 %v1873, 2147483648
    %v1876 = vmul.f32 %v1874, 1.442695
    %v1877 = vpow.pop %v1876
    %v1878 = vmul.f32 %v1875, 1.442695
    %v1879 = vpow.pop %v1878
    %v1880 = vadd.f32 %v1877, 1.0
    %v1881 = vadd.f32 %v1879, 1.0
    %v1882 = vrcp.pop %v1880
    %v1883 = vmul.f32 %v1880, %v1882
    %v1884 = vsub.f32 1.0, %v1883
    %v1885 = vmul.f32 %v1882, %v1884
    %v1886 = vadd.f32 %v1882, %v1885
    %vm1887 = vweird.f32 %v1880
    %vm1888 = vweird.f32 %v1882
    %vm1889 = vmor %vm1887, %vm1888
    %v1890 = vsel %vm1889, %v1882, %v1886
    %v1891 = vand.u32 2147483647, %v1880
    %vm1892 = vcmp.eq.f32.partialorder %v1891, 8.507059e+37
    %v1893 = vand.u32 %v1880, 2147483648
    %v1894 = vor.u32 1.1754944e-38, %v1893
    %v1895 = vsel %vm1892, %v1894, %v1890
    %v1896 = vmul.f32 1.0, %v1895
    %v1897 = vrcp.pop %v1881
    %v1898 = vmul.f32 %v1881, %v1897
    %v1899 = vsub.f32 1.0, %v1898
    %v1900 = vmul.f32 %v1897, %v1899
    %v1901 = vadd.f32 %v1897, %v1900
    %vm1902 = vweird.f32 %v1881
    %vm1903 = vweird.f32 %v1897
    %vm1904 = vmor %vm1902, %vm1903
    %v1905 = vsel %vm1904, %v1897, %v1901
    %v1906 = vand.u32 2147483647, %v1881
    %vm1907 = vcmp.eq.f32.partialorder %v1906, 8.507059e+37
    %v1908 = vand.u32 %v1881, 2147483648
    %v1909 = vor.u32 1.1754944e-38, %v1908
    %v1910 = vsel %vm1907, %v1909, %v1905
    %v1911 = vmul.f32 1.0, %v1910
    %v1912 = vtanh.pop %v1872
    %v1913 = vtanh.pop %v1873
    %v1914 = vmul.f32 %v1896, %v1798
    %v1915 = vmul.f32 %v1911, %v1799
    %1918 = vrot.lane.b32.xlu0 %v1912, 32
    %v1919 = vpop.permute.xlu0 %1918
    %1920 = vrot.lane.b32.xlu0 %v1913, 32
    %v1921 = vpop.permute.xlu0 %1920
    %v1924 = vmul.f32 %v1896, %v1919
    %v1925 = vmul.f32 %v1911, %v1921
    %1928 = vrot.lane.b32.xlu0 %v1924, 32
    %v1929 = vpop.permute.xlu0 %1928
    %1930 = vrot.lane.b32.xlu0 %v1925, 32
    %v1931 = vpop.permute.xlu0 %1930
    %v1934 = vadd.f32 %v1914, %v1929
    %v1935 = vadd.f32 %v1915, %v1931
    %v1936 = vtanh.pop %v1934
    %v1937 = vtanh.pop %v1935
    %1940 = vrot.lane.b32.xlu0 %v1936, 32
    %v1941 = vpop.permute.xlu0 %1940
    %1942 = vrot.lane.b32.xlu0 %v1937, 32
    %v1943 = vpop.permute.xlu0 %1942
    %v1946 = vmul.f32 %v1896, %v1941
    %v1947 = vmul.f32 %v1911, %v1943
    %1950 = vrot.lane.b32.xlu0 %v1946, 64
    %v1951 = vpop.permute.xlu0 %1950
    %1952 = vrot.lane.b32.xlu0 %v1947, 64
    %v1953 = vpop.permute.xlu0 %1952
    %v1954 = vsel %vm276, %v1951, 0
    %v1956 = vsel %vm276, %v1953, 0
    %1958 = vmatpush.msra.mxu0 0.0
    %1959 = vmatpush.msra.mxu0 0.0
    %1960 = vmatpush.msra.mxu0 0.0
    %1961 = vmatpush.msra.mxu0 0.0
    %1962 = vmatpush.msra.mxu0 0.0
    %1963 = vmatpush.msra.mxu0 0.0
    %1964 = vmatpush.msra.mxu0 0.0
    %1965 = vmatpush.msra.mxu0 0.0
    %1966 = vmatpush.msra.mxu0 0.0
    %1967 = vmatpush.msra.mxu0 0.0
    %1968 = vmatpush.msra.mxu0 0.0
    %1969 = vmatpush.msra.mxu0 0.0
    %1970 = vmatpush.msra.mxu0 %v1684
    %1971 = vmatpush.msra.mxu0 %v1682
    %1972 = vmatpush.msra.mxu0 %v1680
    %1973 = vmatpush.msra.mxu0 %v1678
    %1974 = vmatmul.f32.gmra.mxu0 %v1954
    %v1975 = vpop.f32.mrf.mxu0
    %v1976 = vadd.f32 0.0, %v1975
    %1977 = vmatmul.f32.gmra.mxu0 %v1956
    %v1978 = vpop.f32.mrf.mxu0
    %v1979 = vadd.f32 0.0, %v1978
    %1980 = vdwg.mxu0
    %1981 = vmatpush.msra.mxu0 0.0
    %1982 = vmatpush.msra.mxu0 0.0
    %1983 = vmatpush.msra.mxu0 0.0
    %1984 = vmatpush.msra.mxu0 0.0
    %1985 = vmatpush.msra.mxu0 0.0
    %1986 = vmatpush.msra.mxu0 0.0
    %1987 = vmatpush.msra.mxu0 0.0
    %1988 = vmatpush.msra.mxu0 0.0
    %1989 = vmatpush.msra.mxu0 0.0
    %1990 = vmatpush.msra.mxu0 0.0
    %1991 = vmatpush.msra.mxu0 0.0
    %1992 = vmatpush.msra.mxu0 0.0
    %1993 = vmatpush.msra.mxu0 %v1685
    %1994 = vmatpush.msra.mxu0 %v1683
    %1995 = vmatpush.msra.mxu0 %v1681
    %1996 = vmatpush.msra.mxu0 %v1679
    %1997 = vmatmul.f32.gmra.mxu0 %v1954
    %v1998 = vpop.f32.mrf.mxu0
    %v1999 = vadd.f32 0.0, %v1998
    %2000 = vmatmul.f32.gmra.mxu0 %v1956
    %v2001 = vpop.f32.mrf.mxu0
    %v2002 = vadd.f32 0.0, %v2001
    %2003 = vdwg.mxu0
    %v2004 = vld [vmem:[#allocation3 + $0x20] sm:$0xff]
    %v2005 = vld [vmem:[#allocation3 + $0x28] sm:$0xff]
    %v2006 = vsel %vm113, %v1976, %v1999
    %v2007 = vsel %vm114, %v1979, %v2002
    %v2008 = vadd.f32 %v2004, %v2006
    %v2009 = vadd.f32 %v2005, %v2007
    %v2010 = vxor.u32 %v2008, 2147483648
    %v2011 = vxor.u32 %v2009, 2147483648
    %v2012 = vmul.f32 %v2010, 1.442695
    %v2013 = vpow.pop %v2012
    %v2014 = vmul.f32 %v2011, 1.442695
    %v2015 = vpow.pop %v2014
    %v2016 = vadd.f32 %v2013, 1.0
    %v2017 = vadd.f32 %v2015, 1.0
    %v2018 = vrcp.pop %v2016
    %v2019 = vmul.f32 %v2016, %v2018
    %v2020 = vsub.f32 1.0, %v2019
    %v2021 = vmul.f32 %v2018, %v2020
    %v2022 = vadd.f32 %v2018, %v2021
    %vm2023 = vweird.f32 %v2016
    %vm2024 = vweird.f32 %v2018
    %vm2025 = vmor %vm2023, %vm2024
    %v2026 = vsel %vm2025, %v2018, %v2022
    %v2027 = vand.u32 2147483647, %v2016
    %vm2028 = vcmp.eq.f32.partialorder %v2027, 8.507059e+37
    %v2029 = vand.u32 %v2016, 2147483648
    %v2030 = vor.u32 1.1754944e-38, %v2029
    %v2031 = vsel %vm2028, %v2030, %v2026
    %v2032 = vmul.f32 1.0, %v2031
    %v2033 = vrcp.pop %v2017
    %v2034 = vmul.f32 %v2017, %v2033
    %v2035 = vsub.f32 1.0, %v2034
    %v2036 = vmul.f32 %v2033, %v2035
    %v2037 = vadd.f32 %v2033, %v2036
    %vm2038 = vweird.f32 %v2017
    %vm2039 = vweird.f32 %v2033
    %vm2040 = vmor %vm2038, %vm2039
    %v2041 = vsel %vm2040, %v2033, %v2037
    %v2042 = vand.u32 2147483647, %v2017
    %vm2043 = vcmp.eq.f32.partialorder %v2042, 8.507059e+37
    %v2044 = vand.u32 %v2017, 2147483648
    %v2045 = vor.u32 1.1754944e-38, %v2044
    %v2046 = vsel %vm2043, %v2045, %v2041
    %v2047 = vmul.f32 1.0, %v2046
    %v2048 = vtanh.pop %v2008
    %v2049 = vtanh.pop %v2009
    %v2050 = vmul.f32 %v2032, %v1934
    %v2051 = vmul.f32 %v2047, %v1935
    %2054 = vrot.lane.b32.xlu0 %v2048, 32
    %v2055 = vpop.permute.xlu0 %2054
    %2056 = vrot.lane.b32.xlu0 %v2049, 32
    %v2057 = vpop.permute.xlu0 %2056
    %v2060 = vmul.f32 %v2032, %v2055
    %v2061 = vmul.f32 %v2047, %v2057
    %2064 = vrot.lane.b32.xlu0 %v2060, 32
    %v2065 = vpop.permute.xlu0 %2064
    %2066 = vrot.lane.b32.xlu0 %v2061, 32
    %v2067 = vpop.permute.xlu0 %2066
    %v2070 = vadd.f32 %v2050, %v2065
    %v2071 = vadd.f32 %v2051, %v2067
    %v2072 = vtanh.pop %v2070
    %v2073 = vtanh.pop %v2071
    %2076 = vrot.lane.b32.xlu0 %v2072, 32
    %v2077 = vpop.permute.xlu0 %2076
    %2078 = vrot.lane.b32.xlu0 %v2073, 32
    %v2079 = vpop.permute.xlu0 %2078
    %v2082 = vmul.f32 %v2032, %v2077
    %v2083 = vmul.f32 %v2047, %v2079
    %2086 = vrot.lane.b32.xlu0 %v2082, 64
    %v2087 = vpop.permute.xlu0 %2086
    %2088 = vrot.lane.b32.xlu0 %v2083, 64
    %v2089 = vpop.permute.xlu0 %2088
    %v2090 = vsel %vm276, %v2087, 0
    %v2092 = vsel %vm276, %v2089, 0
    %2094 = vmatpush.msra.mxu0 0.0
    %2095 = vmatpush.msra.mxu0 0.0
    %2096 = vmatpush.msra.mxu0 0.0
    %2097 = vmatpush.msra.mxu0 0.0
    %2098 = vmatpush.msra.mxu0 0.0
    %2099 = vmatpush.msra.mxu0 0.0
    %2100 = vmatpush.msra.mxu0 0.0
    %2101 = vmatpush.msra.mxu0 0.0
    %2102 = vmatpush.msra.mxu0 0.0
    %2103 = vmatpush.msra.mxu0 0.0
    %2104 = vmatpush.msra.mxu0 0.0
    %2105 = vmatpush.msra.mxu0 0.0
    %2106 = vmatpush.msra.mxu0 %v1684
    %2107 = vmatpush.msra.mxu0 %v1682
    %2108 = vmatpush.msra.mxu0 %v1680
    %2109 = vmatpush.msra.mxu0 %v1678
    %2110 = vmatmul.f32.gmra.mxu0 %v2090
    %v2111 = vpop.f32.mrf.mxu0
    %v2112 = vadd.f32 0.0, %v2111
    %2113 = vmatmul.f32.gmra.mxu0 %v2092
    %v2114 = vpop.f32.mrf.mxu0
    %v2115 = vadd.f32 0.0, %v2114
    %2116 = vdwg.mxu0
    %2117 = vmatpush.msra.mxu0 0.0
    %2118 = vmatpush.msra.mxu0 0.0
    %2119 = vmatpush.msra.mxu0 0.0
    %2120 = vmatpush.msra.mxu0 0.0
    %2121 = vmatpush.msra.mxu0 0.0
    %2122 = vmatpush.msra.mxu0 0.0
    %2123 = vmatpush.msra.mxu0 0.0
    %2124 = vmatpush.msra.mxu0 0.0
    %2125 = vmatpush.msra.mxu0 0.0
    %2126 = vmatpush.msra.mxu0 0.0
    %2127 = vmatpush.msra.mxu0 0.0
    %2128 = vmatpush.msra.mxu0 0.0
    %2129 = vmatpush.msra.mxu0 %v1685
    %2130 = vmatpush.msra.mxu0 %v1683
    %2131 = vmatpush.msra.mxu0 %v1681
    %2132 = vmatpush.msra.mxu0 %v1679
    %2133 = vmatmul.f32.gmra.mxu0 %v2090
    %v2134 = vpop.f32.mrf.mxu0
    %v2135 = vadd.f32 0.0, %v2134
    %2136 = vmatmul.f32.gmra.mxu0 %v2092
    %v2137 = vpop.f32.mrf.mxu0
    %v2138 = vadd.f32 0.0, %v2137
    %2139 = vdwg.mxu0
    %v2140 = vld [vmem:[#allocation3 + $0x30] sm:$0xff]
    %v2141 = vld [vmem:[#allocation3 + $0x38] sm:$0xff]
    %v2142 = vsel %vm113, %v2112, %v2135
    %v2143 = vsel %vm114, %v2115, %v2138
    %v2144 = vadd.f32 %v2140, %v2142
    %v2145 = vadd.f32 %v2141, %v2143
    %v2146 = vxor.u32 %v2144, 2147483648
    %v2147 = vxor.u32 %v2145, 2147483648
    %v2148 = vmul.f32 %v2146, 1.442695
    %v2149 = vpow.pop %v2148
    %v2150 = vmul.f32 %v2147, 1.442695
    %v2151 = vpow.pop %v2150
    %v2152 = vadd.f32 %v2149, 1.0
    %v2153 = vadd.f32 %v2151, 1.0
    %v2154 = vrcp.pop %v2152
    %v2155 = vmul.f32 %v2152, %v2154
    %v2156 = vsub.f32 1.0, %v2155
    %v2157 = vmul.f32 %v2154, %v2156
    %v2158 = vadd.f32 %v2154, %v2157
    %vm2159 = vweird.f32 %v2152
    %vm2160 = vweird.f32 %v2154
    %vm2161 = vmor %vm2159, %vm2160
    %v2162 = vsel %vm2161, %v2154, %v2158
    %v2163 = vand.u32 2147483647, %v2152
    %vm2164 = vcmp.eq.f32.partialorder %v2163, 8.507059e+37
    %v2165 = vand.u32 %v2152, 2147483648
    %v2166 = vor.u32 1.1754944e-38, %v2165
    %v2167 = vsel %vm2164, %v2166, %v2162
    %v2168 = vmul.f32 1.0, %v2167
    %v2169 = vrcp.pop %v2153
    %v2170 = vmul.f32 %v2153, %v2169
    %v2171 = vsub.f32 1.0, %v2170
    %v2172 = vmul.f32 %v2169, %v2171
    %v2173 = vadd.f32 %v2169, %v2172
    %vm2174 = vweird.f32 %v2153
    %vm2175 = vweird.f32 %v2169
    %vm2176 = vmor %vm2174, %vm2175
    %v2177 = vsel %vm2176, %v2169, %v2173
    %v2178 = vand.u32 2147483647, %v2153
    %vm2179 = vcmp.eq.f32.partialorder %v2178, 8.507059e+37
    %v2180 = vand.u32 %v2153, 2147483648
    %v2181 = vor.u32 1.1754944e-38, %v2180
    %v2182 = vsel %vm2179, %v2181, %v2177
    %v2183 = vmul.f32 1.0, %v2182
    %v2184 = vtanh.pop %v2144
    %v2185 = vtanh.pop %v2145
    %v2186 = vmul.f32 %v2168, %v2070
    %v2187 = vmul.f32 %v2183, %v2071
    %2190 = vrot.lane.b32.xlu0 %v2184, 32
    %v2191 = vpop.permute.xlu0 %2190
    %2192 = vrot.lane.b32.xlu0 %v2185, 32
    %v2193 = vpop.permute.xlu0 %2192
    %v2196 = vmul.f32 %v2168, %v2191
    %v2197 = vmul.f32 %v2183, %v2193
    %2200 = vrot.lane.b32.xlu0 %v2196, 32
    %v2201 = vpop.permute.xlu0 %2200
    %2202 = vrot.lane.b32.xlu0 %v2197, 32
    %v2203 = vpop.permute.xlu0 %2202
    %v2206 = vadd.f32 %v2186, %v2201
    %v2207 = vadd.f32 %v2187, %v2203
    %v2208 = vtanh.pop %v2206
    %v2209 = vtanh.pop %v2207
    %2212 = vrot.lane.b32.xlu0 %v2208, 32
    %v2213 = vpop.permute.xlu0 %2212
    %2214 = vrot.lane.b32.xlu0 %v2209, 32
    %v2215 = vpop.permute.xlu0 %2214
    %v2218 = vmul.f32 %v2168, %v2213
    %v2219 = vmul.f32 %v2183, %v2215
    %2222 = vrot.lane.b32.xlu0 %v2218, 64
    %v2223 = vpop.permute.xlu0 %2222
    %2224 = vrot.lane.b32.xlu0 %v2219, 64
    %v2225 = vpop.permute.xlu0 %2224
    %v2226 = vsel %vm276, %v2223, 0
    %v2228 = vsel %vm276, %v2225, 0
    %2230 = vmatpush.msra.mxu0 0.0
    %2231 = vmatpush.msra.mxu0 0.0
    %2232 = vmatpush.msra.mxu0 0.0
    %2233 = vmatpush.msra.mxu0 0.0
    %2234 = vmatpush.msra.mxu0 0.0
    %2235 = vmatpush.msra.mxu0 0.0
    %2236 = vmatpush.msra.mxu0 0.0
    %2237 = vmatpush.msra.mxu0 0.0
    %2238 = vmatpush.msra.mxu0 0.0
    %2239 = vmatpush.msra.mxu0 0.0
    %2240 = vmatpush.msra.mxu0 0.0
    %2241 = vmatpush.msra.mxu0 0.0
    %2242 = vmatpush.msra.mxu0 %v1684
    %2243 = vmatpush.msra.mxu0 %v1682
    %2244 = vmatpush.msra.mxu0 %v1680
    %2245 = vmatpush.msra.mxu0 %v1678
    %2246 = vmatmul.f32.gmra.mxu0 %v2226
    %v2247 = vpop.f32.mrf.mxu0
    %v2248 = vadd.f32 0.0, %v2247
    %2249 = vmatmul.f32.gmra.mxu0 %v2228
    %v2250 = vpop.f32.mrf.mxu0
    %v2251 = vadd.f32 0.0, %v2250
    %2252 = vdwg.mxu0
    %2253 = vmatpush.msra.mxu0 0.0
    %2254 = vmatpush.msra.mxu0 0.0
    %2255 = vmatpush.msra.mxu0 0.0
    %2256 = vmatpush.msra.mxu0 0.0
    %2257 = vmatpush.msra.mxu0 0.0
    %2258 = vmatpush.msra.mxu0 0.0
    %2259 = vmatpush.msra.mxu0 0.0
    %2260 = vmatpush.msra.mxu0 0.0
    %2261 = vmatpush.msra.mxu0 0.0
    %2262 = vmatpush.msra.mxu0 0.0
    %2263 = vmatpush.msra.mxu0 0.0
    %2264 = vmatpush.msra.mxu0 0.0
    %2265 = vmatpush.msra.mxu0 %v1685
    %2266 = vmatpush.msra.mxu0 %v1683
    %2267 = vmatpush.msra.mxu0 %v1681
    %2268 = vmatpush.msra.mxu0 %v1679
    %2269 = vmatmul.f32.gmra.mxu0 %v2226
    %v2270 = vpop.f32.mrf.mxu0
    %v2271 = vadd.f32 0.0, %v2270
    %2272 = vmatmul.f32.gmra.mxu0 %v2228
    %v2273 = vpop.f32.mrf.mxu0
    %v2274 = vadd.f32 0.0, %v2273
    %2275 = vdwg.mxu0
    %v2276 = vld [vmem:[#allocation3 + $0x40] sm:$0xff]
    %v2277 = vld [vmem:[#allocation3 + $0x48] sm:$0xff]
    %v2278 = vsel %vm113, %v2248, %v2271
    %v2279 = vsel %vm114, %v2251, %v2274
    %v2280 = vadd.f32 %v2276, %v2278
    %v2281 = vadd.f32 %v2277, %v2279
    %v2282 = vxor.u32 %v2280, 2147483648
    %v2283 = vxor.u32 %v2281, 2147483648
    %v2284 = vmul.f32 %v2282, 1.442695
    %v2285 = vpow.pop %v2284
    %v2286 = vmul.f32 %v2283, 1.442695
    %v2287 = vpow.pop %v2286
    %v2288 = vadd.f32 %v2285, 1.0
    %v2289 = vadd.f32 %v2287, 1.0
    %v2290 = vrcp.pop %v2288
    %v2291 = vmul.f32 %v2288, %v2290
    %v2292 = vsub.f32 1.0, %v2291
    %v2293 = vmul.f32 %v2290, %v2292
    %v2294 = vadd.f32 %v2290, %v2293
    %vm2295 = vweird.f32 %v2288
    %vm2296 = vweird.f32 %v2290
    %vm2297 = vmor %vm2295, %vm2296
    %v2298 = vsel %vm2297, %v2290, %v2294
    %v2299 = vand.u32 2147483647, %v2288
    %vm2300 = vcmp.eq.f32.partialorder %v2299, 8.507059e+37
    %v2301 = vand.u32 %v2288, 2147483648
    %v2302 = vor.u32 1.1754944e-38, %v2301
    %v2303 = vsel %vm2300, %v2302, %v2298
    %v2304 = vmul.f32 1.0, %v2303
    %v2305 = vrcp.pop %v2289
    %v2306 = vmul.f32 %v2289, %v2305
    %v2307 = vsub.f32 1.0, %v2306
    %v2308 = vmul.f32 %v2305, %v2307
    %v2309 = vadd.f32 %v2305, %v2308
    %vm2310 = vweird.f32 %v2289
    %vm2311 = vweird.f32 %v2305
    %vm2312 = vmor %vm2310, %vm2311
    %v2313 = vsel %vm2312, %v2305, %v2309
    %v2314 = vand.u32 2147483647, %v2289
    %vm2315 = vcmp.eq.f32.partialorder %v2314, 8.507059e+37
    %v2316 = vand.u32 %v2289, 2147483648
    %v2317 = vor.u32 1.1754944e-38, %v2316
    %v2318 = vsel %vm2315, %v2317, %v2313
    %v2319 = vmul.f32 1.0, %v2318
    %v2320 = vtanh.pop %v2280
    %v2321 = vtanh.pop %v2281
    %v2322 = vmul.f32 %v2304, %v2206
    %v2323 = vmul.f32 %v2319, %v2207
    %2326 = vrot.lane.b32.xlu0 %v2320, 32
    %v2327 = vpop.permute.xlu0 %2326
    %2328 = vrot.lane.b32.xlu0 %v2321, 32
    %v2329 = vpop.permute.xlu0 %2328
    %v2332 = vmul.f32 %v2304, %v2327
    %v2333 = vmul.f32 %v2319, %v2329
    %2336 = vrot.lane.b32.xlu0 %v2332, 32
    %v2337 = vpop.permute.xlu0 %2336
    %2338 = vrot.lane.b32.xlu0 %v2333, 32
    %v2339 = vpop.permute.xlu0 %2338
    %v2342 = vadd.f32 %v2322, %v2337
    %v2343 = vadd.f32 %v2323, %v2339
    %v2344 = vtanh.pop %v2342
    %v2345 = vtanh.pop %v2343
    %2348 = vrot.lane.b32.xlu0 %v2344, 32
    %v2349 = vpop.permute.xlu0 %2348
    %2350 = vrot.lane.b32.xlu0 %v2345, 32
    %v2351 = vpop.permute.xlu0 %2350
    %v2354 = vmul.f32 %v2304, %v2349
    %v2355 = vmul.f32 %v2319, %v2351
    %2358 = vrot.lane.b32.xlu0 %v2354, 64
    %v2359 = vpop.permute.xlu0 %2358
    %2360 = vrot.lane.b32.xlu0 %v2355, 64
    %v2361 = vpop.permute.xlu0 %2360
    %v2362 = vsel %vm276, %v2359, 0
    %v2364 = vsel %vm276, %v2361, 0
    %2366 = vmatpush.msra.mxu0 0.0
    %2367 = vmatpush.msra.mxu0 0.0
    %2368 = vmatpush.msra.mxu0 0.0
    %2369 = vmatpush.msra.mxu0 0.0
    %2370 = vmatpush.msra.mxu0 0.0
    %2371 = vmatpush.msra.mxu0 0.0
    %2372 = vmatpush.msra.mxu0 0.0
    %2373 = vmatpush.msra.mxu0 0.0
    %2374 = vmatpush.msra.mxu0 0.0
    %2375 = vmatpush.msra.mxu0 0.0
    %2376 = vmatpush.msra.mxu0 0.0
    %2377 = vmatpush.msra.mxu0 0.0
    %2378 = vmatpush.msra.mxu0 %v1684
    %2379 = vmatpush.msra.mxu0 %v1682
    %2380 = vmatpush.msra.mxu0 %v1680
    %2381 = vmatpush.msra.mxu0 %v1678
    %2382 = vmatmul.f32.gmra.mxu0 %v2362
    %v2383 = vpop.f32.mrf.mxu0
    %v2384 = vadd.f32 0.0, %v2383
    %2385 = vmatmul.f32.gmra.mxu0 %v2364
    %v2386 = vpop.f32.mrf.mxu0
    %v2387 = vadd.f32 0.0, %v2386
    %2388 = vdwg.mxu0
    %2389 = vmatpush.msra.mxu0 0.0
    %2390 = vmatpush.msra.mxu0 0.0
    %2391 = vmatpush.msra.mxu0 0.0
    %2392 = vmatpush.msra.mxu0 0.0
    %2393 = vmatpush.msra.mxu0 0.0
    %2394 = vmatpush.msra.mxu0 0.0
    %2395 = vmatpush.msra.mxu0 0.0
    %2396 = vmatpush.msra.mxu0 0.0
    %2397 = vmatpush.msra.mxu0 0.0
    %2398 = vmatpush.msra.mxu0 0.0
    %2399 = vmatpush.msra.mxu0 0.0
    %2400 = vmatpush.msra.mxu0 0.0
    %2401 = vmatpush.msra.mxu0 %v1685
    %2402 = vmatpush.msra.mxu0 %v1683
    %2403 = vmatpush.msra.mxu0 %v1681
    %2404 = vmatpush.msra.mxu0 %v1679
    %2405 = vmatmul.f32.gmra.mxu0 %v2362
    %v2406 = vpop.f32.mrf.mxu0
    %v2407 = vadd.f32 0.0, %v2406
    %2408 = vmatmul.f32.gmra.mxu0 %v2364
    %v2409 = vpop.f32.mrf.mxu0
    %v2410 = vadd.f32 0.0, %v2409
    %2411 = vdwg.mxu0
    %v2412 = vld [vmem:[#allocation3 + $0x50] sm:$0xff]
    %v2413 = vld [vmem:[#allocation3 + $0x58] sm:$0xff]
    %v2414 = vsel %vm113, %v2384, %v2407
    %v2415 = vsel %vm114, %v2387, %v2410
    %v2416 = vadd.f32 %v2412, %v2414
    %v2417 = vadd.f32 %v2413, %v2415
    %v2418 = vxor.u32 %v2416, 2147483648
    %v2419 = vxor.u32 %v2417, 2147483648
    %v2420 = vmul.f32 %v2418, 1.442695
    %v2421 = vpow.pop %v2420
    %v2422 = vmul.f32 %v2419, 1.442695
    %v2423 = vpow.pop %v2422
    %v2424 = vadd.f32 %v2421, 1.0
    %v2425 = vadd.f32 %v2423, 1.0
    %v2426 = vrcp.pop %v2424
    %v2427 = vmul.f32 %v2424, %v2426
    %v2428 = vsub.f32 1.0, %v2427
    %v2429 = vmul.f32 %v2426, %v2428
    %v2430 = vadd.f32 %v2426, %v2429
    %vm2431 = vweird.f32 %v2424
    %vm2432 = vweird.f32 %v2426
    %vm2433 = vmor %vm2431, %vm2432
    %v2434 = vsel %vm2433, %v2426, %v2430
    %v2435 = vand.u32 2147483647, %v2424
    %vm2436 = vcmp.eq.f32.partialorder %v2435, 8.507059e+37
    %v2437 = vand.u32 %v2424, 2147483648
    %v2438 = vor.u32 1.1754944e-38, %v2437
    %v2439 = vsel %vm2436, %v2438, %v2434
    %v2440 = vmul.f32 1.0, %v2439
    %v2441 = vrcp.pop %v2425
    %v2442 = vmul.f32 %v2425, %v2441
    %v2443 = vsub.f32 1.0, %v2442
    %v2444 = vmul.f32 %v2441, %v2443
    %v2445 = vadd.f32 %v2441, %v2444
    %vm2446 = vweird.f32 %v2425
    %vm2447 = vweird.f32 %v2441
    %vm2448 = vmor %vm2446, %vm2447
    %v2449 = vsel %vm2448, %v2441, %v2445
    %v2450 = vand.u32 2147483647, %v2425
    %vm2451 = vcmp.eq.f32.partialorder %v2450, 8.507059e+37
    %v2452 = vand.u32 %v2425, 2147483648
    %v2453 = vor.u32 1.1754944e-38, %v2452
    %v2454 = vsel %vm2451, %v2453, %v2449
    %v2455 = vmul.f32 1.0, %v2454
    %v2456 = vtanh.pop %v2416
    %v2457 = vtanh.pop %v2417
    %v2458 = vmul.f32 %v2440, %v2342
    %v2459 = vmul.f32 %v2455, %v2343
    %2462 = vrot.lane.b32.xlu0 %v2456, 32
    %v2463 = vpop.permute.xlu0 %2462
    %2464 = vrot.lane.b32.xlu0 %v2457, 32
    %v2465 = vpop.permute.xlu0 %2464
    %v2468 = vmul.f32 %v2440, %v2463
    %v2469 = vmul.f32 %v2455, %v2465
    %2472 = vrot.lane.b32.xlu0 %v2468, 32
    %v2473 = vpop.permute.xlu0 %2472
    %2474 = vrot.lane.b32.xlu0 %v2469, 32
    %v2475 = vpop.permute.xlu0 %2474
    %v2478 = vadd.f32 %v2458, %v2473
    %v2479 = vadd.f32 %v2459, %v2475
    %v2480 = vtanh.pop %v2478
    %v2481 = vtanh.pop %v2479
    %2484 = vrot.lane.b32.xlu0 %v2480, 32
    %v2485 = vpop.permute.xlu0 %2484
    %2486 = vrot.lane.b32.xlu0 %v2481, 32
    %v2487 = vpop.permute.xlu0 %2486
    %v2490 = vmul.f32 %v2440, %v2485
    %v2491 = vmul.f32 %v2455, %v2487
    %2494 = vrot.lane.b32.xlu0 %v2490, 64
    %v2495 = vpop.permute.xlu0 %2494
    %2496 = vrot.lane.b32.xlu0 %v2491, 64
    %v2497 = vpop.permute.xlu0 %2496
    %v2498 = vsel %vm276, %v2495, 0
    %v2500 = vsel %vm276, %v2497, 0
    %2502 = vmatpush.msra.mxu0 0.0
    %2503 = vmatpush.msra.mxu0 0.0
    %2504 = vmatpush.msra.mxu0 0.0
    %2505 = vmatpush.msra.mxu0 0.0
    %2506 = vmatpush.msra.mxu0 0.0
    %2507 = vmatpush.msra.mxu0 0.0
    %2508 = vmatpush.msra.mxu0 0.0
    %2509 = vmatpush.msra.mxu0 0.0
    %2510 = vmatpush.msra.mxu0 0.0
    %2511 = vmatpush.msra.mxu0 0.0
    %2512 = vmatpush.msra.mxu0 0.0
    %2513 = vmatpush.msra.mxu0 0.0
    %2514 = vmatpush.msra.mxu0 %v1684
    %2515 = vmatpush.msra.mxu0 %v1682
    %2516 = vmatpush.msra.mxu0 %v1680
    %2517 = vmatpush.msra.mxu0 %v1678
    %2518 = vmatmul.f32.gmra.mxu0 %v2498
    %v2519 = vpop.f32.mrf.mxu0
    %v2520 = vadd.f32 0.0, %v2519
    %2521 = vmatmul.f32.gmra.mxu0 %v2500
    %v2522 = vpop.f32.mrf.mxu0
    %v2523 = vadd.f32 0.0, %v2522
    %2524 = vdwg.mxu0
    %2525 = vmatpush.msra.mxu0 0.0
    %2526 = vmatpush.msra.mxu0 0.0
    %2527 = vmatpush.msra.mxu0 0.0
    %2528 = vmatpush.msra.mxu0 0.0
    %2529 = vmatpush.msra.mxu0 0.0
    %2530 = vmatpush.msra.mxu0 0.0
    %2531 = vmatpush.msra.mxu0 0.0
    %2532 = vmatpush.msra.mxu0 0.0
    %2533 = vmatpush.msra.mxu0 0.0
    %2534 = vmatpush.msra.mxu0 0.0
    %2535 = vmatpush.msra.mxu0 0.0
    %2536 = vmatpush.msra.mxu0 0.0
    %2537 = vmatpush.msra.mxu0 %v1685
    %2538 = vmatpush.msra.mxu0 %v1683
    %2539 = vmatpush.msra.mxu0 %v1681
    %2540 = vmatpush.msra.mxu0 %v1679
    %2541 = vmatmul.f32.gmra.mxu0 %v2498
    %v2542 = vpop.f32.mrf.mxu0
    %v2543 = vadd.f32 0.0, %v2542
    %2544 = vmatmul.f32.gmra.mxu0 %v2500
    %v2545 = vpop.f32.mrf.mxu0
    %v2546 = vadd.f32 0.0, %v2545
    %2547 = vdwg.mxu0
    %v2548 = vld [vmem:[#allocation3 + $0x60] sm:$0xff]
    %v2549 = vld [vmem:[#allocation3 + $0x68] sm:$0xff]
    %v2550 = vsel %vm113, %v2520, %v2543
    %v2551 = vsel %vm114, %v2523, %v2546
    %v2552 = vadd.f32 %v2548, %v2550
    %v2553 = vadd.f32 %v2549, %v2551
    %v2554 = vxor.u32 %v2552, 2147483648
    %v2555 = vxor.u32 %v2553, 2147483648
    %v2556 = vmul.f32 %v2554, 1.442695
    %v2557 = vpow.pop %v2556
    %v2558 = vmul.f32 %v2555, 1.442695
    %v2559 = vpow.pop %v2558
    %v2560 = vadd.f32 %v2557, 1.0
    %v2561 = vadd.f32 %v2559, 1.0
    %v2562 = vrcp.pop %v2560
    %v2563 = vmul.f32 %v2560, %v2562
    %v2564 = vsub.f32 1.0, %v2563
    %v2565 = vmul.f32 %v2562, %v2564
    %v2566 = vadd.f32 %v2562, %v2565
    %vm2567 = vweird.f32 %v2560
    %vm2568 = vweird.f32 %v2562
    %vm2569 = vmor %vm2567, %vm2568
    %v2570 = vsel %vm2569, %v2562, %v2566
    %v2571 = vand.u32 2147483647, %v2560
    %vm2572 = vcmp.eq.f32.partialorder %v2571, 8.507059e+37
    %v2573 = vand.u32 %v2560, 2147483648
    %v2574 = vor.u32 1.1754944e-38, %v2573
    %v2575 = vsel %vm2572, %v2574, %v2570
    %v2576 = vmul.f32 1.0, %v2575
    %v2577 = vrcp.pop %v2561
    %v2578 = vmul.f32 %v2561, %v2577
    %v2579 = vsub.f32 1.0, %v2578
    %v2580 = vmul.f32 %v2577, %v2579
    %v2581 = vadd.f32 %v2577, %v2580
    %vm2582 = vweird.f32 %v2561
    %vm2583 = vweird.f32 %v2577
    %vm2584 = vmor %vm2582, %vm2583
    %v2585 = vsel %vm2584, %v2577, %v2581
    %v2586 = vand.u32 2147483647, %v2561
    %vm2587 = vcmp.eq.f32.partialorder %v2586, 8.507059e+37
    %v2588 = vand.u32 %v2561, 2147483648
    %v2589 = vor.u32 1.1754944e-38, %v2588
    %v2590 = vsel %vm2587, %v2589, %v2585
    %v2591 = vmul.f32 1.0, %v2590
    %v2592 = vtanh.pop %v2552
    %v2593 = vtanh.pop %v2553
    %v2594 = vmul.f32 %v2576, %v2478
    %v2595 = vmul.f32 %v2591, %v2479
    %2598 = vrot.lane.b32.xlu0 %v2592, 32
    %v2599 = vpop.permute.xlu0 %2598
    %2600 = vrot.lane.b32.xlu0 %v2593, 32
    %v2601 = vpop.permute.xlu0 %2600
    %v2604 = vmul.f32 %v2576, %v2599
    %v2605 = vmul.f32 %v2591, %v2601
    %2608 = vrot.lane.b32.xlu0 %v2604, 32
    %v2609 = vpop.permute.xlu0 %2608
    %2610 = vrot.lane.b32.xlu0 %v2605, 32
    %v2611 = vpop.permute.xlu0 %2610
    %v2614 = vadd.f32 %v2594, %v2609
    %v2615 = vadd.f32 %v2595, %v2611
    %v2616 = vtanh.pop %v2614
    %v2617 = vtanh.pop %v2615
    %2620 = vrot.lane.b32.xlu0 %v2616, 32
    %v2621 = vpop.permute.xlu0 %2620
    %2622 = vrot.lane.b32.xlu0 %v2617, 32
    %v2623 = vpop.permute.xlu0 %2622
    %v2626 = vmul.f32 %v2576, %v2621
    %v2627 = vmul.f32 %v2591, %v2623
    %2630 = vrot.lane.b32.xlu0 %v2626, 64
    %v2631 = vpop.permute.xlu0 %2630
    %2632 = vrot.lane.b32.xlu0 %v2627, 64
    %v2633 = vpop.permute.xlu0 %2632
    %v2634 = vsel %vm276, %v2631, 0
    %v2636 = vsel %vm276, %v2633, 0
    %2638 = vmatpush.msra.mxu0 0.0
    %2639 = vmatpush.msra.mxu0 0.0
    %2640 = vmatpush.msra.mxu0 0.0
    %2641 = vmatpush.msra.mxu0 0.0
    %2642 = vmatpush.msra.mxu0 0.0
    %2643 = vmatpush.msra.mxu0 0.0
    %2644 = vmatpush.msra.mxu0 0.0
    %2645 = vmatpush.msra.mxu0 0.0
    %2646 = vmatpush.msra.mxu0 0.0
    %2647 = vmatpush.msra.mxu0 0.0
    %2648 = vmatpush.msra.mxu0 0.0
    %2649 = vmatpush.msra.mxu0 0.0
    %2650 = vmatpush.msra.mxu0 %v1684
    %2651 = vmatpush.msra.mxu0 %v1682
    %2652 = vmatpush.msra.mxu0 %v1680
    %2653 = vmatpush.msra.mxu0 %v1678
    %2654 = vmatmul.f32.gmra.mxu0 %v2634
    %v2655 = vpop.f32.mrf.mxu0
    %v2656 = vadd.f32 0.0, %v2655
    %2657 = vmatmul.f32.gmra.mxu0 %v2636
    %v2658 = vpop.f32.mrf.mxu0
    %v2659 = vadd.f32 0.0, %v2658
    %2660 = vdwg.mxu0
    %2661 = vmatpush.msra.mxu0 0.0
    %2662 = vmatpush.msra.mxu0 0.0
    %2663 = vmatpush.msra.mxu0 0.0
    %2664 = vmatpush.msra.mxu0 0.0
    %2665 = vmatpush.msra.mxu0 0.0
    %2666 = vmatpush.msra.mxu0 0.0
    %2667 = vmatpush.msra.mxu0 0.0
    %2668 = vmatpush.msra.mxu0 0.0
    %2669 = vmatpush.msra.mxu0 0.0
    %2670 = vmatpush.msra.mxu0 0.0
    %2671 = vmatpush.msra.mxu0 0.0
    %2672 = vmatpush.msra.mxu0 0.0
    %2673 = vmatpush.msra.mxu0 %v1685
    %2674 = vmatpush.msra.mxu0 %v1683
    %2675 = vmatpush.msra.mxu0 %v1681
    %2676 = vmatpush.msra.mxu0 %v1679
    %2677 = vmatmul.f32.gmra.mxu0 %v2634
    %v2678 = vpop.f32.mrf.mxu0
    %v2679 = vadd.f32 0.0, %v2678
    %2680 = vmatmul.f32.gmra.mxu0 %v2636
    %v2681 = vpop.f32.mrf.mxu0
    %v2682 = vadd.f32 0.0, %v2681
    %2683 = vdwg.mxu0
    %v2684 = vld [vmem:[#allocation3 + $0x70] sm:$0xff]
    %v2685 = vld [vmem:[#allocation3 + $0x78] sm:$0xff]
    %v2686 = vsel %vm113, %v2656, %v2679
    %v2687 = vsel %vm114, %v2659, %v2682
    %v2688 = vadd.f32 %v2684, %v2686
    %v2689 = vadd.f32 %v2685, %v2687
    %v2690 = vxor.u32 %v2688, 2147483648
    %v2691 = vxor.u32 %v2689, 2147483648
    %v2692 = vmul.f32 %v2690, 1.442695
    %v2693 = vpow.pop %v2692
    %v2694 = vmul.f32 %v2691, 1.442695
    %v2695 = vpow.pop %v2694
    %v2696 = vadd.f32 %v2693, 1.0
    %v2697 = vadd.f32 %v2695, 1.0
    %v2698 = vrcp.pop %v2696
    %v2699 = vmul.f32 %v2696, %v2698
    %v2700 = vsub.f32 1.0, %v2699
    %v2701 = vmul.f32 %v2698, %v2700
    %v2702 = vadd.f32 %v2698, %v2701
    %vm2703 = vweird.f32 %v2696
    %vm2704 = vweird.f32 %v2698
    %vm2705 = vmor %vm2703, %vm2704
    %v2706 = vsel %vm2705, %v2698, %v2702
    %v2707 = vand.u32 2147483647, %v2696
    %vm2708 = vcmp.eq.f32.partialorder %v2707, 8.507059e+37
    %v2709 = vand.u32 %v2696, 2147483648
    %v2710 = vor.u32 1.1754944e-38, %v2709
    %v2711 = vsel %vm2708, %v2710, %v2706
    %v2712 = vmul.f32 1.0, %v2711
    %v2713 = vrcp.pop %v2697
    %v2714 = vmul.f32 %v2697, %v2713
    %v2715 = vsub.f32 1.0, %v2714
    %v2716 = vmul.f32 %v2713, %v2715
    %v2717 = vadd.f32 %v2713, %v2716
    %vm2718 = vweird.f32 %v2697
    %vm2719 = vweird.f32 %v2713
    %vm2720 = vmor %vm2718, %vm2719
    %v2721 = vsel %vm2720, %v2713, %v2717
    %v2722 = vand.u32 2147483647, %v2697
    %vm2723 = vcmp.eq.f32.partialorder %v2722, 8.507059e+37
    %v2724 = vand.u32 %v2697, 2147483648
    %v2725 = vor.u32 1.1754944e-38, %v2724
    %v2726 = vsel %vm2723, %v2725, %v2721
    %v2727 = vmul.f32 1.0, %v2726
    %v2728 = vtanh.pop %v2688
    %v2729 = vtanh.pop %v2689
    %v2730 = vmul.f32 %v2712, %v2614
    %v2731 = vmul.f32 %v2727, %v2615
    %2734 = vrot.lane.b32.xlu0 %v2728, 32
    %v2735 = vpop.permute.xlu0 %2734
    %2736 = vrot.lane.b32.xlu0 %v2729, 32
    %v2737 = vpop.permute.xlu0 %2736
    %v2740 = vmul.f32 %v2712, %v2735
    %v2741 = vmul.f32 %v2727, %v2737
    %2744 = vrot.lane.b32.xlu0 %v2740, 32
    %v2745 = vpop.permute.xlu0 %2744
    %2746 = vrot.lane.b32.xlu0 %v2741, 32
    %v2747 = vpop.permute.xlu0 %2746
    %v2750 = vadd.f32 %v2730, %v2745
    %v2751 = vadd.f32 %v2731, %v2747
    %v2752 = vtanh.pop %v2750
    %v2753 = vtanh.pop %v2751
    %2756 = vrot.lane.b32.xlu0 %v2752, 32
    %v2757 = vpop.permute.xlu0 %2756
    %2758 = vrot.lane.b32.xlu0 %v2753, 32
    %v2759 = vpop.permute.xlu0 %2758
    %v2762 = vmul.f32 %v2712, %v2757
    %v2763 = vmul.f32 %v2727, %v2759
    %v2764 = vld [vmem:[%s7] sm:$0xff]
    %v2765 = vld [vmem:[%s7 + $0x8] sm:$0xff]
    %v2766 = vld [vmem:[%s7 + $0x10] sm:$0xff]
    %v2767 = vld [vmem:[%s7 + $0x18] sm:$0xff]
    %v2768 = vld [vmem:[%s8] sm:$0x1]
    %v2770 = vperm.slane %v2768, 0
    %2774 = vrot.lane.b32.xlu0 %v2762, 64
    %v2775 = vpop.permute.xlu0 %2774
    %2776 = vrot.lane.b32.xlu0 %v2763, 64
    %v2777 = vpop.permute.xlu0 %2776
    %v2778 = vsel %vm276, %v1388, 0
    %v2780 = vsel %vm276, %v1393, 0
    %v2782 = vsel %vm276, %v2775, 0
    %v2784 = vsel %vm276, %v2777, 0
    %2786 = vmatpush.msra.mxu0 0.0
    %2787 = vmatpush.msra.mxu0 0.0
    %2788 = vmatpush.msra.mxu0 0.0
    %2789 = vmatpush.msra.mxu0 0.0
    %2790 = vmatpush.msra.mxu0 0.0
    %2791 = vmatpush.msra.mxu0 0.0
    %2792 = vmatpush.msra.mxu0 0.0
    %2793 = vmatpush.msra.mxu0 0.0
    %2794 = vmatpush.msra.mxu0 0.0
    %2795 = vmatpush.msra.mxu0 0.0
    %2796 = vmatpush.msra.mxu0 0.0
    %2797 = vmatpush.msra.mxu0 0.0
    %2798 = vmatpush.msra.mxu0 %v2767
    %2799 = vmatpush.msra.mxu0 %v2766
    %2800 = vmatpush.msra.mxu0 %v2765
    %2801 = vmatpush.msra.mxu0 %v2764
    %2802 = vmatmul.f32.gmra.mxu0 %v2778
    %v2803 = vpop.f32.mrf.mxu0
    %v2804 = vadd.f32 %v2770, %v2803
    %2805 = vmatmul.f32.gmra.mxu0 %v2780
    %v2806 = vpop.f32.mrf.mxu0
    %v2807 = vadd.f32 %v2770, %v2806
    %2808 = vmatmul.f32.gmra.mxu0 %v2782
    %v2809 = vpop.f32.mrf.mxu0
    %v2810 = vadd.f32 %v2770, %v2809
    %2811 = vmatmul.f32.gmra.mxu0 %v2784
    %v2812 = vpop.f32.mrf.mxu0
    %v2813 = vadd.f32 %v2770, %v2812
    %2814 = vdwg.mxu0
    %vm2815 = vcmask 31744
    %2816 = vst.msk [vmem:[%s9] sm:$0xff] %vm2815, %v2804
    %2817 = vst.msk [vmem:[%s9 + $0x8] sm:$0xff] %vm2815, %v2807
    %2818 = vst.msk [vmem:[%s9 + $0x10] sm:$0xff] %vm2815, %v2810
    %2819 = vst.msk [vmem:[%s9 + $0x18] sm:$0xff] %vm2815, %v2813
    // Predicated region
    $region58: #{tpu_custom_call.1} parent=1 // pred_check
      _
    $region59: #{tpu_custom_call.1} parent=1 // pred_check_branch
      %2821 = sbr.rel (0) target = $region61
    $region60: #{tpu_custom_call.1} parent=1 // pred_region
      _
    $region61: #{tpu_custom_call.1} parent=1 // pred_fallthru
      _
    // Predicated region
    $region62: #{tpu_custom_call.1} parent=1 // pred_check
      _
    $region63: #{tpu_custom_call.1} parent=1 // pred_check_branch
      %2823 = sbr.rel (0) target = $region65
    $region64: #{tpu_custom_call.1} parent=1 // pred_region
      _
    $region65: #{tpu_custom_call.1} parent=1 // pred_fallthru
      _
    %2824 = vsyncpa [#allocation7], 1
    %2825 = vsyncpa [#allocation9], 1
    %2826 = vsyncpa [#allocation12], 1

</llo_original>
